<compile_context>
chip_gen: v5e
topology: v5e:2x2
jax: 0.10.0
libtpu: 0.0.40
codegen_flags: <defaults>
</compile_context>

<pallas_src>
import functools

import jax
import jax.numpy as jnp
from jax.experimental import pallas as pl
from jax.experimental.pallas import tpu as pltpu

LANE = 128


# ----------------------- kernel 1: per-relation projection -------------------

def rgcn_proj_kernel(x_ref, w_ref, z_ref):
    # x: (tq, F_in) bf16, w: (F_in, D_pad) bf16 (relation dim squeezed away)
    z = jnp.dot(x_ref[...], w_ref[...], preferred_element_type=jnp.float32)
    z_ref[...] = z.astype(z_ref.dtype)


# -------------- kernel 2: relation-summed neighbor aggregation ---------------

def rgcn_agg_kernel(a_ref, z_ref, b_ref, o_ref, *, use_bias, apply_relu):
    r = pl.program_id(1)
    ki = pl.program_id(2)

    @pl.when((r == 0) & (ki == 0))
    def _init():
        o_ref[...] = jnp.zeros_like(o_ref)

    # bf16 (tq, tk) @ bf16 (tk, D_pad) -> f32, accumulated into the resident
    # output block (its block index depends only on the parallel qi axis).
    o_ref[...] += jnp.dot(a_ref[...], z_ref[...],
                          preferred_element_type=jnp.float32)

    @pl.when((r == pl.num_programs(1) - 1) & (ki == pl.num_programs(2) - 1))
    def _finalize():
        out = o_ref[...]
        if use_bias:
            out = out + b_ref[...]
        if apply_relu:
            out = jnp.maximum(out, 0.0)
        o_ref[...] = out


# ------------------------------ layer wrapper ---------------------------------

def rgcn_layer(x, adj_norm, weight, w_comp=None, bias=None, activation=None,
               *, block_q=256, block_k=256):
    """Dense RGCN layer forward.

    x         : (N, F_in) node features
    adj_norm  : (R, N, N); adj_norm[r, v, u] = norm of edge u -> v of relation r
    weight    : (num_bases, F_in, F_out)
    w_comp    : (R, num_bases) or None (None => num_bases == num_rels)
    bias      : (F_out,) or None
    activation: None or "relu"
    returns   : (N, F_out)
    """
    f32, bf16 = jnp.float32, jnp.bfloat16
    N, F_in = x.shape
    R = adj_norm.shape[0]
    F_out = weight.shape[-1]

    # ---- basis decomposition: W_r = sum_b w_comp[r, b] * V_b (tiny, in JAX) ----
    if w_comp is not None:
        W = jnp.einsum("rb,bio->rio", w_comp.astype(f32), weight.astype(f32))
    else:
        W = weight.astype(f32)                                   # (R, F_in, F_out)

    # pad output feature dim to a lane-dense multiple of 128 (padded columns are
    # multiplied by zero weights, so stripping at the end is exact)
    D_pad = ((F_out + LANE - 1) // LANE) * LANE
    W = jnp.pad(W, ((0, 0), (0, 0), (0, D_pad - F_out))).astype(bf16)
    b = jnp.zeros((1, D_pad), f32)
    if bias is not None:
        b = b.at[0, :F_out].set(bias.astype(f32))

    tq = min(block_q, N)
    tk = min(block_k, N)
    assert N % tq == 0 and N % tk == 0, "N must be divisible by the tile sizes"
    n_q, n_k = N // tq, N // tk

    vmem_cap = 48 * 1024 * 1024  # v7x-safe (64 MiB physical), fine on v5e/v6e

    # ---- kernel 1: z_r = x @ W_r  (bf16 MXU operands, f32 accumulation) ----
    z = pl.pallas_call(
        rgcn_proj_kernel,
        out_shape=jax.ShapeDtypeStruct((R, N, D_pad), bf16),
        grid=(n_q, R),
        in_specs=[
            pl.BlockSpec((tq, F_in), lambda qi, r: (qi, 0)),
            pl.BlockSpec((None, F_in, D_pad), lambda qi, r: (r, 0, 0)),
        ],
        out_specs=pl.BlockSpec((None, tq, D_pad), lambda qi, r: (r, qi, 0)),
        compiler_params=pltpu.CompilerParams(
            dimension_semantics=("parallel", "parallel"),
            vmem_limit_bytes=vmem_cap),
    )(x.astype(bf16), W)

    # ---- kernel 2: out[v] = sum_r sum_u adj[r, v, u] * z[r, u, :]  (+b, act) ----
    out = pl.pallas_call(
        functools.partial(rgcn_agg_kernel,
                          use_bias=bias is not None,
                          apply_relu=(activation == "relu")),
        out_shape=jax.ShapeDtypeStruct((N, D_pad), f32),
        grid=(n_q, R, n_k),
        in_specs=[
            pl.BlockSpec((None, tq, tk), lambda qi, r, ki: (r, qi, ki)),   # adj
            pl.BlockSpec((None, tk, D_pad), lambda qi, r, ki: (r, ki, 0)),  # z
            pl.BlockSpec((1, D_pad), lambda qi, r, ki: (0, 0)),             # bias
        ],
        out_specs=pl.BlockSpec((tq, D_pad), lambda qi, r, ki: (qi, 0)),
        compiler_params=pltpu.CompilerParams(
            dimension_semantics=("parallel", "arbitrary", "arbitrary"),
            vmem_limit_bytes=vmem_cap),
    )(adj_norm.astype(bf16), z, b)

    return out[:, :F_out]


# ------------------------- pure-JAX reference (check) -------------------------

def _rgcn_layer_ref(x, adj_norm, weight, w_comp, bias, activation):
    W = (jnp.einsum("rb,bio->rio", w_comp, weight)
         if w_comp is not None else weight)
    z = jnp.einsum("nf,rfo->rno", x, W)
    out = jnp.einsum("rvu,ruo->vo", adj_norm, z)
    if bias is not None:
        out = out + bias
    if activation == "relu":
        out = jnp.maximum(out, 0.0)
    return out


# ----------------------------------- demo -------------------------------------

if __name__ == "__main__":
    # Small synthetic multi-relational graph standing in for FraudYelp.
    # TODO(synk): FraudYelpDataset loading / dgl.to_homogeneous has no kernel
    # equivalent; the graph is a dense per-relation adjacency built in-script.
    # TODO(synk): the is_input_layer embedding-lookup message path is equivalent
    # to one-hot node-id features through the same kernels; not specialized here.
    N, IN_DIM, HIDDEN, NUM_CLASSES = 256, 64, 32, 8
    NUM_RELS, NUM_BASES = 3, 2

    key = jax.random.PRNGKey(0)
    k_feat, k_adj, k0, k1, k2, k3, k4, k5 = jax.random.split(key, 8)

    features = jax.random.normal(k_feat, (N, IN_DIM), jnp.float32)

    # dense per-relation adjacency with self-loops; edge norm = 1 / in-degree_r
    adj = (jax.random.uniform(k_adj, (NUM_RELS, N, N)) < 0.05).astype(jnp.float32)
    adj = jnp.maximum(adj, jnp.eye(N, dtype=jnp.float32)[None])
    deg = jnp.sum(adj, axis=2, keepdims=True)
    adj_norm = adj / jnp.maximum(deg, 1.0)            # edges.data['norm']

    def xavier(k, shape, gain=jnp.sqrt(2.0)):         # calculate_gain('relu')
        fan_in, fan_out = shape[-2], shape[-1]
        a = gain * jnp.sqrt(6.0 / (fan_in + fan_out))
        return jax.random.uniform(k, shape, jnp.float32, -a, a)

    params = {
        "w1": xavier(k0, (NUM_BASES, IN_DIM, HIDDEN)),
        "c1": xavier(k1, (NUM_RELS, NUM_BASES)),
        "b1": 0.1 * jax.random.normal(k2, (HIDDEN,), jnp.float32),
        "w2": xavier(k3, (NUM_BASES, HIDDEN, NUM_CLASSES)),
        "c2": xavier(k4, (NUM_RELS, NUM_BASES)),
        "b2": 0.1 * jax.random.normal(k5, (NUM_CLASSES,), jnp.float32),
    }

    @jax.jit
    def fwd(feat, adj_n, p):
        # two stacked RGCN layers (num_bases < num_rels exercises w_comp path)
        h = rgcn_layer(feat, adj_n, p["w1"], p["c1"], p["b1"], "relu")
        return rgcn_layer(h, adj_n, p["w2"], p["c2"], p["b2"], None)

    out = jax.block_until_ready(fwd(features, adj_norm, params))
    assert out.shape == (N, NUM_CLASSES)
    assert bool(jnp.all(jnp.isfinite(out)))

    # correctness check against a pure-JAX (f32) reference
    h_ref = _rgcn_layer_ref(features, adj_norm, params["w1"], params["c1"],
                            params["b1"], "relu")
    out_ref = _rgcn_layer_ref(h_ref, adj_norm, params["w2"], params["c2"],
                              params["b2"], None)
    err = float(jnp.max(jnp.abs(out - out_ref)))
    scale = float(jnp.max(jnp.abs(out_ref))) + 1e-6
    assert err < 1e-1 and err / scale < 5e-2, f"mismatch vs reference: {err}"
    print("KERNEL_OK")
</pallas_src>

<mosaic_0001>
module attributes {stable_mosaic.version = 11 : i64} {
  func.func @rgcn_proj_kernel(%arg0: i32, %arg1: i32, %arg2: memref<256x64xbf16, #tpu.memory_space<vmem>>, %arg3: memref<1x64x128xbf16, #tpu.memory_space<vmem>>, %arg4: memref<1x256x128xbf16, #tpu.memory_space<vmem>>) attributes {dimension_semantics = [#tpu.dimension_semantics<parallel>, #tpu.dimension_semantics<parallel>], iteration_bounds = array<i64: 1, 3>, scalar_prefetch = 0 : i64, scratch_operands = 0 : i64, tpu.core_type = #tpu.core_type<tc>, window_params = [{transform_indices = @transform_0, window_bounds = array<i64: 256, 64>}, {transform_indices = @transform_1, window_bounds = array<i64: 1, 64, 128>}, {transform_indices = @transform_2, window_bounds = array<i64: 1, 256, 128>}]} {
    %c0 = arith.constant 0 : index
    %c0_0 = arith.constant 0 : index
    %0 = vector.load %arg2[%c0, %c0_0] : memref<256x64xbf16, #tpu.memory_space<vmem>>, vector<256x64xbf16>
    %c0_1 = arith.constant 0 : index
    %c0_2 = arith.constant 0 : index
    %c0_3 = arith.constant 0 : index
    %1 = vector.load %arg3[%c0_1, %c0_2, %c0_3] : memref<1x64x128xbf16, #tpu.memory_space<vmem>>, vector<1x64x128xbf16>
    %2 = vector.shape_cast %1 : vector<1x64x128xbf16> to vector<64x128xbf16>
    %cst = arith.constant dense<0.000000e+00> : vector<256x128xf32>
    %3 = tpu.matmul %0, %2, %cst {dimension_numbers = #tpu.dot_dimension_numbers<[1], [0], [0], [1], [0, 0, 1, 1], [], []>} : vector<256x64xbf16>, vector<64x128xbf16>, vector<256x128xf32> -> vector<256x128xf32>
    %4 = arith.truncf %3 : vector<256x128xf32> to vector<256x128xbf16>
    %c0_4 = arith.constant 0 : index
    %c0_5 = arith.constant 0 : index
    %c0_6 = arith.constant 0 : index
    %5 = vector.load %arg4[%c0_4, %c0_5, %c0_6] : memref<1x256x128xbf16, #tpu.memory_space<vmem>>, vector<1x256x128xbf16>
    %6 = vector.shape_cast %5 : vector<1x256x128xbf16> to vector<256x128xbf16>
    %7 = vector.shape_cast %4 : vector<256x128xbf16> to vector<1x256x128xbf16>
    tpu.vector_store %arg4[%c0_4, %c0_5, %c0_6], %7 {strides = array<i32>} : memref<1x256x128xbf16, #tpu.memory_space<vmem>>, vector<1x256x128xbf16>,
    return
  }
  func.func @transform_0(%arg0: i32, %arg1: i32) -> (i32, i32) {
    %c0_i32 = arith.constant 0 : i32
    %c0_i32_0 = arith.constant 0 : i32
    return %arg0, %c0_i32 : i32, i32
  }
  func.func @transform_1(%arg0: i32, %arg1: i32) -> (i32, i32, i32) {
    %c0_i32 = arith.constant 0 : i32
    %c0_i32_0 = arith.constant 0 : i32
    %c0_i32_1 = arith.constant 0 : i32
    return %arg1, %c0_i32, %c0_i32_0 : i32, i32, i32
  }
  func.func @transform_2(%arg0: i32, %arg1: i32) -> (i32, i32, i32) {
    %c0_i32 = arith.constant 0 : i32
    %c0_i32_0 = arith.constant 0 : i32
    return %arg1, %arg0, %c0_i32 : i32, i32, i32
  }
}

module attributes {stable_mosaic.version = 11 : i64} {
  func.func @rgcn_agg_kernel(%arg0: i32, %arg1: i32, %arg2: i32, %arg3: memref<1x256x256xbf16, #tpu.memory_space<vmem>>, %arg4: memref<1x256x128xbf16, #tpu.memory_space<vmem>>, %arg5: memref<1x128xf32, #tpu.memory_space<vmem>>, %arg6: memref<256x128xf32, #tpu.memory_space<vmem>>) attributes {dimension_semantics = [#tpu.dimension_semantics<parallel>, #tpu.dimension_semantics<arbitrary>, #tpu.dimension_semantics<arbitrary>], iteration_bounds = array<i64: 1, 3, 1>, scalar_prefetch = 0 : i64, scratch_operands = 0 : i64, tpu.core_type = #tpu.core_type<tc>, window_params = [{transform_indices = @transform_0, window_bounds = array<i64: 1, 256, 256>}, {transform_indices = @transform_1, window_bounds = array<i64: 1, 256, 128>}, {pipeline_mode = #tpu.pipeline_mode<synchronous>, transform_indices = @transform_2, window_bounds = array<i64: 1, 128>}, {transform_indices = @transform_3, window_bounds = array<i64: 256, 128>}]} {
    %c0_i32 = arith.constant 0 : i32
    %0 = arith.cmpi eq, %arg1, %c0_i32 : i32
    %c0_i32_0 = arith.constant 0 : i32
    %1 = arith.cmpi eq, %arg2, %c0_i32_0 : i32
    %2 = arith.andi %0, %1 : i1
    %3 = arith.extui %2 : i1 to i32
    %c0_i32_1 = arith.constant 0 : i32
    %4 = arith.cmpi ne, %3, %c0_i32_1 : i32
    scf.if %4 {
      %cst_13 = arith.constant 0.000000e+00 : f32
      %18 = vector.broadcast %cst_13 : f32 to vector<256x128xf32>
      %c0_14 = arith.constant 0 : index
      %c0_15 = arith.constant 0 : index
      %19 = vector.load %arg6[%c0_14, %c0_15] : memref<256x128xf32, #tpu.memory_space<vmem>>, vector<256x128xf32>
      tpu.vector_store %arg6[%c0_14, %c0_15], %18 {strides = array<i32>} : memref<256x128xf32, #tpu.memory_space<vmem>>, vector<256x128xf32>,
    } else {
    }
    %c0 = arith.constant 0 : index
    %c0_2 = arith.constant 0 : index
    %5 = vector.load %arg6[%c0, %c0_2] : memref<256x128xf32, #tpu.memory_space<vmem>>, vector<256x128xf32>
    %c0_3 = arith.constant 0 : index
    %c0_4 = arith.constant 0 : index
    %c0_5 = arith.constant 0 : index
    %6 = vector.load %arg3[%c0_3, %c0_4, %c0_5] : memref<1x256x256xbf16, #tpu.memory_space<vmem>>, vector<1x256x256xbf16>
    %7 = vector.shape_cast %6 : vector<1x256x256xbf16> to vector<256x256xbf16>
    %c0_6 = arith.constant 0 : index
    %c0_7 = arith.constant 0 : index
    %c0_8 = arith.constant 0 : index
    %8 = vector.load %arg4[%c0_6, %c0_7, %c0_8] : memref<1x256x128xbf16, #tpu.memory_space<vmem>>, vector<1x256x128xbf16>
    %9 = vector.shape_cast %8 : vector<1x256x128xbf16> to vector<256x128xbf16>
    %cst = arith.constant dense<0.000000e+00> : vector<256x128xf32>
    %10 = tpu.matmul %7, %9, %cst {dimension_numbers = #tpu.dot_dimension_numbers<[1], [0], [0], [1], [0, 0, 1, 1], [], []>} : vector<256x256xbf16>, vector<256x128xbf16>, vector<256x128xf32> -> vector<256x128xf32>
    %11 = arith.addf %5, %10 : vector<256x128xf32>
    %c0_9 = arith.constant 0 : index
    %c0_10 = arith.constant 0 : index
    %12 = vector.load %arg6[%c0_9, %c0_10] : memref<256x128xf32, #tpu.memory_space<vmem>>, vector<256x128xf32>
    tpu.vector_store %arg6[%c0_9, %c0_10], %11 {strides = array<i32>} : memref<256x128xf32, #tpu.memory_space<vmem>>, vector<256x128xf32>,
    %c2_i32 = arith.constant 2 : i32
    %13 = arith.cmpi eq, %arg1, %c2_i32 : i32
    %c0_i32_11 = arith.constant 0 : i32
    %14 = arith.cmpi eq, %arg2, %c0_i32_11 : i32
    %15 = arith.andi %13, %14 : i1
    %16 = arith.extui %15 : i1 to i32
    %c0_i32_12 = arith.constant 0 : i32
    %17 = arith.cmpi ne, %16, %c0_i32_12 : i32
    scf.if %17 {
      %c0_13 = arith.constant 0 : index
      %c0_14 = arith.constant 0 : index
      %18 = vector.load %arg6[%c0_13, %c0_14] : memref<256x128xf32, #tpu.memory_space<vmem>>, vector<256x128xf32>
      %c0_15 = arith.constant 0 : index
      %c0_16 = arith.constant 0 : index
      %19 = vector.load %arg5[%c0_15, %c0_16] : memref<1x128xf32, #tpu.memory_space<vmem>>, vector<1x128xf32>
      %20 = vector.broadcast %19 : vector<1x128xf32> to vector<256x128xf32>
      %21 = arith.addf %18, %20 : vector<256x128xf32>
      %cst_17 = arith.constant 0.000000e+00 : f32
      %22 = vector.broadcast %cst_17 : f32 to vector<256x128xf32>
      %23 = arith.maximumf %21, %22 : vector<256x128xf32>
      %c0_18 = arith.constant 0 : index
      %c0_19 = arith.constant 0 : index
      %24 = vector.load %arg6[%c0_18, %c0_19] : memref<256x128xf32, #tpu.memory_space<vmem>>, vector<256x128xf32>
      tpu.vector_store %arg6[%c0_18, %c0_19], %23 {strides = array<i32>} : memref<256x128xf32, #tpu.memory_space<vmem>>, vector<256x128xf32>,
    } else {
    }
    return
  }
  func.func @transform_0(%arg0: i32, %arg1: i32, %arg2: i32) -> (i32, i32, i32) {
    %c0_i32 = arith.constant 0 : i32
    return %arg1, %arg0, %arg2 : i32, i32, i32
  }
  func.func @transform_1(%arg0: i32, %arg1: i32, %arg2: i32) -> (i32, i32, i32) {
    %c0_i32 = arith.constant 0 : i32
    %c0_i32_0 = arith.constant 0 : i32
    return %arg1, %arg2, %c0_i32 : i32, i32, i32
  }
  func.func @transform_2(%arg0: i32, %arg1: i32, %arg2: i32) -> (i32, i32) {
    %c0_i32 = arith.constant 0 : i32
    %c0_i32_0 = arith.constant 0 : i32
    %c0_i32_1 = arith.constant 0 : i32
    return %c0_i32, %c0_i32_0 : i32, i32
  }
  func.func @transform_3(%arg0: i32, %arg1: i32, %arg2: i32) -> (i32, i32) {
    %c0_i32 = arith.constant 0 : i32
    %c0_i32_0 = arith.constant 0 : i32
    return %arg0, %c0_i32 : i32, i32
  }
}

module attributes {stable_mosaic.version = 11 : i64} {
  func.func @rgcn_proj_kernel(%arg0: i32, %arg1: i32, %arg2: memref<256x32xbf16, #tpu.memory_space<vmem>>, %arg3: memref<1x32x128xbf16, #tpu.memory_space<vmem>>, %arg4: memref<1x256x128xbf16, #tpu.memory_space<vmem>>) attributes {dimension_semantics = [#tpu.dimension_semantics<parallel>, #tpu.dimension_semantics<parallel>], iteration_bounds = array<i64: 1, 3>, scalar_prefetch = 0 : i64, scratch_operands = 0 : i64, tpu.core_type = #tpu.core_type<tc>, window_params = [{transform_indices = @transform_0, window_bounds = array<i64: 256, 32>}, {transform_indices = @transform_1, window_bounds = array<i64: 1, 32, 128>}, {transform_indices = @transform_2, window_bounds = array<i64: 1, 256, 128>}]} {
    %c0 = arith.constant 0 : index
    %c0_0 = arith.constant 0 : index
    %0 = vector.load %arg2[%c0, %c0_0] : memref<256x32xbf16, #tpu.memory_space<vmem>>, vector<256x32xbf16>
    %c0_1 = arith.constant 0 : index
    %c0_2 = arith.constant 0 : index
    %c0_3 = arith.constant 0 : index
    %1 = vector.load %arg3[%c0_1, %c0_2, %c0_3] : memref<1x32x128xbf16, #tpu.memory_space<vmem>>, vector<1x32x128xbf16>
    %2 = vector.shape_cast %1 : vector<1x32x128xbf16> to vector<32x128xbf16>
    %cst = arith.constant dense<0.000000e+00> : vector<256x128xf32>
    %3 = tpu.matmul %0, %2, %cst {dimension_numbers = #tpu.dot_dimension_numbers<[1], [0], [0], [1], [0, 0, 1, 1], [], []>} : vector<256x32xbf16>, vector<32x128xbf16>, vector<256x128xf32> -> vector<256x128xf32>
    %4 = arith.truncf %3 : vector<256x128xf32> to vector<256x128xbf16>
    %c0_4 = arith.constant 0 : index
    %c0_5 = arith.constant 0 : index
    %c0_6 = arith.constant 0 : index
    %5 = vector.load %arg4[%c0_4, %c0_5, %c0_6] : memref<1x256x128xbf16, #tpu.memory_space<vmem>>, vector<1x256x128xbf16>
    %6 = vector.shape_cast %5 : vector<1x256x128xbf16> to vector<256x128xbf16>
    %7 = vector.shape_cast %4 : vector<256x128xbf16> to vector<1x256x128xbf16>
    tpu.vector_store %arg4[%c0_4, %c0_5, %c0_6], %7 {strides = array<i32>} : memref<1x256x128xbf16, #tpu.memory_space<vmem>>, vector<1x256x128xbf16>,
    return
  }
  func.func @transform_0(%arg0: i32, %arg1: i32) -> (i32, i32) {
    %c0_i32 = arith.constant 0 : i32
    %c0_i32_0 = arith.constant 0 : i32
    return %arg0, %c0_i32 : i32, i32
  }
  func.func @transform_1(%arg0: i32, %arg1: i32) -> (i32, i32, i32) {
    %c0_i32 = arith.constant 0 : i32
    %c0_i32_0 = arith.constant 0 : i32
    %c0_i32_1 = arith.constant 0 : i32
    return %arg1, %c0_i32, %c0_i32_0 : i32, i32, i32
  }
  func.func @transform_2(%arg0: i32, %arg1: i32) -> (i32, i32, i32) {
    %c0_i32 = arith.constant 0 : i32
    %c0_i32_0 = arith.constant 0 : i32
    return %arg1, %arg0, %c0_i32 : i32, i32, i32
  }
}

module attributes {stable_mosaic.version = 11 : i64} {
  func.func @rgcn_agg_kernel(%arg0: i32, %arg1: i32, %arg2: i32, %arg3: memref<1x256x256xbf16, #tpu.memory_space<vmem>>, %arg4: memref<1x256x128xbf16, #tpu.memory_space<vmem>>, %arg5: memref<1x128xf32, #tpu.memory_space<vmem>>, %arg6: memref<256x128xf32, #tpu.memory_space<vmem>>) attributes {dimension_semantics = [#tpu.dimension_semantics<parallel>, #tpu.dimension_semantics<arbitrary>, #tpu.dimension_semantics<arbitrary>], iteration_bounds = array<i64: 1, 3, 1>, scalar_prefetch = 0 : i64, scratch_operands = 0 : i64, tpu.core_type = #tpu.core_type<tc>, window_params = [{transform_indices = @transform_0, window_bounds = array<i64: 1, 256, 256>}, {transform_indices = @transform_1, window_bounds = array<i64: 1, 256, 128>}, {pipeline_mode = #tpu.pipeline_mode<synchronous>, transform_indices = @transform_2, window_bounds = array<i64: 1, 128>}, {transform_indices = @transform_3, window_bounds = array<i64: 256, 128>}]} {
    %c0_i32 = arith.constant 0 : i32
    %0 = arith.cmpi eq, %arg1, %c0_i32 : i32
    %c0_i32_0 = arith.constant 0 : i32
    %1 = arith.cmpi eq, %arg2, %c0_i32_0 : i32
    %2 = arith.andi %0, %1 : i1
    %3 = arith.extui %2 : i1 to i32
    %c0_i32_1 = arith.constant 0 : i32
    %4 = arith.cmpi ne, %3, %c0_i32_1 : i32
    scf.if %4 {
      %cst_13 = arith.constant 0.000000e+00 : f32
      %18 = vector.broadcast %cst_13 : f32 to vector<256x128xf32>
      %c0_14 = arith.constant 0 : index
      %c0_15 = arith.constant 0 : index
      %19 = vector.load %arg6[%c0_14, %c0_15] : memref<256x128xf32, #tpu.memory_space<vmem>>, vector<256x128xf32>
      tpu.vector_store %arg6[%c0_14, %c0_15], %18 {strides = array<i32>} : memref<256x128xf32, #tpu.memory_space<vmem>>, vector<256x128xf32>,
    } else {
    }
    %c0 = arith.constant 0 : index
    %c0_2 = arith.constant 0 : index
    %5 = vector.load %arg6[%c0, %c0_2] : memref<256x128xf32, #tpu.memory_space<vmem>>, vector<256x128xf32>
    %c0_3 = arith.constant 0 : index
    %c0_4 = arith.constant 0 : index
    %c0_5 = arith.constant 0 : index
    %6 = vector.load %arg3[%c0_3, %c0_4, %c0_5] : memref<1x256x256xbf16, #tpu.memory_space<vmem>>, vector<1x256x256xbf16>
    %7 = vector.shape_cast %6 : vector<1x256x256xbf16> to vector<256x256xbf16>
    %c0_6 = arith.constant 0 : index
    %c0_7 = arith.constant 0 : index
    %c0_8 = arith.constant 0 : index
    %8 = vector.load %arg4[%c0_6, %c0_7, %c0_8] : memref<1x256x128xbf16, #tpu.memory_space<vmem>>, vector<1x256x128xbf16>
    %9 = vector.shape_cast %8 : vector<1x256x128xbf16> to vector<256x128xbf16>
    %cst = arith.constant dense<0.000000e+00> : vector<256x128xf32>
    %10 = tpu.matmul %7, %9, %cst {dimension_numbers = #tpu.dot_dimension_numbers<[1], [0], [0], [1], [0, 0, 1, 1], [], []>} : vector<256x256xbf16>, vector<256x128xbf16>, vector<256x128xf32> -> vector<256x128xf32>
    %11 = arith.addf %5, %10 : vector<256x128xf32>
    %c0_9 = arith.constant 0 : index
    %c0_10 = arith.constant 0 : index
    %12 = vector.load %arg6[%c0_9, %c0_10] : memref<256x128xf32, #tpu.memory_space<vmem>>, vector<256x128xf32>
    tpu.vector_store %arg6[%c0_9, %c0_10], %11 {strides = array<i32>} : memref<256x128xf32, #tpu.memory_space<vmem>>, vector<256x128xf32>,
    %c2_i32 = arith.constant 2 : i32
    %13 = arith.cmpi eq, %arg1, %c2_i32 : i32
    %c0_i32_11 = arith.constant 0 : i32
    %14 = arith.cmpi eq, %arg2, %c0_i32_11 : i32
    %15 = arith.andi %13, %14 : i1
    %16 = arith.extui %15 : i1 to i32
    %c0_i32_12 = arith.constant 0 : i32
    %17 = arith.cmpi ne, %16, %c0_i32_12 : i32
    scf.if %17 {
      %c0_13 = arith.constant 0 : index
      %c0_14 = arith.constant 0 : index
      %18 = vector.load %arg6[%c0_13, %c0_14] : memref<256x128xf32, #tpu.memory_space<vmem>>, vector<256x128xf32>
      %c0_15 = arith.constant 0 : index
      %c0_16 = arith.constant 0 : index
      %19 = vector.load %arg5[%c0_15, %c0_16] : memref<1x128xf32, #tpu.memory_space<vmem>>, vector<1x128xf32>
      %20 = vector.broadcast %19 : vector<1x128xf32> to vector<256x128xf32>
      %21 = arith.addf %18, %20 : vector<256x128xf32>
      %c0_17 = arith.constant 0 : index
      %c0_18 = arith.constant 0 : index
      %22 = vector.load %arg6[%c0_17, %c0_18] : memref<256x128xf32, #tpu.memory_space<vmem>>, vector<256x128xf32>
      tpu.vector_store %arg6[%c0_17, %c0_18], %21 {strides = array<i32>} : memref<256x128xf32, #tpu.memory_space<vmem>>, vector<256x128xf32>,
    } else {
    }
    return
  }
  func.func @transform_0(%arg0: i32, %arg1: i32, %arg2: i32) -> (i32, i32, i32) {
    %c0_i32 = arith.constant 0 : i32
    return %arg1, %arg0, %arg2 : i32, i32, i32
  }
  func.func @transform_1(%arg0: i32, %arg1: i32, %arg2: i32) -> (i32, i32, i32) {
    %c0_i32 = arith.constant 0 : i32
    %c0_i32_0 = arith.constant 0 : i32
    return %arg1, %arg2, %c0_i32 : i32, i32, i32
  }
  func.func @transform_2(%arg0: i32, %arg1: i32, %arg2: i32) -> (i32, i32) {
    %c0_i32 = arith.constant 0 : i32
    %c0_i32_0 = arith.constant 0 : i32
    %c0_i32_1 = arith.constant 0 : i32
    return %c0_i32, %c0_i32_0 : i32, i32
  }
  func.func @transform_3(%arg0: i32, %arg1: i32, %arg2: i32) -> (i32, i32) {
    %c0_i32 = arith.constant 0 : i32
    %c0_i32_0 = arith.constant 0 : i32
    return %arg0, %c0_i32 : i32, i32
  }
}

</mosaic_0001>

<llo_original>
// kernel: fwd.4
$region0: #{fwd.4}
  #allocation0 [shape = 'u32[]', space=smem, size = 0x4, offset = 0x4, fixed_abs, tag = 'smem constant byte address 0x4 - core index']
  #allocation1 [shape = 'u32[72,128]{1,0:T(1,128)}', space=vmem, size = 0x9000, scoped, tag = 'internal scratch']
  %s0 = inlined_call_operand.vmem [shape: bf16[256,64], index: 0, kind: input, shape index: {}]
  %s1 = inlined_call_operand.vmem [shape: bf16[3,64,128], index: 1, kind: input, shape index: {}]
  %s2 = inlined_call_operand.vmem [shape: bf16[3,256,128], index: 2, kind: output, shape index: {}]
  %s3 = sld [smem:[#allocation0]]
  $region41: #{fwd.4} parent=0
    _
  %s5 = ssub.s32 1, %s3
  %s6 = scalar_select 0, %s5, %s3
  loop: start=0, step=1, limit=5
  $region2: #{fwd.4} parent=0 // loop_pre_header
    _
  $region3: #{fwd.4} parent=0 // loop_header
    %s8 = sphi 0, %s12
    %p9 = scmp.ge.s32.totalorder %s8, 5
    %s15 = sphi 0, %s27
    %s16 = sphi 0, %s23
    %s17 = sphi 0, %s15
    %s18 = sphi 0, %s16
    %s19 = sphi 0, %s17
    %s20 = sphi 0, %s18
    %s30 = sphi 0, %s32
    %s33 = sphi 0, %s30
    %s34 = sphi 0, %s33
    %s50 = sphi 0, %s34
    %s56 = sphi 0, %s58
    %s59 = sphi 0, %s56
    %s60 = sphi 0, %s59
    %s76 = sphi 0, %s60
    %s84 = sphi 0, %s86
    %s87 = sphi 0, %s84
    %s88 = sphi 0, %s87
    %s104 = sphi 0, %s88
  $region4: #{fwd.4} parent=0 // loop_header_branch
    %11 = sbr.rel (%p9) target = $region8
  $region5: #{fwd.4} parent=0 // loop_body
    %s13 = ssub.s32 %s8, 1
    %s14 = ssub.s32 %s8, 2
    %s21 = sadd.s32 1, %s16
    %p22 = scmp.ge.s32.totalorder %s21, 3
    %s23 = scalar_select %p22, 0, %s21
    %s24 = sadd.s32 1, %s15
    %s25 = scalar_select %p22, %s24, %s15
    %p26 = scmp.ge.s32.totalorder %s25, 1
    %s27 = scalar_select %p26, 0, %s25
    %s28 = ssub.s32 %s15, %s27
    %p29 = scmp.eq.s32.totalorder %s28, 0
    %s31 = sadd.s32 %s30, 1
    %s32 = scalar_select %p29, %s30, %s31
    %p35 = pneg %p29
    %p36 = scmp.eq.s32.totalorder %s8, 2
    %p37 = por %p35, %p36
    %p38 = scmp.ne.s32.totalorder %s30, %s33
    %p39 = scmp.eq.s32.totalorder %s8, 0
    %p40 = por %p38, %p39
    %p41 = scmp.ne.s32.totalorder %s30, %s33
    %p42 = scmp.eq.s32.totalorder %s13, 2
    %p43 = por %p41, %p42
    %p44 = scmp.ne.s32.totalorder %s33, %s34
    %p45 = scmp.eq.s32.totalorder %s13, 0
    %p46 = por %p44, %p45
    %p47 = scmp.ne.s32.totalorder %s33, %s34
    %p48 = scmp.eq.s32.totalorder %s14, 2
    %p49 = por %p47, %p48
    %p51 = scmp.ne.s32.totalorder %s34, %s50
    %p52 = scmp.eq.s32.totalorder %s14, 0
    %p53 = por %p51, %p52
    %s54 = ssub.s32 %s16, %s23
    %p55 = scmp.eq.s32.totalorder %s54, 0
    %s57 = sadd.s32 %s56, 1
    %s58 = scalar_select %p55, %s56, %s57
    %p61 = pneg %p55
    %p62 = scmp.eq.s32.totalorder %s8, 2
    %p63 = por %p61, %p62
    %p64 = scmp.ne.s32.totalorder %s56, %s59
    %p65 = scmp.eq.s32.totalorder %s8, 0
    %p66 = por %p64, %p65
    %p67 = scmp.ne.s32.totalorder %s56, %s59
    %p68 = scmp.eq.s32.totalorder %s13, 2
    %p69 = por %p67, %p68
    %p70 = scmp.ne.s32.totalorder %s59, %s60
    %p71 = scmp.eq.s32.totalorder %s13, 0
    %p72 = por %p70, %p71
    %p73 = scmp.ne.s32.totalorder %s59, %s60
    %p74 = scmp.eq.s32.totalorder %s14, 2
    %p75 = por %p73, %p74
    %p77 = scmp.ne.s32.totalorder %s60, %s76
    %p78 = scmp.eq.s32.totalorder %s14, 0
    %p79 = por %p77, %p78
    %s80 = ssub.s32 %s16, %s23
    %s81 = ssub.s32 %s15, %s27
    %s82 = sor.u32 %s80, %s81
    %p83 = scmp.eq.s32.totalorder %s82, 0
    %s85 = sadd.s32 %s84, 1
    %s86 = scalar_select %p83, %s84, %s85
    %p89 = pneg %p83
    %p90 = scmp.eq.s32.totalorder %s8, 2
    %p91 = por %p89, %p90
    %p92 = scmp.ne.s32.totalorder %s84, %s87
    %p93 = scmp.eq.s32.totalorder %s8, 0
    %p94 = por %p92, %p93
    %p95 = scmp.ne.s32.totalorder %s84, %s87
    %p96 = scmp.eq.s32.totalorder %s13, 2
    %p97 = por %p95, %p96
    %p98 = scmp.ne.s32.totalorder %s87, %s88
    %p99 = scmp.eq.s32.totalorder %s13, 0
    %p100 = por %p98, %p99
    %p101 = scmp.ne.s32.totalorder %s87, %s88
    %p102 = scmp.eq.s32.totalorder %s14, 2
    %p103 = por %p101, %p102
    %p105 = scmp.ne.s32.totalorder %s88, %s104
    %p106 = scmp.eq.s32.totalorder %s14, 0
    %p107 = por %p105, %p106
    %p108 = scmp.le.s32.totalorder 1, %s8
    %p109 = scmp.lt.s32.totalorder %s8, 4
    %p110 = pnand %p108, %p109
    %p111 = pneg %p110
    // Predicated region
    $region9: #{fwd.4} parent=5 // pred_check
      _
    $region10: #{fwd.4} parent=5 // pred_check_branch
      %113 = sbr.rel (%p110) target = $region12
    $region11: #{fwd.4} parent=5 // pred_region
      %s114 = ssub.s32 %s8, 1
      // Predicated region
      $region13: #{fwd.4} parent=11 // pred_check
        %p115 = pneg %p46
      $region14: #{fwd.4} parent=11 // pred_check_branch
        %117 = sbr.rel (%p115) target = $region16
      $region15: #{fwd.4} parent=11 // pred_region
        %s118 = smul.u32 32, %s17
        %p119 = scmp.lt.s32.totalorder %s118, 31
        %s120 = scalar_select %p119, %s118, 31
        %s121 = smul.addr %s120, 4
        %s122 = scalar_lea.vmem %s0, %s121
        %s123 = smul.u32 32, %s17
      $region16: #{fwd.4} parent=11 // pred_fallthru
        _
    $region12: #{fwd.4} parent=5 // pred_fallthru
      _
    %p124 = scmp.lt.s32.totalorder %s8, 3
    // Predicated region
    $region17: #{fwd.4} parent=5 // pred_check
      %p125 = pneg %p124
    $region18: #{fwd.4} parent=5 // pred_check_branch
      %127 = sbr.rel (%p125) target = $region20
    $region19: #{fwd.4} parent=5 // pred_region
      // Predicated region
      $region21: #{fwd.4} parent=19 // pred_check
        %p128 = pneg %p66
      $region22: #{fwd.4} parent=19 // pred_check_branch
        %130 = sbr.rel (%p128) target = $region24
      $region23: #{fwd.4} parent=19 // pred_region
        %p131 = scmp.lt.s32.totalorder %s16, 2
        %s132 = scalar_select %p131, %s16, 2
        %s133 = smul.addr %s132, 8
        %s134 = smul.addr %s133, 4
        %s135 = scalar_lea.vmem %s1, %s134
      $region24: #{fwd.4} parent=19 // pred_fallthru
        _
    $region20: #{fwd.4} parent=5 // pred_fallthru
      _
    %p136 = scmp.le.s32.totalorder 1, %s8
    %p137 = scmp.lt.s32.totalorder %s8, 4
    %p138 = pnand %p136, %p137
    %p139 = pneg %p138
    // Predicated region
    $region25: #{fwd.4} parent=5 // pred_check
      _
    $region26: #{fwd.4} parent=5 // pred_check_branch
      %141 = sbr.rel (%p138) target = $region28
    $region27: #{fwd.4} parent=5 // pred_region
      %s142 = ssub.s32 %s8, 1
      %s143 = smul.u32 32, %s17
      %p144 = scmp.lt.s32.totalorder %s143, 31
      %s145 = scalar_select %p144, %s143, 31
      %s146 = smul.addr %s145, 4
      %s147 = scalar_lea.vmem %s0, %s146
      %p148 = pneg %p46
      %p149 = pneg %p43
      %p150 = scmp.lt.s32.totalorder %s18, 2
      %s151 = scalar_select %p150, %s18, 2
      %s152 = smul.addr %s151, 8
      %s153 = smul.addr %s152, 4
      %s154 = scalar_lea.vmem %s1, %s153
      %p155 = pneg %p72
      %p156 = pneg %p69
      %p157 = pneg %p100
      %p158 = pneg %p97
      %s159 = smul.u32 32, %s17
      %p160 = scmp.lt.s32.totalorder %s18, 2
      %s161 = scalar_select %p160, %s18, 2
      %p162 = scmp.lt.s32.totalorder %s159, 31
      %s163 = scalar_select %p162, %s159, 31
      %s164 = smul.addr %s161, 32
      %s165 = sadd.s32 %s163, %s164
      %s166 = smul.addr %s165, 4
      %s167 = scalar_lea.vmem %s2, %s166
      %s168 = smul.u32 32, %s17
      %p169 = scmp.lt.s32.totalorder %s168, 31
      %s170 = scalar_select %p169, %s168, 31
      %s171 = smul.addr %s170, 4
      %s172 = scalar_lea.vmem %s0, %s171
      %s173 = smul.u32 32, %s17
      %p174 = scmp.lt.s32.totalorder %s18, 2
      %s175 = scalar_select %p174, %s18, 2
      %s176 = smul.addr %s175, 8
      %s177 = smul.addr %s176, 4
      %s178 = scalar_lea.vmem %s1, %s177
      %s179 = smul.u32 32, %s17
      %p180 = scmp.lt.s32.totalorder %s18, 2
      %s181 = scalar_select %p180, %s18, 2
      %p182 = scmp.lt.s32.totalorder %s179, 31
      %s183 = scalar_select %p182, %s179, 31
      %s184 = smul.addr %s181, 32
      %s185 = sadd.s32 %s183, %s184
      %s186 = smul.addr %s185, 4
      %s187 = scalar_lea.vmem %s2, %s186
      %s188 = smul.u32 32, %s17
      %v190 = vld [vmem:[%s172] sm:$0xf]
      %v191 = vld [vmem:[%s172 + $0x4] sm:$0xf]
      %v192 = vld [vmem:[%s172 + $0x8] sm:$0xf]
      %v193 = vld [vmem:[%s172 + $0xc] sm:$0xf]
      %v194 = vld [vmem:[%s172 + $0x10] sm:$0xf]
      %v195 = vld [vmem:[%s172 + $0x14] sm:$0xf]
      %v196 = vld [vmem:[%s172 + $0x18] sm:$0xf]
      %v197 = vld [vmem:[%s172 + $0x1c] sm:$0xf]
      %v198 = vld [vmem:[%s172 + $0x20] sm:$0xf]
      %v199 = vld [vmem:[%s172 + $0x24] sm:$0xf]
      %v200 = vld [vmem:[%s172 + $0x28] sm:$0xf]
      %v201 = vld [vmem:[%s172 + $0x2c] sm:$0xf]
      %v202 = vld [vmem:[%s172 + $0x30] sm:$0xf]
      %v203 = vld [vmem:[%s172 + $0x34] sm:$0xf]
      %v204 = vld [vmem:[%s172 + $0x38] sm:$0xf]
      %v205 = vld [vmem:[%s172 + $0x3c] sm:$0xf]
      %v206 = vld [vmem:[%s172 + $0x40] sm:$0xf]
      %v207 = vld [vmem:[%s172 + $0x44] sm:$0xf]
      %v208 = vld [vmem:[%s172 + $0x48] sm:$0xf]
      %v209 = vld [vmem:[%s172 + $0x4c] sm:$0xf]
      %v210 = vld [vmem:[%s172 + $0x50] sm:$0xf]
      %v211 = vld [vmem:[%s172 + $0x54] sm:$0xf]
      %v212 = vld [vmem:[%s172 + $0x58] sm:$0xf]
      %v213 = vld [vmem:[%s172 + $0x5c] sm:$0xf]
      %v214 = vld [vmem:[%s172 + $0x60] sm:$0xf]
      %v215 = vld [vmem:[%s172 + $0x64] sm:$0xf]
      %v216 = vld [vmem:[%s172 + $0x68] sm:$0xf]
      %v217 = vld [vmem:[%s172 + $0x6c] sm:$0xf]
      %v218 = vld [vmem:[%s172 + $0x70] sm:$0xf]
      %v219 = vld [vmem:[%s172 + $0x74] sm:$0xf]
      %v220 = vld [vmem:[%s172 + $0x78] sm:$0xf]
      %v221 = vld [vmem:[%s172 + $0x7c] sm:$0xf]
      %v222 = vld [vmem:[%s178] sm:$0xf]
      %v223 = vld [vmem:[%s178 + $0x4] sm:$0xf]
      %v224 = vld [vmem:[%s178 + $0x8] sm:$0xf]
      %v225 = vld [vmem:[%s178 + $0xc] sm:$0xf]
      %v226 = vld [vmem:[%s178 + $0x10] sm:$0xf]
      %v227 = vld [vmem:[%s178 + $0x14] sm:$0xf]
      %v228 = vld [vmem:[%s178 + $0x18] sm:$0xf]
      %v229 = vld [vmem:[%s178 + $0x1c] sm:$0xf]
      %v262 = vunpack.c.l.b16 %v190
      %v263 = vunpack.c.l.b16 %v191
      %v264 = vunpack.c.l.b16 %v192
      %v265 = vunpack.c.l.b16 %v193
      %v266 = vunpack.c.l.b16 %v194
      %v267 = vunpack.c.l.b16 %v195
      %v268 = vunpack.c.l.b16 %v196
      %v269 = vunpack.c.l.b16 %v197
      %v270 = vunpack.c.l.b16 %v198
      %v271 = vunpack.c.l.b16 %v199
      %v272 = vunpack.c.l.b16 %v200
      %v273 = vunpack.c.l.b16 %v201
      %v274 = vunpack.c.l.b16 %v202
      %v275 = vunpack.c.l.b16 %v203
      %v276 = vunpack.c.l.b16 %v204
      %v277 = vunpack.c.l.b16 %v205
      %v278 = vunpack.c.l.b16 %v206
      %v279 = vunpack.c.l.b16 %v207
      %v280 = vunpack.c.l.b16 %v208
      %v281 = vunpack.c.l.b16 %v209
      %v282 = vunpack.c.l.b16 %v210
      %v283 = vunpack.c.l.b16 %v211
      %v284 = vunpack.c.l.b16 %v212
      %v285 = vunpack.c.l.b16 %v213
      %v286 = vunpack.c.l.b16 %v214
      %v287 = vunpack.c.l.b16 %v215
      %v288 = vunpack.c.l.b16 %v216
      %v289 = vunpack.c.l.b16 %v217
      %v290 = vunpack.c.l.b16 %v218
      %v291 = vunpack.c.l.b16 %v219
      %v292 = vunpack.c.l.b16 %v220
      %v293 = vunpack.c.l.b16 %v221
      %v294 = vpack.c.b16 %v263, %v262
      %v295 = vpack.c.b16 %v265, %v264
      %v296 = vpack.c.b16 %v267, %v266
      %v297 = vpack.c.b16 %v269, %v268
      %v298 = vpack.c.b16 %v271, %v270
      %v299 = vpack.c.b16 %v273, %v272
      %v300 = vpack.c.b16 %v275, %v274
      %v301 = vpack.c.b16 %v277, %v276
      %v302 = vpack.c.b16 %v279, %v278
      %v303 = vpack.c.b16 %v281, %v280
      %v304 = vpack.c.b16 %v283, %v282
      %v305 = vpack.c.b16 %v285, %v284
      %v306 = vpack.c.b16 %v287, %v286
      %v307 = vpack.c.b16 %v289, %v288
      %v308 = vpack.c.b16 %v291, %v290
      %v309 = vpack.c.b16 %v293, %v292
      %v318 = vunpack.c.l.b16 %v222
      %v319 = vunpack.c.l.b16 %v223
      %v320 = vunpack.c.l.b16 %v224
      %v321 = vunpack.c.l.b16 %v225
      %v322 = vunpack.c.l.b16 %v226
      %v323 = vunpack.c.l.b16 %v227
      %v324 = vunpack.c.l.b16 %v228
      %v325 = vunpack.c.l.b16 %v229
      %v326 = vpack.c.b16 %v319, %v318
      %v327 = vpack.c.b16 %v321, %v320
      %v328 = vpack.c.b16 %v323, %v322
      %v329 = vpack.c.b16 %v325, %v324
      %vm334 = vcmask 523264
      %v336 = vsel %vm334, %v294, 0
      %v339 = vsel %vm334, %v295, 0
      %v342 = vsel %vm334, %v296, 0
      %v345 = vsel %vm334, %v297, 0
      %v348 = vsel %vm334, %v298, 0
      %v351 = vsel %vm334, %v299, 0
      %v354 = vsel %vm334, %v300, 0
      %v357 = vsel %vm334, %v301, 0
      %v360 = vsel %vm334, %v302, 0
      %v363 = vsel %vm334, %v303, 0
      %v366 = vsel %vm334, %v304, 0
      %v369 = vsel %vm334, %v305, 0
      %v372 = vsel %vm334, %v306, 0
      %v375 = vsel %vm334, %v307, 0
      %v378 = vsel %vm334, %v308, 0
      %v381 = vsel %vm334, %v309, 0
      %383 = vmatpush.bf16.msra.mxu0 0
      %384 = vmatpush.bf16.msra.mxu0 0
      %385 = vmatpush.bf16.msra.mxu0 0
      %386 = vmatpush.bf16.msra.mxu0 0
      %387 = vmatpush.bf16.msra.mxu0 %v329
      %388 = vmatpush.bf16.msra.mxu0 %v328
      %389 = vmatpush.bf16.msra.mxu0 %v327
      %390 = vmatpush.bf16.msra.mxu0 %v326
      %391 = vmatmul.bf16.gmra.mxu0 %v336
      %v392 = vpop.f32.mrf.mxu0
      %v393 = vadd.f32 0.0, %v392
      %v394 = vpop.f32.mrf.mxu0
      %v395 = vadd.f32 0.0, %v394
      %396 = vmatmul.bf16.gmra.mxu0 %v339
      %v397 = vpop.f32.mrf.mxu0
      %v398 = vadd.f32 0.0, %v397
      %v399 = vpop.f32.mrf.mxu0
      %v400 = vadd.f32 0.0, %v399
      %401 = vmatmul.bf16.gmra.mxu0 %v342
      %v402 = vpop.f32.mrf.mxu0
      %v403 = vadd.f32 0.0, %v402
      %v404 = vpop.f32.mrf.mxu0
      %v405 = vadd.f32 0.0, %v404
      %406 = vmatmul.bf16.gmra.mxu0 %v345
      %v407 = vpop.f32.mrf.mxu0
      %v408 = vadd.f32 0.0, %v407
      %v409 = vpop.f32.mrf.mxu0
      %v410 = vadd.f32 0.0, %v409
      %411 = vmatmul.bf16.gmra.mxu0 %v348
      %v412 = vpop.f32.mrf.mxu0
      %v413 = vadd.f32 0.0, %v412
      %v414 = vpop.f32.mrf.mxu0
      %v415 = vadd.f32 0.0, %v414
      %416 = vmatmul.bf16.gmra.mxu0 %v351
      %v417 = vpop.f32.mrf.mxu0
      %v418 = vadd.f32 0.0, %v417
      %v419 = vpop.f32.mrf.mxu0
      %v420 = vadd.f32 0.0, %v419
      %421 = vmatmul.bf16.gmra.mxu0 %v354
      %v422 = vpop.f32.mrf.mxu0
      %v423 = vadd.f32 0.0, %v422
      %v424 = vpop.f32.mrf.mxu0
      %v425 = vadd.f32 0.0, %v424
      %426 = vmatmul.bf16.gmra.mxu0 %v357
      %v427 = vpop.f32.mrf.mxu0
      %v428 = vadd.f32 0.0, %v427
      %v429 = vpop.f32.mrf.mxu0
      %v430 = vadd.f32 0.0, %v429
      %431 = vmatmul.bf16.gmra.mxu0 %v360
      %v432 = vpop.f32.mrf.mxu0
      %v433 = vadd.f32 0.0, %v432
      %v434 = vpop.f32.mrf.mxu0
      %v435 = vadd.f32 0.0, %v434
      %436 = vmatmul.bf16.gmra.mxu0 %v363
      %v437 = vpop.f32.mrf.mxu0
      %v438 = vadd.f32 0.0, %v437
      %v439 = vpop.f32.mrf.mxu0
      %v440 = vadd.f32 0.0, %v439
      %441 = vmatmul.bf16.gmra.mxu0 %v366
      %v442 = vpop.f32.mrf.mxu0
      %v443 = vadd.f32 0.0, %v442
      %v444 = vpop.f32.mrf.mxu0
      %v445 = vadd.f32 0.0, %v444
      %446 = vmatmul.bf16.gmra.mxu0 %v369
      %v447 = vpop.f32.mrf.mxu0
      %v448 = vadd.f32 0.0, %v447
      %v449 = vpop.f32.mrf.mxu0
      %v450 = vadd.f32 0.0, %v449
      %451 = vmatmul.bf16.gmra.mxu0 %v372
      %v452 = vpop.f32.mrf.mxu0
      %v453 = vadd.f32 0.0, %v452
      %v454 = vpop.f32.mrf.mxu0
      %v455 = vadd.f32 0.0, %v454
      %456 = vmatmul.bf16.gmra.mxu0 %v375
      %v457 = vpop.f32.mrf.mxu0
      %v458 = vadd.f32 0.0, %v457
      %v459 = vpop.f32.mrf.mxu0
      %v460 = vadd.f32 0.0, %v459
      %461 = vmatmul.bf16.gmra.mxu0 %v378
      %v462 = vpop.f32.mrf.mxu0
      %v463 = vadd.f32 0.0, %v462
      %v464 = vpop.f32.mrf.mxu0
      %v465 = vadd.f32 0.0, %v464
      %466 = vmatmul.bf16.gmra.mxu0 %v381
      %v467 = vpop.f32.mrf.mxu0
      %v468 = vadd.f32 0.0, %v467
      %v469 = vpop.f32.mrf.mxu0
      %v470 = vadd.f32 0.0, %v469
      %471 = vdwg.mxu0
      %v472 = vpack.c.bf16 %v393, %v393
      %v473 = vpack.c.bf16 %v395, %v395
      %v474 = vpack.c.bf16 %v398, %v398
      %v475 = vpack.c.bf16 %v400, %v400
      %v476 = vpack.c.bf16 %v403, %v403
      %v477 = vpack.c.bf16 %v405, %v405
      %v478 = vpack.c.bf16 %v408, %v408
      %v479 = vpack.c.bf16 %v410, %v410
      %v480 = vpack.c.bf16 %v413, %v413
      %v481 = vpack.c.bf16 %v415, %v415
      %v482 = vpack.c.bf16 %v418, %v418
      %v483 = vpack.c.bf16 %v420, %v420
      %v484 = vpack.c.bf16 %v423, %v423
      %v485 = vpack.c.bf16 %v425, %v425
      %v486 = vpack.c.bf16 %v428, %v428
      %v487 = vpack.c.bf16 %v430, %v430
      %v488 = vpack.c.bf16 %v433, %v433
      %v489 = vpack.c.bf16 %v435, %v435
      %v490 = vpack.c.bf16 %v438, %v438
      %v491 = vpack.c.bf16 %v440, %v440
      %v492 = vpack.c.bf16 %v443, %v443
      %v493 = vpack.c.bf16 %v445, %v445
      %v494 = vpack.c.bf16 %v448, %v448
      %v495 = vpack.c.bf16 %v450, %v450
      %v496 = vpack.c.bf16 %v453, %v453
      %v497 = vpack.c.bf16 %v455, %v455
      %v498 = vpack.c.bf16 %v458, %v458
      %v499 = vpack.c.bf16 %v460, %v460
      %v500 = vpack.c.bf16 %v463, %v463
      %v501 = vpack.c.bf16 %v465, %v465
      %v502 = vpack.c.bf16 %v468, %v468
      %v503 = vpack.c.bf16 %v470, %v470
      %504 = vst [vmem:[%s187] sm:$0xf] %v472
      %505 = vst [vmem:[%s187 + $0x4] sm:$0xf] %v473
      %506 = vst [vmem:[%s187 + $0x8] sm:$0xf] %v474
      %507 = vst [vmem:[%s187 + $0xc] sm:$0xf] %v475
      %508 = vst [vmem:[%s187 + $0x10] sm:$0xf] %v476
      %509 = vst [vmem:[%s187 + $0x14] sm:$0xf] %v477
      %510 = vst [vmem:[%s187 + $0x18] sm:$0xf] %v478
      %511 = vst [vmem:[%s187 + $0x1c] sm:$0xf] %v479
      %512 = vst [vmem:[%s187 + $0x20] sm:$0xf] %v480
      %513 = vst [vmem:[%s187 + $0x24] sm:$0xf] %v481
      %514 = vst [vmem:[%s187 + $0x28] sm:$0xf] %v482
      %515 = vst [vmem:[%s187 + $0x2c] sm:$0xf] %v483
      %516 = vst [vmem:[%s187 + $0x30] sm:$0xf] %v484
      %517 = vst [vmem:[%s187 + $0x34] sm:$0xf] %v485
      %518 = vst [vmem:[%s187 + $0x38] sm:$0xf] %v486
      %519 = vst [vmem:[%s187 + $0x3c] sm:$0xf] %v487
      %520 = vst [vmem:[%s187 + $0x40] sm:$0xf] %v488
      %521 = vst [vmem:[%s187 + $0x44] sm:$0xf] %v489
      %522 = vst [vmem:[%s187 + $0x48] sm:$0xf] %v490
      %523 = vst [vmem:[%s187 + $0x4c] sm:$0xf] %v491
      %524 = vst [vmem:[%s187 + $0x50] sm:$0xf] %v492
      %525 = vst [vmem:[%s187 + $0x54] sm:$0xf] %v493
      %526 = vst [vmem:[%s187 + $0x58] sm:$0xf] %v494
      %527 = vst [vmem:[%s187 + $0x5c] sm:$0xf] %v495
      %528 = vst [vmem:[%s187 + $0x60] sm:$0xf] %v496
      %529 = vst [vmem:[%s187 + $0x64] sm:$0xf] %v497
      %530 = vst [vmem:[%s187 + $0x68] sm:$0xf] %v498
      %531 = vst [vmem:[%s187 + $0x6c] sm:$0xf] %v499
      %532 = vst [vmem:[%s187 + $0x70] sm:$0xf] %v500
      %533 = vst [vmem:[%s187 + $0x74] sm:$0xf] %v501
      %534 = vst [vmem:[%s187 + $0x78] sm:$0xf] %v502
      %535 = vst [vmem:[%s187 + $0x7c] sm:$0xf] %v503
      %s536 = smul.u32 32, %s17
      %p537 = scmp.lt.s32.totalorder %s18, 2
      %s538 = scalar_select %p537, %s18, 2
      %p539 = scmp.lt.s32.totalorder %s536, 31
      %s540 = scalar_select %p539, %s536, 31
      %s541 = smul.addr %s538, 32
      %s542 = sadd.s32 %s540, %s541
      %s543 = smul.addr %s542, 4
      %s544 = scalar_lea.vmem %s2, %s543
      // Predicated region
      $region29: #{fwd.4} parent=27 // pred_check
        %p545 = pneg %p97
      $region30: #{fwd.4} parent=27 // pred_check_branch
        %547 = sbr.rel (%p545) target = $region32
      $region31: #{fwd.4} parent=27 // pred_region
        %s548 = smul.u32 32, %s17
      $region32: #{fwd.4} parent=27 // pred_fallthru
        _
    $region28: #{fwd.4} parent=5 // pred_fallthru
      _
    %p549 = scmp.le.s32.totalorder 2, %s8
    // Predicated region
    $region33: #{fwd.4} parent=5 // pred_check
      %p550 = pneg %p549
    $region34: #{fwd.4} parent=5 // pred_check_branch
      %552 = sbr.rel (%p550) target = $region36
    $region35: #{fwd.4} parent=5 // pred_region
      %s553 = ssub.s32 %s8, 2
      // Predicated region
      $region37: #{fwd.4} parent=35 // pred_check
        %p554 = pneg %p103
      $region38: #{fwd.4} parent=35 // pred_check_branch
        %556 = sbr.rel (%p554) target = $region40
      $region39: #{fwd.4} parent=35 // pred_region
        %s557 = smul.u32 32, %s19
        %p558 = scmp.lt.s32.totalorder %s20, 2
        %s559 = scalar_select %p558, %s20, 2
        %p560 = scmp.lt.s32.totalorder %s557, 31
        %s561 = scalar_select %p560, %s557, 31
        %s562 = smul.addr %s559, 32
        %s563 = sadd.s32 %s561, %s562
        %s564 = smul.addr %s563, 4
        %s565 = scalar_lea.vmem %s2, %s564
      $region40: #{fwd.4} parent=35 // pred_fallthru
        _
    $region36: #{fwd.4} parent=5 // pred_fallthru
      _
  $region6: #{fwd.4} parent=0 // loop_footer
    %s12 = sadd.s32 1, %s8
  $region7: #{fwd.4} parent=0 // loop_footer_branch
    %7 = sbr.rel target = $region3
  $region8: #{fwd.4} parent=0 // loop_exit
    _

// kernel: fwd.6
$region0: #{fwd.6}
  #allocation0 [shape = 'u32[]', space=smem, size = 0x4, offset = 0x4, fixed_abs, tag = 'smem constant byte address 0x4 - core index']
  #allocation1 [shape = 'u32[72,128]{1,0:T(1,128)}', space=vmem, size = 0x9000, scoped, tag = 'internal scratch']
  %s0 = inlined_call_operand.vmem [shape: bf16[256,32], index: 0, kind: input, shape index: {}]
  %s1 = inlined_call_operand.vmem [shape: bf16[3,32,128], index: 1, kind: input, shape index: {}]
  %s2 = inlined_call_operand.vmem [shape: bf16[3,256,128], index: 2, kind: output, shape index: {}]
  %s3 = sld [smem:[#allocation0]]
  $region41: #{fwd.6} parent=0
    _
  %s5 = ssub.s32 1, %s3
  %s6 = scalar_select 0, %s5, %s3
  loop: start=0, step=1, limit=5
  $region2: #{fwd.6} parent=0 // loop_pre_header
    _
  $region3: #{fwd.6} parent=0 // loop_header
    %s8 = sphi 0, %s12
    %p9 = scmp.ge.s32.totalorder %s8, 5
    %s15 = sphi 0, %s27
    %s16 = sphi 0, %s23
    %s17 = sphi 0, %s15
    %s18 = sphi 0, %s16
    %s19 = sphi 0, %s17
    %s20 = sphi 0, %s18
    %s30 = sphi 0, %s32
    %s33 = sphi 0, %s30
    %s34 = sphi 0, %s33
    %s50 = sphi 0, %s34
    %s56 = sphi 0, %s58
    %s59 = sphi 0, %s56
    %s60 = sphi 0, %s59
    %s76 = sphi 0, %s60
    %s84 = sphi 0, %s86
    %s87 = sphi 0, %s84
    %s88 = sphi 0, %s87
    %s104 = sphi 0, %s88
  $region4: #{fwd.6} parent=0 // loop_header_branch
    %11 = sbr.rel (%p9) target = $region8
  $region5: #{fwd.6} parent=0 // loop_body
    %s13 = ssub.s32 %s8, 1
    %s14 = ssub.s32 %s8, 2
    %s21 = sadd.s32 1, %s16
    %p22 = scmp.ge.s32.totalorder %s21, 3
    %s23 = scalar_select %p22, 0, %s21
    %s24 = sadd.s32 1, %s15
    %s25 = scalar_select %p22, %s24, %s15
    %p26 = scmp.ge.s32.totalorder %s25, 1
    %s27 = scalar_select %p26, 0, %s25
    %s28 = ssub.s32 %s15, %s27
    %p29 = scmp.eq.s32.totalorder %s28, 0
    %s31 = sadd.s32 %s30, 1
    %s32 = scalar_select %p29, %s30, %s31
    %p35 = pneg %p29
    %p36 = scmp.eq.s32.totalorder %s8, 2
    %p37 = por %p35, %p36
    %p38 = scmp.ne.s32.totalorder %s30, %s33
    %p39 = scmp.eq.s32.totalorder %s8, 0
    %p40 = por %p38, %p39
    %p41 = scmp.ne.s32.totalorder %s30, %s33
    %p42 = scmp.eq.s32.totalorder %s13, 2
    %p43 = por %p41, %p42
    %p44 = scmp.ne.s32.totalorder %s33, %s34
    %p45 = scmp.eq.s32.totalorder %s13, 0
    %p46 = por %p44, %p45
    %p47 = scmp.ne.s32.totalorder %s33, %s34
    %p48 = scmp.eq.s32.totalorder %s14, 2
    %p49 = por %p47, %p48
    %p51 = scmp.ne.s32.totalorder %s34, %s50
    %p52 = scmp.eq.s32.totalorder %s14, 0
    %p53 = por %p51, %p52
    %s54 = ssub.s32 %s16, %s23
    %p55 = scmp.eq.s32.totalorder %s54, 0
    %s57 = sadd.s32 %s56, 1
    %s58 = scalar_select %p55, %s56, %s57
    %p61 = pneg %p55
    %p62 = scmp.eq.s32.totalorder %s8, 2
    %p63 = por %p61, %p62
    %p64 = scmp.ne.s32.totalorder %s56, %s59
    %p65 = scmp.eq.s32.totalorder %s8, 0
    %p66 = por %p64, %p65
    %p67 = scmp.ne.s32.totalorder %s56, %s59
    %p68 = scmp.eq.s32.totalorder %s13, 2
    %p69 = por %p67, %p68
    %p70 = scmp.ne.s32.totalorder %s59, %s60
    %p71 = scmp.eq.s32.totalorder %s13, 0
    %p72 = por %p70, %p71
    %p73 = scmp.ne.s32.totalorder %s59, %s60
    %p74 = scmp.eq.s32.totalorder %s14, 2
    %p75 = por %p73, %p74
    %p77 = scmp.ne.s32.totalorder %s60, %s76
    %p78 = scmp.eq.s32.totalorder %s14, 0
    %p79 = por %p77, %p78
    %s80 = ssub.s32 %s16, %s23
    %s81 = ssub.s32 %s15, %s27
    %s82 = sor.u32 %s80, %s81
    %p83 = scmp.eq.s32.totalorder %s82, 0
    %s85 = sadd.s32 %s84, 1
    %s86 = scalar_select %p83, %s84, %s85
    %p89 = pneg %p83
    %p90 = scmp.eq.s32.totalorder %s8, 2
    %p91 = por %p89, %p90
    %p92 = scmp.ne.s32.totalorder %s84, %s87
    %p93 = scmp.eq.s32.totalorder %s8, 0
    %p94 = por %p92, %p93
    %p95 = scmp.ne.s32.totalorder %s84, %s87
    %p96 = scmp.eq.s32.totalorder %s13, 2
    %p97 = por %p95, %p96
    %p98 = scmp.ne.s32.totalorder %s87, %s88
    %p99 = scmp.eq.s32.totalorder %s13, 0
    %p100 = por %p98, %p99
    %p101 = scmp.ne.s32.totalorder %s87, %s88
    %p102 = scmp.eq.s32.totalorder %s14, 2
    %p103 = por %p101, %p102
    %p105 = scmp.ne.s32.totalorder %s88, %s104
    %p106 = scmp.eq.s32.totalorder %s14, 0
    %p107 = por %p105, %p106
    %p108 = scmp.le.s32.totalorder 1, %s8
    %p109 = scmp.lt.s32.totalorder %s8, 4
    %p110 = pnand %p108, %p109
    %p111 = pneg %p110
    // Predicated region
    $region9: #{fwd.6} parent=5 // pred_check
      _
    $region10: #{fwd.6} parent=5 // pred_check_branch
      %113 = sbr.rel (%p110) target = $region12
    $region11: #{fwd.6} parent=5 // pred_region
      %s114 = ssub.s32 %s8, 1
      // Predicated region
      $region13: #{fwd.6} parent=11 // pred_check
        %p115 = pneg %p46
      $region14: #{fwd.6} parent=11 // pred_check_branch
        %117 = sbr.rel (%p115) target = $region16
      $region15: #{fwd.6} parent=11 // pred_region
        %s118 = smul.u32 32, %s17
        %p119 = scmp.lt.s32.totalorder %s118, 31
        %s120 = scalar_select %p119, %s118, 31
        %s121 = smul.addr %s120, 4
        %s122 = scalar_lea.vmem %s0, %s121
        %s123 = smul.u32 32, %s17
      $region16: #{fwd.6} parent=11 // pred_fallthru
        _
    $region12: #{fwd.6} parent=5 // pred_fallthru
      _
    %p124 = scmp.lt.s32.totalorder %s8, 3
    // Predicated region
    $region17: #{fwd.6} parent=5 // pred_check
      %p125 = pneg %p124
    $region18: #{fwd.6} parent=5 // pred_check_branch
      %127 = sbr.rel (%p125) target = $region20
    $region19: #{fwd.6} parent=5 // pred_region
      // Predicated region
      $region21: #{fwd.6} parent=19 // pred_check
        %p128 = pneg %p66
      $region22: #{fwd.6} parent=19 // pred_check_branch
        %130 = sbr.rel (%p128) target = $region24
      $region23: #{fwd.6} parent=19 // pred_region
        %p131 = scmp.lt.s32.totalorder %s16, 2
        %s132 = scalar_select %p131, %s16, 2
        %s133 = smul.addr %s132, 4
        %s134 = smul.addr %s133, 4
        %s135 = scalar_lea.vmem %s1, %s134
      $region24: #{fwd.6} parent=19 // pred_fallthru
        _
    $region20: #{fwd.6} parent=5 // pred_fallthru
      _
    %p136 = scmp.le.s32.totalorder 1, %s8
    %p137 = scmp.lt.s32.totalorder %s8, 4
    %p138 = pnand %p136, %p137
    %p139 = pneg %p138
    // Predicated region
    $region25: #{fwd.6} parent=5 // pred_check
      _
    $region26: #{fwd.6} parent=5 // pred_check_branch
      %141 = sbr.rel (%p138) target = $region28
    $region27: #{fwd.6} parent=5 // pred_region
      %s142 = ssub.s32 %s8, 1
      %s143 = smul.u32 32, %s17
      %p144 = scmp.lt.s32.totalorder %s143, 31
      %s145 = scalar_select %p144, %s143, 31
      %s146 = smul.addr %s145, 4
      %s147 = scalar_lea.vmem %s0, %s146
      %p148 = pneg %p46
      %p149 = pneg %p43
      %p150 = scmp.lt.s32.totalorder %s18, 2
      %s151 = scalar_select %p150, %s18, 2
      %s152 = smul.addr %s151, 4
      %s153 = smul.addr %s152, 4
      %s154 = scalar_lea.vmem %s1, %s153
      %p155 = pneg %p72
      %p156 = pneg %p69
      %p157 = pneg %p100
      %p158 = pneg %p97
      %s159 = smul.u32 32, %s17
      %p160 = scmp.lt.s32.totalorder %s18, 2
      %s161 = scalar_select %p160, %s18, 2
      %p162 = scmp.lt.s32.totalorder %s159, 31
      %s163 = scalar_select %p162, %s159, 31
      %s164 = smul.addr %s161, 32
      %s165 = sadd.s32 %s163, %s164
      %s166 = smul.addr %s165, 4
      %s167 = scalar_lea.vmem %s2, %s166
      %s168 = smul.u32 32, %s17
      %p169 = scmp.lt.s32.totalorder %s168, 31
      %s170 = scalar_select %p169, %s168, 31
      %s171 = smul.addr %s170, 4
      %s172 = scalar_lea.vmem %s0, %s171
      %s173 = smul.u32 32, %s17
      %p174 = scmp.lt.s32.totalorder %s18, 2
      %s175 = scalar_select %p174, %s18, 2
      %s176 = smul.addr %s175, 4
      %s177 = smul.addr %s176, 4
      %s178 = scalar_lea.vmem %s1, %s177
      %s179 = smul.u32 32, %s17
      %p180 = scmp.lt.s32.totalorder %s18, 2
      %s181 = scalar_select %p180, %s18, 2
      %p182 = scmp.lt.s32.totalorder %s179, 31
      %s183 = scalar_select %p182, %s179, 31
      %s184 = smul.addr %s181, 32
      %s185 = sadd.s32 %s183, %s184
      %s186 = smul.addr %s185, 4
      %s187 = scalar_lea.vmem %s2, %s186
      %s188 = smul.u32 32, %s17
      %v190 = vld [vmem:[%s172] sm:$0xf]
      %v191 = vld [vmem:[%s172 + $0x4] sm:$0xf]
      %v192 = vld [vmem:[%s172 + $0x8] sm:$0xf]
      %v193 = vld [vmem:[%s172 + $0xc] sm:$0xf]
      %v194 = vld [vmem:[%s172 + $0x10] sm:$0xf]
      %v195 = vld [vmem:[%s172 + $0x14] sm:$0xf]
      %v196 = vld [vmem:[%s172 + $0x18] sm:$0xf]
      %v197 = vld [vmem:[%s172 + $0x1c] sm:$0xf]
      %v198 = vld [vmem:[%s172 + $0x20] sm:$0xf]
      %v199 = vld [vmem:[%s172 + $0x24] sm:$0xf]
      %v200 = vld [vmem:[%s172 + $0x28] sm:$0xf]
      %v201 = vld [vmem:[%s172 + $0x2c] sm:$0xf]
      %v202 = vld [vmem:[%s172 + $0x30] sm:$0xf]
      %v203 = vld [vmem:[%s172 + $0x34] sm:$0xf]
      %v204 = vld [vmem:[%s172 + $0x38] sm:$0xf]
      %v205 = vld [vmem:[%s172 + $0x3c] sm:$0xf]
      %v206 = vld [vmem:[%s172 + $0x40] sm:$0xf]
      %v207 = vld [vmem:[%s172 + $0x44] sm:$0xf]
      %v208 = vld [vmem:[%s172 + $0x48] sm:$0xf]
      %v209 = vld [vmem:[%s172 + $0x4c] sm:$0xf]
      %v210 = vld [vmem:[%s172 + $0x50] sm:$0xf]
      %v211 = vld [vmem:[%s172 + $0x54] sm:$0xf]
      %v212 = vld [vmem:[%s172 + $0x58] sm:$0xf]
      %v213 = vld [vmem:[%s172 + $0x5c] sm:$0xf]
      %v214 = vld [vmem:[%s172 + $0x60] sm:$0xf]
      %v215 = vld [vmem:[%s172 + $0x64] sm:$0xf]
      %v216 = vld [vmem:[%s172 + $0x68] sm:$0xf]
      %v217 = vld [vmem:[%s172 + $0x6c] sm:$0xf]
      %v218 = vld [vmem:[%s172 + $0x70] sm:$0xf]
      %v219 = vld [vmem:[%s172 + $0x74] sm:$0xf]
      %v220 = vld [vmem:[%s172 + $0x78] sm:$0xf]
      %v221 = vld [vmem:[%s172 + $0x7c] sm:$0xf]
      %v222 = vld [vmem:[%s178] sm:$0xf]
      %v223 = vld [vmem:[%s178 + $0x4] sm:$0xf]
      %v224 = vld [vmem:[%s178 + $0x8] sm:$0xf]
      %v225 = vld [vmem:[%s178 + $0xc] sm:$0xf]
      %v258 = vunpack.c.l.b16 %v190
      %v259 = vunpack.c.l.b16 %v191
      %v260 = vunpack.c.l.b16 %v192
      %v261 = vunpack.c.l.b16 %v193
      %v262 = vunpack.c.l.b16 %v194
      %v263 = vunpack.c.l.b16 %v195
      %v264 = vunpack.c.l.b16 %v196
      %v265 = vunpack.c.l.b16 %v197
      %v266 = vunpack.c.l.b16 %v198
      %v267 = vunpack.c.l.b16 %v199
      %v268 = vunpack.c.l.b16 %v200
      %v269 = vunpack.c.l.b16 %v201
      %v270 = vunpack.c.l.b16 %v202
      %v271 = vunpack.c.l.b16 %v203
      %v272 = vunpack.c.l.b16 %v204
      %v273 = vunpack.c.l.b16 %v205
      %v274 = vunpack.c.l.b16 %v206
      %v275 = vunpack.c.l.b16 %v207
      %v276 = vunpack.c.l.b16 %v208
      %v277 = vunpack.c.l.b16 %v209
      %v278 = vunpack.c.l.b16 %v210
      %v279 = vunpack.c.l.b16 %v211
      %v280 = vunpack.c.l.b16 %v212
      %v281 = vunpack.c.l.b16 %v213
      %v282 = vunpack.c.l.b16 %v214
      %v283 = vunpack.c.l.b16 %v215
      %v284 = vunpack.c.l.b16 %v216
      %v285 = vunpack.c.l.b16 %v217
      %v286 = vunpack.c.l.b16 %v218
      %v287 = vunpack.c.l.b16 %v219
      %v288 = vunpack.c.l.b16 %v220
      %v289 = vunpack.c.l.b16 %v221
      %v290 = vpack.c.b16 %v259, %v258
      %v291 = vpack.c.b16 %v261, %v260
      %v292 = vpack.c.b16 %v263, %v262
      %v293 = vpack.c.b16 %v265, %v264
      %v294 = vpack.c.b16 %v267, %v266
      %v295 = vpack.c.b16 %v269, %v268
      %v296 = vpack.c.b16 %v271, %v270
      %v297 = vpack.c.b16 %v273, %v272
      %v298 = vpack.c.b16 %v275, %v274
      %v299 = vpack.c.b16 %v277, %v276
      %v300 = vpack.c.b16 %v279, %v278
      %v301 = vpack.c.b16 %v281, %v280
      %v302 = vpack.c.b16 %v283, %v282
      %v303 = vpack.c.b16 %v285, %v284
      %v304 = vpack.c.b16 %v287, %v286
      %v305 = vpack.c.b16 %v289, %v288
      %v310 = vunpack.c.l.b16 %v222
      %v311 = vunpack.c.l.b16 %v223
      %v312 = vunpack.c.l.b16 %v224
      %v313 = vunpack.c.l.b16 %v225
      %v314 = vpack.c.b16 %v311, %v310
      %v315 = vpack.c.b16 %v313, %v312
      %vm318 = vcmask 261120
      %v320 = vsel %vm318, %v290, 0
      %v323 = vsel %vm318, %v291, 0
      %v326 = vsel %vm318, %v292, 0
      %v329 = vsel %vm318, %v293, 0
      %v332 = vsel %vm318, %v294, 0
      %v335 = vsel %vm318, %v295, 0
      %v338 = vsel %vm318, %v296, 0
      %v341 = vsel %vm318, %v297, 0
      %v344 = vsel %vm318, %v298, 0
      %v347 = vsel %vm318, %v299, 0
      %v350 = vsel %vm318, %v300, 0
      %v353 = vsel %vm318, %v301, 0
      %v356 = vsel %vm318, %v302, 0
      %v359 = vsel %vm318, %v303, 0
      %v362 = vsel %vm318, %v304, 0
      %v365 = vsel %vm318, %v305, 0
      %367 = vmatpush.bf16.msra.mxu0 0
      %368 = vmatpush.bf16.msra.mxu0 0
      %369 = vmatpush.bf16.msra.mxu0 0
      %370 = vmatpush.bf16.msra.mxu0 0
      %371 = vmatpush.bf16.msra.mxu0 0
      %372 = vmatpush.bf16.msra.mxu0 0
      %373 = vmatpush.bf16.msra.mxu0 %v315
      %374 = vmatpush.bf16.msra.mxu0 %v314
      %375 = vmatmul.bf16.gmra.mxu0 %v320
      %v376 = vpop.f32.mrf.mxu0
      %v377 = vadd.f32 0.0, %v376
      %v378 = vpop.f32.mrf.mxu0
      %v379 = vadd.f32 0.0, %v378
      %380 = vmatmul.bf16.gmra.mxu0 %v323
      %v381 = vpop.f32.mrf.mxu0
      %v382 = vadd.f32 0.0, %v381
      %v383 = vpop.f32.mrf.mxu0
      %v384 = vadd.f32 0.0, %v383
      %385 = vmatmul.bf16.gmra.mxu0 %v326
      %v386 = vpop.f32.mrf.mxu0
      %v387 = vadd.f32 0.0, %v386
      %v388 = vpop.f32.mrf.mxu0
      %v389 = vadd.f32 0.0, %v388
      %390 = vmatmul.bf16.gmra.mxu0 %v329
      %v391 = vpop.f32.mrf.mxu0
      %v392 = vadd.f32 0.0, %v391
      %v393 = vpop.f32.mrf.mxu0
      %v394 = vadd.f32 0.0, %v393
      %395 = vmatmul.bf16.gmra.mxu0 %v332
      %v396 = vpop.f32.mrf.mxu0
      %v397 = vadd.f32 0.0, %v396
      %v398 = vpop.f32.mrf.mxu0
      %v399 = vadd.f32 0.0, %v398
      %400 = vmatmul.bf16.gmra.mxu0 %v335
      %v401 = vpop.f32.mrf.mxu0
      %v402 = vadd.f32 0.0, %v401
      %v403 = vpop.f32.mrf.mxu0
      %v404 = vadd.f32 0.0, %v403
      %405 = vmatmul.bf16.gmra.mxu0 %v338
      %v406 = vpop.f32.mrf.mxu0
      %v407 = vadd.f32 0.0, %v406
      %v408 = vpop.f32.mrf.mxu0
      %v409 = vadd.f32 0.0, %v408
      %410 = vmatmul.bf16.gmra.mxu0 %v341
      %v411 = vpop.f32.mrf.mxu0
      %v412 = vadd.f32 0.0, %v411
      %v413 = vpop.f32.mrf.mxu0
      %v414 = vadd.f32 0.0, %v413
      %415 = vmatmul.bf16.gmra.mxu0 %v344
      %v416 = vpop.f32.mrf.mxu0
      %v417 = vadd.f32 0.0, %v416
      %v418 = vpop.f32.mrf.mxu0
      %v419 = vadd.f32 0.0, %v418
      %420 = vmatmul.bf16.gmra.mxu0 %v347
      %v421 = vpop.f32.mrf.mxu0
      %v422 = vadd.f32 0.0, %v421
      %v423 = vpop.f32.mrf.mxu0
      %v424 = vadd.f32 0.0, %v423
      %425 = vmatmul.bf16.gmra.mxu0 %v350
      %v426 = vpop.f32.mrf.mxu0
      %v427 = vadd.f32 0.0, %v426
      %v428 = vpop.f32.mrf.mxu0
      %v429 = vadd.f32 0.0, %v428
      %430 = vmatmul.bf16.gmra.mxu0 %v353
      %v431 = vpop.f32.mrf.mxu0
      %v432 = vadd.f32 0.0, %v431
      %v433 = vpop.f32.mrf.mxu0
      %v434 = vadd.f32 0.0, %v433
      %435 = vmatmul.bf16.gmra.mxu0 %v356
      %v436 = vpop.f32.mrf.mxu0
      %v437 = vadd.f32 0.0, %v436
      %v438 = vpop.f32.mrf.mxu0
      %v439 = vadd.f32 0.0, %v438
      %440 = vmatmul.bf16.gmra.mxu0 %v359
      %v441 = vpop.f32.mrf.mxu0
      %v442 = vadd.f32 0.0, %v441
      %v443 = vpop.f32.mrf.mxu0
      %v444 = vadd.f32 0.0, %v443
      %445 = vmatmul.bf16.gmra.mxu0 %v362
      %v446 = vpop.f32.mrf.mxu0
      %v447 = vadd.f32 0.0, %v446
      %v448 = vpop.f32.mrf.mxu0
      %v449 = vadd.f32 0.0, %v448
      %450 = vmatmul.bf16.gmra.mxu0 %v365
      %v451 = vpop.f32.mrf.mxu0
      %v452 = vadd.f32 0.0, %v451
      %v453 = vpop.f32.mrf.mxu0
      %v454 = vadd.f32 0.0, %v453
      %455 = vdwg.mxu0
      %v456 = vpack.c.bf16 %v377, %v377
      %v457 = vpack.c.bf16 %v379, %v379
      %v458 = vpack.c.bf16 %v382, %v382
      %v459 = vpack.c.bf16 %v384, %v384
      %v460 = vpack.c.bf16 %v387, %v387
      %v461 = vpack.c.bf16 %v389, %v389
      %v462 = vpack.c.bf16 %v392, %v392
      %v463 = vpack.c.bf16 %v394, %v394
      %v464 = vpack.c.bf16 %v397, %v397
      %v465 = vpack.c.bf16 %v399, %v399
      %v466 = vpack.c.bf16 %v402, %v402
      %v467 = vpack.c.bf16 %v404, %v404
      %v468 = vpack.c.bf16 %v407, %v407
      %v469 = vpack.c.bf16 %v409, %v409
      %v470 = vpack.c.bf16 %v412, %v412
      %v471 = vpack.c.bf16 %v414, %v414
      %v472 = vpack.c.bf16 %v417, %v417
      %v473 = vpack.c.bf16 %v419, %v419
      %v474 = vpack.c.bf16 %v422, %v422
      %v475 = vpack.c.bf16 %v424, %v424
      %v476 = vpack.c.bf16 %v427, %v427
      %v477 = vpack.c.bf16 %v429, %v429
      %v478 = vpack.c.bf16 %v432, %v432
      %v479 = vpack.c.bf16 %v434, %v434
      %v480 = vpack.c.bf16 %v437, %v437
      %v481 = vpack.c.bf16 %v439, %v439
      %v482 = vpack.c.bf16 %v442, %v442
      %v483 = vpack.c.bf16 %v444, %v444
      %v484 = vpack.c.bf16 %v447, %v447
      %v485 = vpack.c.bf16 %v449, %v449
      %v486 = vpack.c.bf16 %v452, %v452
      %v487 = vpack.c.bf16 %v454, %v454
      %488 = vst [vmem:[%s187] sm:$0xf] %v456
      %489 = vst [vmem:[%s187 + $0x4] sm:$0xf] %v457
      %490 = vst [vmem:[%s187 + $0x8] sm:$0xf] %v458
      %491 = vst [vmem:[%s187 + $0xc] sm:$0xf] %v459
      %492 = vst [vmem:[%s187 + $0x10] sm:$0xf] %v460
      %493 = vst [vmem:[%s187 + $0x14] sm:$0xf] %v461
      %494 = vst [vmem:[%s187 + $0x18] sm:$0xf] %v462
      %495 = vst [vmem:[%s187 + $0x1c] sm:$0xf] %v463
      %496 = vst [vmem:[%s187 + $0x20] sm:$0xf] %v464
      %497 = vst [vmem:[%s187 + $0x24] sm:$0xf] %v465
      %498 = vst [vmem:[%s187 + $0x28] sm:$0xf] %v466
      %499 = vst [vmem:[%s187 + $0x2c] sm:$0xf] %v467
      %500 = vst [vmem:[%s187 + $0x30] sm:$0xf] %v468
      %501 = vst [vmem:[%s187 + $0x34] sm:$0xf] %v469
      %502 = vst [vmem:[%s187 + $0x38] sm:$0xf] %v470
      %503 = vst [vmem:[%s187 + $0x3c] sm:$0xf] %v471
      %504 = vst [vmem:[%s187 + $0x40] sm:$0xf] %v472
      %505 = vst [vmem:[%s187 + $0x44] sm:$0xf] %v473
      %506 = vst [vmem:[%s187 + $0x48] sm:$0xf] %v474
      %507 = vst [vmem:[%s187 + $0x4c] sm:$0xf] %v475
      %508 = vst [vmem:[%s187 + $0x50] sm:$0xf] %v476
      %509 = vst [vmem:[%s187 + $0x54] sm:$0xf] %v477
      %510 = vst [vmem:[%s187 + $0x58] sm:$0xf] %v478
      %511 = vst [vmem:[%s187 + $0x5c] sm:$0xf] %v479
      %512 = vst [vmem:[%s187 + $0x60] sm:$0xf] %v480
      %513 = vst [vmem:[%s187 + $0x64] sm:$0xf] %v481
      %514 = vst [vmem:[%s187 + $0x68] sm:$0xf] %v482
      %515 = vst [vmem:[%s187 + $0x6c] sm:$0xf] %v483
      %516 = vst [vmem:[%s187 + $0x70] sm:$0xf] %v484
      %517 = vst [vmem:[%s187 + $0x74] sm:$0xf] %v485
      %518 = vst [vmem:[%s187 + $0x78] sm:$0xf] %v486
      %519 = vst [vmem:[%s187 + $0x7c] sm:$0xf] %v487
      %s520 = smul.u32 32, %s17
      %p521 = scmp.lt.s32.totalorder %s18, 2
      %s522 = scalar_select %p521, %s18, 2
      %p523 = scmp.lt.s32.totalorder %s520, 31
      %s524 = scalar_select %p523, %s520, 31
      %s525 = smul.addr %s522, 32
      %s526 = sadd.s32 %s524, %s525
      %s527 = smul.addr %s526, 4
      %s528 = scalar_lea.vmem %s2, %s527
      // Predicated region
      $region29: #{fwd.6} parent=27 // pred_check
        %p529 = pneg %p97
      $region30: #{fwd.6} parent=27 // pred_check_branch
        %531 = sbr.rel (%p529) target = $region32
      $region31: #{fwd.6} parent=27 // pred_region
        %s532 = smul.u32 32, %s17
      $region32: #{fwd.6} parent=27 // pred_fallthru
        _
    $region28: #{fwd.6} parent=5 // pred_fallthru
      _
    %p533 = scmp.le.s32.totalorder 2, %s8
    // Predicated region
    $region33: #{fwd.6} parent=5 // pred_check
      %p534 = pneg %p533
    $region34: #{fwd.6} parent=5 // pred_check_branch
      %536 = sbr.rel (%p534) target = $region36
    $region35: #{fwd.6} parent=5 // pred_region
      %s537 = ssub.s32 %s8, 2
      // Predicated region
      $region37: #{fwd.6} parent=35 // pred_check
        %p538 = pneg %p103
      $region38: #{fwd.6} parent=35 // pred_check_branch
        %540 = sbr.rel (%p538) target = $region40
      $region39: #{fwd.6} parent=35 // pred_region
        %s541 = smul.u32 32, %s19
        %p542 = scmp.lt.s32.totalorder %s20, 2
        %s543 = scalar_select %p542, %s20, 2
        %p544 = scmp.lt.s32.totalorder %s541, 31
        %s545 = scalar_select %p544, %s541, 31
        %s546 = smul.addr %s543, 32
        %s547 = sadd.s32 %s545, %s546
        %s548 = smul.addr %s547, 4
        %s549 = scalar_lea.vmem %s2, %s548
      $region40: #{fwd.6} parent=35 // pred_fallthru
        _
    $region36: #{fwd.6} parent=5 // pred_fallthru
      _
  $region6: #{fwd.6} parent=0 // loop_footer
    %s12 = sadd.s32 1, %s8
  $region7: #{fwd.6} parent=0 // loop_footer_branch
    %7 = sbr.rel target = $region3
  $region8: #{fwd.6} parent=0 // loop_exit
    _

// kernel: fwd.5
$region0: #{fwd.5}
  #allocation0 [shape = 'u32[]', space=smem, size = 0x4, offset = 0x4, fixed_abs, tag = 'smem constant byte address 0x4 - core index']
  #allocation1 [shape = 'u32[72,128]{1,0:T(1,128)}', space=vmem, size = 0x9000, scoped, tag = 'internal scratch']
  %s0 = inlined_call_operand.vmem [shape: bf16[3,256,256], index: 0, kind: input, shape index: {}]
  %s1 = inlined_call_operand.vmem [shape: bf16[3,256,128], index: 1, kind: input, shape index: {}]
  %s2 = inlined_call_operand.vmem [shape: f32[1,128], index: 2, kind: input, shape index: {}]
  %s3 = inlined_call_operand.vmem [shape: f32[256,128], index: 3, kind: output, shape index: {}]
  %s4 = sld [smem:[#allocation0]]
  $region53: #{fwd.5} parent=0
    _
  %s6 = ssub.s32 1, %s4
  %s7 = scalar_select 0, %s6, %s4
  loop: start=0, step=1, limit=5
  $region2: #{fwd.5} parent=0 // loop_pre_header
    _
  $region3: #{fwd.5} parent=0 // loop_header
    %s9 = sphi 0, %s13
    %p10 = scmp.ge.s32.totalorder %s9, 5
    %s16 = sphi 0, %s35
    %s17 = sphi 0, %s31
    %s18 = sphi 0, %s27
    %s19 = sphi 0, %s16
    %s20 = sphi 0, %s17
    %s21 = sphi 0, %s18
    %s22 = sphi 0, %s19
    %s23 = sphi 0, %s20
    %s24 = sphi 0, %s21
    %s42 = sphi 0, %s44
    %s45 = sphi 0, %s42
    %s46 = sphi 0, %s45
    %s62 = sphi 0, %s46
    %s70 = sphi 0, %s72
    %s73 = sphi 0, %s70
    %s74 = sphi 0, %s73
    %s90 = sphi 0, %s74
    %s94 = sphi 0, %s94
    %s96 = sphi 0, %s94
    %s97 = sphi 0, %s96
    %s111 = sphi 0, %s97
    %s117 = sphi 0, %s119
    %s120 = sphi 0, %s117
    %s121 = sphi 0, %s120
    %s137 = sphi 0, %s121
  $region4: #{fwd.5} parent=0 // loop_header_branch
    %12 = sbr.rel (%p10) target = $region8
  $region5: #{fwd.5} parent=0 // loop_body
    %s14 = ssub.s32 %s9, 1
    %s15 = ssub.s32 %s9, 2
    %s25 = sadd.s32 1, %s18
    %p26 = scmp.ge.s32.totalorder %s25, 1
    %s27 = scalar_select %p26, 0, %s25
    %s28 = sadd.s32 1, %s17
    %s29 = scalar_select %p26, %s28, %s17
    %p30 = scmp.ge.s32.totalorder %s29, 3
    %s31 = scalar_select %p30, 0, %s29
    %s32 = sadd.s32 1, %s16
    %s33 = scalar_select %p30, %s32, %s16
    %p34 = scmp.ge.s32.totalorder %s33, 1
    %s35 = scalar_select %p34, 0, %s33
    %s36 = ssub.s32 %s17, %s31
    %s37 = ssub.s32 %s16, %s35
    %s38 = sor.u32 %s36, %s37
    %s39 = ssub.s32 %s18, %s27
    %s40 = sor.u32 %s38, %s39
    %p41 = scmp.eq.s32.totalorder %s40, 0
    %s43 = sadd.s32 %s42, 1
    %s44 = scalar_select %p41, %s42, %s43
    %p47 = pneg %p41
    %p48 = scmp.eq.s32.totalorder %s9, 2
    %p49 = por %p47, %p48
    %p50 = scmp.ne.s32.totalorder %s42, %s45
    %p51 = scmp.eq.s32.totalorder %s9, 0
    %p52 = por %p50, %p51
    %p53 = scmp.ne.s32.totalorder %s42, %s45
    %p54 = scmp.eq.s32.totalorder %s14, 2
    %p55 = por %p53, %p54
    %p56 = scmp.ne.s32.totalorder %s45, %s46
    %p57 = scmp.eq.s32.totalorder %s14, 0
    %p58 = por %p56, %p57
    %p59 = scmp.ne.s32.totalorder %s45, %s46
    %p60 = scmp.eq.s32.totalorder %s15, 2
    %p61 = por %p59, %p60
    %p63 = scmp.ne.s32.totalorder %s46, %s62
    %p64 = scmp.eq.s32.totalorder %s15, 0
    %p65 = por %p63, %p64
    %s66 = ssub.s32 %s17, %s31
    %s67 = ssub.s32 %s18, %s27
    %s68 = sor.u32 %s66, %s67
    %p69 = scmp.eq.s32.totalorder %s68, 0
    %s71 = sadd.s32 %s70, 1
    %s72 = scalar_select %p69, %s70, %s71
    %p75 = pneg %p69
    %p76 = scmp.eq.s32.totalorder %s9, 2
    %p77 = por %p75, %p76
    %p78 = scmp.ne.s32.totalorder %s70, %s73
    %p79 = scmp.eq.s32.totalorder %s9, 0
    %p80 = por %p78, %p79
    %p81 = scmp.ne.s32.totalorder %s70, %s73
    %p82 = scmp.eq.s32.totalorder %s14, 2
    %p83 = por %p81, %p82
    %p84 = scmp.ne.s32.totalorder %s73, %s74
    %p85 = scmp.eq.s32.totalorder %s14, 0
    %p86 = por %p84, %p85
    %p87 = scmp.ne.s32.totalorder %s73, %s74
    %p88 = scmp.eq.s32.totalorder %s15, 2
    %p89 = por %p87, %p88
    %p91 = scmp.ne.s32.totalorder %s74, %s90
    %p92 = scmp.eq.s32.totalorder %s15, 0
    %p93 = por %p91, %p92
    %s95 = sadd.s32 %s94, 1
    %p98 = scmp.eq.s32.totalorder %s9, 2
    %p99 = scmp.ne.s32.totalorder %s94, %s96
    %p100 = scmp.eq.s32.totalorder %s9, 0
    %p101 = por %p99, %p100
    %p102 = scmp.ne.s32.totalorder %s94, %s96
    %p103 = scmp.eq.s32.totalorder %s14, 2
    %p104 = por %p102, %p103
    %p105 = scmp.ne.s32.totalorder %s96, %s97
    %p106 = scmp.eq.s32.totalorder %s14, 0
    %p107 = por %p105, %p106
    %p108 = scmp.ne.s32.totalorder %s96, %s97
    %p109 = scmp.eq.s32.totalorder %s15, 2
    %p110 = por %p108, %p109
    %p112 = scmp.ne.s32.totalorder %s97, %s111
    %p113 = scmp.eq.s32.totalorder %s15, 0
    %p114 = por %p112, %p113
    %s115 = ssub.s32 %s16, %s35
    %p116 = scmp.eq.s32.totalorder %s115, 0
    %s118 = sadd.s32 %s117, 1
    %s119 = scalar_select %p116, %s117, %s118
    %p122 = pneg %p116
    %p123 = scmp.eq.s32.totalorder %s9, 2
    %p124 = por %p122, %p123
    %p125 = scmp.ne.s32.totalorder %s117, %s120
    %p126 = scmp.eq.s32.totalorder %s9, 0
    %p127 = por %p125, %p126
    %p128 = scmp.ne.s32.totalorder %s117, %s120
    %p129 = scmp.eq.s32.totalorder %s14, 2
    %p130 = por %p128, %p129
    %p131 = scmp.ne.s32.totalorder %s120, %s121
    %p132 = scmp.eq.s32.totalorder %s14, 0
    %p133 = por %p131, %p132
    %p134 = scmp.ne.s32.totalorder %s120, %s121
    %p135 = scmp.eq.s32.totalorder %s15, 2
    %p136 = por %p134, %p135
    %p138 = scmp.ne.s32.totalorder %s121, %s137
    %p139 = scmp.eq.s32.totalorder %s15, 0
    %p140 = por %p138, %p139
    %p141 = scmp.le.s32.totalorder 1, %s9
    %p142 = scmp.lt.s32.totalorder %s9, 4
    %p143 = pnand %p141, %p142
    %p144 = pneg %p143
    // Predicated region
    $region9: #{fwd.5} parent=5 // pred_check
      _
    $region10: #{fwd.5} parent=5 // pred_check_branch
      %146 = sbr.rel (%p143) target = $region12
    $region11: #{fwd.5} parent=5 // pred_region
      %s147 = ssub.s32 %s9, 1
      // Predicated region
      $region13: #{fwd.5} parent=11 // pred_check
        %p148 = pneg %p107
      $region14: #{fwd.5} parent=11 // pred_check_branch
        %150 = sbr.rel (%p148) target = $region16
      $region15: #{fwd.5} parent=11 // pred_region
        _
      $region16: #{fwd.5} parent=11 // pred_fallthru
        _
    $region12: #{fwd.5} parent=5 // pred_fallthru
      _
    %p151 = scmp.lt.s32.totalorder %s9, 3
    // Predicated region
    $region17: #{fwd.5} parent=5 // pred_check
      %p152 = pneg %p151
    $region18: #{fwd.5} parent=5 // pred_check_branch
      %154 = sbr.rel (%p152) target = $region20
    $region19: #{fwd.5} parent=5 // pred_region
      // Predicated region
      $region21: #{fwd.5} parent=19 // pred_check
        %p155 = pneg %p52
      $region22: #{fwd.5} parent=19 // pred_check_branch
        %157 = sbr.rel (%p155) target = $region24
      $region23: #{fwd.5} parent=19 // pred_region
        %s158 = smul.u32 32, %s16
        %s159 = smul.u32 2, %s18
        %p160 = scmp.lt.s32.totalorder %s17, 2
        %s161 = scalar_select %p160, %s17, 2
        %p162 = scmp.lt.s32.totalorder %s158, 31
        %s163 = scalar_select %p162, %s158, 31
        %p164 = scmp.lt.s32.totalorder %s159, 1
        %s165 = scalar_select %p164, %s159, 1
        %s166 = smul.addr %s163, 2
        %s167 = sadd.s32 %s165, %s166
        %s168 = smul.addr %s161, 64
        %s169 = sadd.s32 %s167, %s168
        %s170 = smul.addr %s169, 4
        %s171 = scalar_lea.vmem %s0, %s170
        %s172 = smul.u32 32, %s16
        %s173 = smul.u32 2, %s18
      $region24: #{fwd.5} parent=19 // pred_fallthru
        _
      // Predicated region
      $region25: #{fwd.5} parent=19 // pred_check
        %p174 = pneg %p80
      $region26: #{fwd.5} parent=19 // pred_check_branch
        %176 = sbr.rel (%p174) target = $region28
      $region27: #{fwd.5} parent=19 // pred_region
        %s177 = smul.u32 32, %s18
        %p178 = scmp.lt.s32.totalorder %s17, 2
        %s179 = scalar_select %p178, %s17, 2
        %p180 = scmp.lt.s32.totalorder %s177, 31
        %s181 = scalar_select %p180, %s177, 31
        %s182 = smul.addr %s179, 32
        %s183 = sadd.s32 %s181, %s182
        %s184 = smul.addr %s183, 4
        %s185 = scalar_lea.vmem %s1, %s184
        %s186 = smul.u32 32, %s18
      $region28: #{fwd.5} parent=19 // pred_fallthru
        _
    $region20: #{fwd.5} parent=5 // pred_fallthru
      _
    %p187 = scmp.le.s32.totalorder 1, %s9
    %p188 = scmp.lt.s32.totalorder %s9, 4
    %p189 = pnand %p187, %p188
    %p190 = pneg %p189
    // Predicated region
    $region29: #{fwd.5} parent=5 // pred_check
      _
    $region30: #{fwd.5} parent=5 // pred_check_branch
      %192 = sbr.rel (%p189) target = $region32
    $region31: #{fwd.5} parent=5 // pred_region
      %s193 = ssub.s32 %s9, 1
      %s194 = smul.u32 32, %s19
      %s195 = smul.u32 2, %s21
      %p196 = scmp.lt.s32.totalorder %s20, 2
      %s197 = scalar_select %p196, %s20, 2
      %p198 = scmp.lt.s32.totalorder %s194, 31
      %s199 = scalar_select %p198, %s194, 31
      %p200 = scmp.lt.s32.totalorder %s195, 1
      %s201 = scalar_select %p200, %s195, 1
      %s202 = smul.addr %s199, 2
      %s203 = sadd.s32 %s201, %s202
      %s204 = smul.addr %s197, 64
      %s205 = sadd.s32 %s203, %s204
      %s206 = smul.addr %s205, 4
      %s207 = scalar_lea.vmem %s0, %s206
      %p208 = pneg %p58
      %p209 = pneg %p55
      %s210 = smul.u32 32, %s21
      %p211 = scmp.lt.s32.totalorder %s20, 2
      %s212 = scalar_select %p211, %s20, 2
      %p213 = scmp.lt.s32.totalorder %s210, 31
      %s214 = scalar_select %p213, %s210, 31
      %s215 = smul.addr %s212, 32
      %s216 = sadd.s32 %s214, %s215
      %s217 = smul.addr %s216, 4
      %s218 = scalar_lea.vmem %s1, %s217
      %p219 = pneg %p86
      %p220 = pneg %p83
      %p221 = pneg %p107
      %p222 = pneg %p104
      %p223 = pneg %p133
      %p224 = pneg %p130
      %s225 = smul.u32 32, %s19
      %p226 = scmp.lt.s32.totalorder %s225, 31
      %s227 = scalar_select %p226, %s225, 31
      %s228 = smul.addr %s227, 8
      %s229 = scalar_lea.vmem %s3, %s228
      %s230 = smul.u32 32, %s19
      %s231 = smul.u32 2, %s21
      %p232 = scmp.lt.s32.totalorder %s20, 2
      %s233 = scalar_select %p232, %s20, 2
      %p234 = scmp.lt.s32.totalorder %s230, 31
      %s235 = scalar_select %p234, %s230, 31
      %p236 = scmp.lt.s32.totalorder %s231, 1
      %s237 = scalar_select %p236, %s231, 1
      %s238 = smul.addr %s235, 2
      %s239 = sadd.s32 %s237, %s238
      %s240 = smul.addr %s233, 64
      %s241 = sadd.s32 %s239, %s240
      %s242 = smul.addr %s241, 4
      %s243 = scalar_lea.vmem %s0, %s242
      %s244 = smul.u32 32, %s19
      %s245 = smul.u32 2, %s21
      %s246 = smul.u32 32, %s21
      %p247 = scmp.lt.s32.totalorder %s20, 2
      %s248 = scalar_select %p247, %s20, 2
      %p249 = scmp.lt.s32.totalorder %s246, 31
      %s250 = scalar_select %p249, %s246, 31
      %s251 = smul.addr %s248, 32
      %s252 = sadd.s32 %s250, %s251
      %s253 = smul.addr %s252, 4
      %s254 = scalar_lea.vmem %s1, %s253
      %s255 = smul.u32 32, %s21
      %s256 = smul.u32 32, %s19
      %p257 = scmp.lt.s32.totalorder %s256, 31
      %s258 = scalar_select %p257, %s256, 31
      %s259 = smul.addr %s258, 8
      %s260 = scalar_lea.vmem %s3, %s259
      %s261 = smul.u32 32, %s19
      %p262 = scmp.eq.s32.totalorder %s20, 0
      %p263 = scmp.eq.s32.totalorder %s21, 0
      %p264 = pnand %p262, %p263
      %p265 = pneg %p264
      // Predicated region
      $region33: #{fwd.5} parent=31 // pred_check
        _
      $region34: #{fwd.5} parent=31 // pred_check_branch
        %267 = sbr.rel (%p264) target = $region36
      $region35: #{fwd.5} parent=31 // pred_region
        %268 = vst [vmem:[%s260] sm:$0xff] 0.0
        %269 = vst [vmem:[%s260 + $0x8] sm:$0xff] 0.0
        %270 = vst [vmem:[%s260 + $0x10] sm:$0xff] 0.0
        %271 = vst [vmem:[%s260 + $0x18] sm:$0xff] 0.0
        %272 = vst [vmem:[%s260 + $0x20] sm:$0xff] 0.0
        %273 = vst [vmem:[%s260 + $0x28] sm:$0xff] 0.0
        %274 = vst [vmem:[%s260 + $0x30] sm:$0xff] 0.0
        %275 = vst [vmem:[%s260 + $0x38] sm:$0xff] 0.0
        %276 = vst [vmem:[%s260 + $0x40] sm:$0xff] 0.0
        %277 = vst [vmem:[%s260 + $0x48] sm:$0xff] 0.0
        %278 = vst [vmem:[%s260 + $0x50] sm:$0xff] 0.0
        %279 = vst [vmem:[%s260 + $0x58] sm:$0xff] 0.0
        %280 = vst [vmem:[%s260 + $0x60] sm:$0xff] 0.0
        %281 = vst [vmem:[%s260 + $0x68] sm:$0xff] 0.0
        %282 = vst [vmem:[%s260 + $0x70] sm:$0xff] 0.0
        %283 = vst [vmem:[%s260 + $0x78] sm:$0xff] 0.0
        %284 = vst [vmem:[%s260 + $0x80] sm:$0xff] 0.0
        %285 = vst [vmem:[%s260 + $0x88] sm:$0xff] 0.0
        %286 = vst [vmem:[%s260 + $0x90] sm:$0xff] 0.0
        %287 = vst [vmem:[%s260 + $0x98] sm:$0xff] 0.0
        %288 = vst [vmem:[%s260 + $0xa0] sm:$0xff] 0.0
        %289 = vst [vmem:[%s260 + $0xa8] sm:$0xff] 0.0
        %290 = vst [vmem:[%s260 + $0xb0] sm:$0xff] 0.0
        %291 = vst [vmem:[%s260 + $0xb8] sm:$0xff] 0.0
        %292 = vst [vmem:[%s260 + $0xc0] sm:$0xff] 0.0
        %293 = vst [vmem:[%s260 + $0xc8] sm:$0xff] 0.0
        %294 = vst [vmem:[%s260 + $0xd0] sm:$0xff] 0.0
        %295 = vst [vmem:[%s260 + $0xd8] sm:$0xff] 0.0
        %296 = vst [vmem:[%s260 + $0xe0] sm:$0xff] 0.0
        %297 = vst [vmem:[%s260 + $0xe8] sm:$0xff] 0.0
        %298 = vst [vmem:[%s260 + $0xf0] sm:$0xff] 0.0
        %299 = vst [vmem:[%s260 + $0xf8] sm:$0xff] 0.0
      $region36: #{fwd.5} parent=31 // pred_fallthru
        _
      %v300 = vld [vmem:[%s260] sm:$0xff]
      %v301 = vld [vmem:[%s260 + $0x8] sm:$0xff]
      %v302 = vld [vmem:[%s260 + $0x10] sm:$0xff]
      %v303 = vld [vmem:[%s260 + $0x18] sm:$0xff]
      %v304 = vld [vmem:[%s260 + $0x20] sm:$0xff]
      %v305 = vld [vmem:[%s260 + $0x28] sm:$0xff]
      %v306 = vld [vmem:[%s260 + $0x30] sm:$0xff]
      %v307 = vld [vmem:[%s260 + $0x38] sm:$0xff]
      %v308 = vld [vmem:[%s260 + $0x40] sm:$0xff]
      %v309 = vld [vmem:[%s260 + $0x48] sm:$0xff]
      %v310 = vld [vmem:[%s260 + $0x50] sm:$0xff]
      %v311 = vld [vmem:[%s260 + $0x58] sm:$0xff]
      %v312 = vld [vmem:[%s260 + $0x60] sm:$0xff]
      %v313 = vld [vmem:[%s260 + $0x68] sm:$0xff]
      %v314 = vld [vmem:[%s260 + $0x70] sm:$0xff]
      %v315 = vld [vmem:[%s260 + $0x78] sm:$0xff]
      %v316 = vld [vmem:[%s260 + $0x80] sm:$0xff]
      %v317 = vld [vmem:[%s260 + $0x88] sm:$0xff]
      %v318 = vld [vmem:[%s260 + $0x90] sm:$0xff]
      %v319 = vld [vmem:[%s260 + $0x98] sm:$0xff]
      %v320 = vld [vmem:[%s260 + $0xa0] sm:$0xff]
      %v321 = vld [vmem:[%s260 + $0xa8] sm:$0xff]
      %v322 = vld [vmem:[%s260 + $0xb0] sm:$0xff]
      %v323 = vld [vmem:[%s260 + $0xb8] sm:$0xff]
      %v324 = vld [vmem:[%s260 + $0xc0] sm:$0xff]
      %v325 = vld [vmem:[%s260 + $0xc8] sm:$0xff]
      %v326 = vld [vmem:[%s260 + $0xd0] sm:$0xff]
      %v327 = vld [vmem:[%s260 + $0xd8] sm:$0xff]
      %v328 = vld [vmem:[%s260 + $0xe0] sm:$0xff]
      %v329 = vld [vmem:[%s260 + $0xe8] sm:$0xff]
      %v330 = vld [vmem:[%s260 + $0xf0] sm:$0xff]
      %v331 = vld [vmem:[%s260 + $0xf8] sm:$0xff]
      %v332 = vld [vmem:[%s243] sm:$0xff]
      %v333 = vld [vmem:[%s243 + $0x8] sm:$0xff]
      %v334 = vld [vmem:[%s243 + $0x10] sm:$0xff]
      %v335 = vld [vmem:[%s243 + $0x18] sm:$0xff]
      %v336 = vld [vmem:[%s243 + $0x20] sm:$0xff]
      %v337 = vld [vmem:[%s243 + $0x28] sm:$0xff]
      %v338 = vld [vmem:[%s243 + $0x30] sm:$0xff]
      %v339 = vld [vmem:[%s243 + $0x38] sm:$0xff]
      %v340 = vld [vmem:[%s243 + $0x40] sm:$0xff]
      %v341 = vld [vmem:[%s243 + $0x48] sm:$0xff]
      %v342 = vld [vmem:[%s243 + $0x50] sm:$0xff]
      %v343 = vld [vmem:[%s243 + $0x58] sm:$0xff]
      %v344 = vld [vmem:[%s243 + $0x60] sm:$0xff]
      %v345 = vld [vmem:[%s243 + $0x68] sm:$0xff]
      %v346 = vld [vmem:[%s243 + $0x70] sm:$0xff]
      %v347 = vld [vmem:[%s243 + $0x78] sm:$0xff]
      %v348 = vld [vmem:[%s243 + $0x80] sm:$0xff]
      %v349 = vld [vmem:[%s243 + $0x88] sm:$0xff]
      %v350 = vld [vmem:[%s243 + $0x90] sm:$0xff]
      %v351 = vld [vmem:[%s243 + $0x98] sm:$0xff]
      %v352 = vld [vmem:[%s243 + $0xa0] sm:$0xff]
      %v353 = vld [vmem:[%s243 + $0xa8] sm:$0xff]
      %v354 = vld [vmem:[%s243 + $0xb0] sm:$0xff]
      %v355 = vld [vmem:[%s243 + $0xb8] sm:$0xff]
      %v356 = vld [vmem:[%s243 + $0xc0] sm:$0xff]
      %v357 = vld [vmem:[%s243 + $0xc8] sm:$0xff]
      %v358 = vld [vmem:[%s243 + $0xd0] sm:$0xff]
      %v359 = vld [vmem:[%s243 + $0xd8] sm:$0xff]
      %v360 = vld [vmem:[%s243 + $0xe0] sm:$0xff]
      %v361 = vld [vmem:[%s243 + $0xe8] sm:$0xff]
      %v362 = vld [vmem:[%s243 + $0xf0] sm:$0xff]
      %v363 = vld [vmem:[%s243 + $0xf8] sm:$0xff]
      %v364 = vld [vmem:[%s254] sm:$0xf]
      %v365 = vld [vmem:[%s254 + $0x4] sm:$0xf]
      %v366 = vld [vmem:[%s254 + $0x8] sm:$0xf]
      %v367 = vld [vmem:[%s254 + $0xc] sm:$0xf]
      %v368 = vld [vmem:[%s254 + $0x10] sm:$0xf]
      %v369 = vld [vmem:[%s254 + $0x14] sm:$0xf]
      %v370 = vld [vmem:[%s254 + $0x18] sm:$0xf]
      %v371 = vld [vmem:[%s254 + $0x1c] sm:$0xf]
      %v372 = vld [vmem:[%s254 + $0x20] sm:$0xf]
      %v373 = vld [vmem:[%s254 + $0x24] sm:$0xf]
      %v374 = vld [vmem:[%s254 + $0x28] sm:$0xf]
      %v375 = vld [vmem:[%s254 + $0x2c] sm:$0xf]
      %v376 = vld [vmem:[%s254 + $0x30] sm:$0xf]
      %v377 = vld [vmem:[%s254 + $0x34] sm:$0xf]
      %v378 = vld [vmem:[%s254 + $0x38] sm:$0xf]
      %v379 = vld [vmem:[%s254 + $0x3c] sm:$0xf]
      %v380 = vld [vmem:[%s254 + $0x40] sm:$0xf]
      %v381 = vld [vmem:[%s254 + $0x44] sm:$0xf]
      %v382 = vld [vmem:[%s254 + $0x48] sm:$0xf]
      %v383 = vld [vmem:[%s254 + $0x4c] sm:$0xf]
      %v384 = vld [vmem:[%s254 + $0x50] sm:$0xf]
      %v385 = vld [vmem:[%s254 + $0x54] sm:$0xf]
      %v386 = vld [vmem:[%s254 + $0x58] sm:$0xf]
      %v387 = vld [vmem:[%s254 + $0x5c] sm:$0xf]
      %v388 = vld [vmem:[%s254 + $0x60] sm:$0xf]
      %v389 = vld [vmem:[%s254 + $0x64] sm:$0xf]
      %v390 = vld [vmem:[%s254 + $0x68] sm:$0xf]
      %v391 = vld [vmem:[%s254 + $0x6c] sm:$0xf]
      %v392 = vld [vmem:[%s254 + $0x70] sm:$0xf]
      %v393 = vld [vmem:[%s254 + $0x74] sm:$0xf]
      %v394 = vld [vmem:[%s254 + $0x78] sm:$0xf]
      %v395 = vld [vmem:[%s254 + $0x7c] sm:$0xf]
      %v428 = vunpack.c.l.b16 %v332
      %v429 = vunpack.c.h.b16 %v332
      %v430 = vunpack.c.l.b16 %v333
      %v431 = vunpack.c.h.b16 %v333
      %v432 = vunpack.c.l.b16 %v334
      %v433 = vunpack.c.h.b16 %v334
      %v434 = vunpack.c.l.b16 %v335
      %v435 = vunpack.c.h.b16 %v335
      %v436 = vunpack.c.l.b16 %v336
      %v437 = vunpack.c.h.b16 %v336
      %v438 = vunpack.c.l.b16 %v337
      %v439 = vunpack.c.h.b16 %v337
      %v440 = vunpack.c.l.b16 %v338
      %v441 = vunpack.c.h.b16 %v338
      %v442 = vunpack.c.l.b16 %v339
      %v443 = vunpack.c.h.b16 %v339
      %v444 = vunpack.c.l.b16 %v340
      %v445 = vunpack.c.h.b16 %v340
      %v446 = vunpack.c.l.b16 %v341
      %v447 = vunpack.c.h.b16 %v341
      %v448 = vunpack.c.l.b16 %v342
      %v449 = vunpack.c.h.b16 %v342
      %v450 = vunpack.c.l.b16 %v343
      %v451 = vunpack.c.h.b16 %v343
      %v452 = vunpack.c.l.b16 %v344
      %v453 = vunpack.c.h.b16 %v344
      %v454 = vunpack.c.l.b16 %v345
      %v455 = vunpack.c.h.b16 %v345
      %v456 = vunpack.c.l.b16 %v346
      %v457 = vunpack.c.h.b16 %v346
      %v458 = vunpack.c.l.b16 %v347
      %v459 = vunpack.c.h.b16 %v347
      %v460 = vunpack.c.l.b16 %v348
      %v461 = vunpack.c.h.b16 %v348
      %v462 = vunpack.c.l.b16 %v349
      %v463 = vunpack.c.h.b16 %v349
      %v464 = vunpack.c.l.b16 %v350
      %v465 = vunpack.c.h.b16 %v350
      %v466 = vunpack.c.l.b16 %v351
      %v467 = vunpack.c.h.b16 %v351
      %v468 = vunpack.c.l.b16 %v352
      %v469 = vunpack.c.h.b16 %v352
      %v470 = vunpack.c.l.b16 %v353
      %v471 = vunpack.c.h.b16 %v353
      %v472 = vunpack.c.l.b16 %v354
      %v473 = vunpack.c.h.b16 %v354
      %v474 = vunpack.c.l.b16 %v355
      %v475 = vunpack.c.h.b16 %v355
      %v476 = vunpack.c.l.b16 %v356
      %v477 = vunpack.c.h.b16 %v356
      %v478 = vunpack.c.l.b16 %v357
      %v479 = vunpack.c.h.b16 %v357
      %v480 = vunpack.c.l.b16 %v358
      %v481 = vunpack.c.h.b16 %v358
      %v482 = vunpack.c.l.b16 %v359
      %v483 = vunpack.c.h.b16 %v359
      %v484 = vunpack.c.l.b16 %v360
      %v485 = vunpack.c.h.b16 %v360
      %v486 = vunpack.c.l.b16 %v361
      %v487 = vunpack.c.h.b16 %v361
      %v488 = vunpack.c.l.b16 %v362
      %v489 = vunpack.c.h.b16 %v362
      %v490 = vunpack.c.l.b16 %v363
      %v491 = vunpack.c.h.b16 %v363
      %v492 = vpack.c.b16 %v430, %v428
      %v493 = vpack.c.b16 %v431, %v429
      %v494 = vpack.c.b16 %v434, %v432
      %v495 = vpack.c.b16 %v435, %v433
      %v496 = vpack.c.b16 %v438, %v436
      %v497 = vpack.c.b16 %v439, %v437
      %v498 = vpack.c.b16 %v442, %v440
      %v499 = vpack.c.b16 %v443, %v441
      %v500 = vpack.c.b16 %v446, %v444
      %v501 = vpack.c.b16 %v447, %v445
      %v502 = vpack.c.b16 %v450, %v448
      %v503 = vpack.c.b16 %v451, %v449
      %v504 = vpack.c.b16 %v454, %v452
      %v505 = vpack.c.b16 %v455, %v453
      %v506 = vpack.c.b16 %v458, %v456
      %v507 = vpack.c.b16 %v459, %v457
      %v508 = vpack.c.b16 %v462, %v460
      %v509 = vpack.c.b16 %v463, %v461
      %v510 = vpack.c.b16 %v466, %v464
      %v511 = vpack.c.b16 %v467, %v465
      %v512 = vpack.c.b16 %v470, %v468
      %v513 = vpack.c.b16 %v471, %v469
      %v514 = vpack.c.b16 %v474, %v472
      %v515 = vpack.c.b16 %v475, %v473
      %v516 = vpack.c.b16 %v478, %v476
      %v517 = vpack.c.b16 %v479, %v477
      %v518 = vpack.c.b16 %v482, %v480
      %v519 = vpack.c.b16 %v483, %v481
      %v520 = vpack.c.b16 %v486, %v484
      %v521 = vpack.c.b16 %v487, %v485
      %v522 = vpack.c.b16 %v490, %v488
      %v523 = vpack.c.b16 %v491, %v489
      %v588 = vunpack.c.l.b16 %v364
      %v589 = vunpack.c.l.b16 %v365
      %v590 = vunpack.c.l.b16 %v366
      %v591 = vunpack.c.l.b16 %v367
      %v592 = vunpack.c.l.b16 %v368
      %v593 = vunpack.c.l.b16 %v369
      %v594 = vunpack.c.l.b16 %v370
      %v595 = vunpack.c.l.b16 %v371
      %v596 = vunpack.c.l.b16 %v372
      %v597 = vunpack.c.l.b16 %v373
      %v598 = vunpack.c.l.b16 %v374
      %v599 = vunpack.c.l.b16 %v375
      %v600 = vunpack.c.l.b16 %v376
      %v601 = vunpack.c.l.b16 %v377
      %v602 = vunpack.c.l.b16 %v378
      %v603 = vunpack.c.l.b16 %v379
      %v604 = vunpack.c.l.b16 %v380
      %v605 = vunpack.c.l.b16 %v381
      %v606 = vunpack.c.l.b16 %v382
      %v607 = vunpack.c.l.b16 %v383
      %v608 = vunpack.c.l.b16 %v384
      %v609 = vunpack.c.l.b16 %v385
      %v610 = vunpack.c.l.b16 %v386
      %v611 = vunpack.c.l.b16 %v387
      %v612 = vunpack.c.l.b16 %v388
      %v613 = vunpack.c.l.b16 %v389
      %v614 = vunpack.c.l.b16 %v390
      %v615 = vunpack.c.l.b16 %v391
      %v616 = vunpack.c.l.b16 %v392
      %v617 = vunpack.c.l.b16 %v393
      %v618 = vunpack.c.l.b16 %v394
      %v619 = vunpack.c.l.b16 %v395
      %v620 = vpack.c.b16 %v589, %v588
      %v621 = vpack.c.b16 %v591, %v590
      %v622 = vpack.c.b16 %v593, %v592
      %v623 = vpack.c.b16 %v595, %v594
      %v624 = vpack.c.b16 %v597, %v596
      %v625 = vpack.c.b16 %v599, %v598
      %v626 = vpack.c.b16 %v601, %v600
      %v627 = vpack.c.b16 %v603, %v602
      %v628 = vpack.c.b16 %v605, %v604
      %v629 = vpack.c.b16 %v607, %v606
      %v630 = vpack.c.b16 %v609, %v608
      %v631 = vpack.c.b16 %v611, %v610
      %v632 = vpack.c.b16 %v613, %v612
      %v633 = vpack.c.b16 %v615, %v614
      %v634 = vpack.c.b16 %v617, %v616
      %v635 = vpack.c.b16 %v619, %v618
      %652 = vmatpush.bf16.msra.mxu0 %v627
      %653 = vmatpush.bf16.msra.mxu0 %v626
      %654 = vmatpush.bf16.msra.mxu0 %v625
      %655 = vmatpush.bf16.msra.mxu0 %v624
      %656 = vmatpush.bf16.msra.mxu0 %v623
      %657 = vmatpush.bf16.msra.mxu0 %v622
      %658 = vmatpush.bf16.msra.mxu0 %v621
      %659 = vmatpush.bf16.msra.mxu0 %v620
      %660 = vmatmul.bf16.gmra.mxu0 %v492
      %v661 = vpop.f32.mrf.mxu0
      %v662 = vadd.f32 0.0, %v661
      %v663 = vpop.f32.mrf.mxu0
      %v664 = vadd.f32 0.0, %v663
      %665 = vmatmul.bf16.gmra.mxu0 %v494
      %v666 = vpop.f32.mrf.mxu0
      %v667 = vadd.f32 0.0, %v666
      %v668 = vpop.f32.mrf.mxu0
      %v669 = vadd.f32 0.0, %v668
      %670 = vmatmul.bf16.gmra.mxu0 %v496
      %v671 = vpop.f32.mrf.mxu0
      %v672 = vadd.f32 0.0, %v671
      %v673 = vpop.f32.mrf.mxu0
      %v674 = vadd.f32 0.0, %v673
      %675 = vmatmul.bf16.gmra.mxu0 %v498
      %v676 = vpop.f32.mrf.mxu0
      %v677 = vadd.f32 0.0, %v676
      %v678 = vpop.f32.mrf.mxu0
      %v679 = vadd.f32 0.0, %v678
      %680 = vmatmul.bf16.gmra.mxu0 %v500
      %v681 = vpop.f32.mrf.mxu0
      %v682 = vadd.f32 0.0, %v681
      %v683 = vpop.f32.mrf.mxu0
      %v684 = vadd.f32 0.0, %v683
      %685 = vmatmul.bf16.gmra.mxu0 %v502
      %v686 = vpop.f32.mrf.mxu0
      %v687 = vadd.f32 0.0, %v686
      %v688 = vpop.f32.mrf.mxu0
      %v689 = vadd.f32 0.0, %v688
      %690 = vmatmul.bf16.gmra.mxu0 %v504
      %v691 = vpop.f32.mrf.mxu0
      %v692 = vadd.f32 0.0, %v691
      %v693 = vpop.f32.mrf.mxu0
      %v694 = vadd.f32 0.0, %v693
      %695 = vmatmul.bf16.gmra.mxu0 %v506
      %v696 = vpop.f32.mrf.mxu0
      %v697 = vadd.f32 0.0, %v696
      %v698 = vpop.f32.mrf.mxu0
      %v699 = vadd.f32 0.0, %v698
      %700 = vmatmul.bf16.gmra.mxu0 %v508
      %v701 = vpop.f32.mrf.mxu0
      %v702 = vadd.f32 0.0, %v701
      %v703 = vpop.f32.mrf.mxu0
      %v704 = vadd.f32 0.0, %v703
      %705 = vmatmul.bf16.gmra.mxu0 %v510
      %v706 = vpop.f32.mrf.mxu0
      %v707 = vadd.f32 0.0, %v706
      %v708 = vpop.f32.mrf.mxu0
      %v709 = vadd.f32 0.0, %v708
      %710 = vmatmul.bf16.gmra.mxu0 %v512
      %v711 = vpop.f32.mrf.mxu0
      %v712 = vadd.f32 0.0, %v711
      %v713 = vpop.f32.mrf.mxu0
      %v714 = vadd.f32 0.0, %v713
      %715 = vmatmul.bf16.gmra.mxu0 %v514
      %v716 = vpop.f32.mrf.mxu0
      %v717 = vadd.f32 0.0, %v716
      %v718 = vpop.f32.mrf.mxu0
      %v719 = vadd.f32 0.0, %v718
      %720 = vmatmul.bf16.gmra.mxu0 %v516
      %v721 = vpop.f32.mrf.mxu0
      %v722 = vadd.f32 0.0, %v721
      %v723 = vpop.f32.mrf.mxu0
      %v724 = vadd.f32 0.0, %v723
      %725 = vmatmul.bf16.gmra.mxu0 %v518
      %v726 = vpop.f32.mrf.mxu0
      %v727 = vadd.f32 0.0, %v726
      %v728 = vpop.f32.mrf.mxu0
      %v729 = vadd.f32 0.0, %v728
      %730 = vmatmul.bf16.gmra.mxu0 %v520
      %v731 = vpop.f32.mrf.mxu0
      %v732 = vadd.f32 0.0, %v731
      %v733 = vpop.f32.mrf.mxu0
      %v734 = vadd.f32 0.0, %v733
      %735 = vmatmul.bf16.gmra.mxu0 %v522
      %v736 = vpop.f32.mrf.mxu0
      %v737 = vadd.f32 0.0, %v736
      %v738 = vpop.f32.mrf.mxu0
      %v739 = vadd.f32 0.0, %v738
      %740 = vdwg.mxu0
      %741 = vmatpush.bf16.msra.mxu0 %v635
      %742 = vmatpush.bf16.msra.mxu0 %v634
      %743 = vmatpush.bf16.msra.mxu0 %v633
      %744 = vmatpush.bf16.msra.mxu0 %v632
      %745 = vmatpush.bf16.msra.mxu0 %v631
      %746 = vmatpush.bf16.msra.mxu0 %v630
      %747 = vmatpush.bf16.msra.mxu0 %v629
      %748 = vmatpush.bf16.msra.mxu0 %v628
      %749 = vmatmul.bf16.gmra.mxu0 %v493
      %v750 = vpop.f32.mrf.mxu0
      %v751 = vadd.f32 %v662, %v750
      %v752 = vpop.f32.mrf.mxu0
      %v753 = vadd.f32 %v664, %v752
      %754 = vmatmul.bf16.gmra.mxu0 %v495
      %v755 = vpop.f32.mrf.mxu0
      %v756 = vadd.f32 %v667, %v755
      %v757 = vpop.f32.mrf.mxu0
      %v758 = vadd.f32 %v669, %v757
      %759 = vmatmul.bf16.gmra.mxu0 %v497
      %v760 = vpop.f32.mrf.mxu0
      %v761 = vadd.f32 %v672, %v760
      %v762 = vpop.f32.mrf.mxu0
      %v763 = vadd.f32 %v674, %v762
      %764 = vmatmul.bf16.gmra.mxu0 %v499
      %v765 = vpop.f32.mrf.mxu0
      %v766 = vadd.f32 %v677, %v765
      %v767 = vpop.f32.mrf.mxu0
      %v768 = vadd.f32 %v679, %v767
      %769 = vmatmul.bf16.gmra.mxu0 %v501
      %v770 = vpop.f32.mrf.mxu0
      %v771 = vadd.f32 %v682, %v770
      %v772 = vpop.f32.mrf.mxu0
      %v773 = vadd.f32 %v684, %v772
      %774 = vmatmul.bf16.gmra.mxu0 %v503
      %v775 = vpop.f32.mrf.mxu0
      %v776 = vadd.f32 %v687, %v775
      %v777 = vpop.f32.mrf.mxu0
      %v778 = vadd.f32 %v689, %v777
      %779 = vmatmul.bf16.gmra.mxu0 %v505
      %v780 = vpop.f32.mrf.mxu0
      %v781 = vadd.f32 %v692, %v780
      %v782 = vpop.f32.mrf.mxu0
      %v783 = vadd.f32 %v694, %v782
      %784 = vmatmul.bf16.gmra.mxu0 %v507
      %v785 = vpop.f32.mrf.mxu0
      %v786 = vadd.f32 %v697, %v785
      %v787 = vpop.f32.mrf.mxu0
      %v788 = vadd.f32 %v699, %v787
      %789 = vmatmul.bf16.gmra.mxu0 %v509
      %v790 = vpop.f32.mrf.mxu0
      %v791 = vadd.f32 %v702, %v790
      %v792 = vpop.f32.mrf.mxu0
      %v793 = vadd.f32 %v704, %v792
      %794 = vmatmul.bf16.gmra.mxu0 %v511
      %v795 = vpop.f32.mrf.mxu0
      %v796 = vadd.f32 %v707, %v795
      %v797 = vpop.f32.mrf.mxu0
      %v798 = vadd.f32 %v709, %v797
      %799 = vmatmul.bf16.gmra.mxu0 %v513
      %v800 = vpop.f32.mrf.mxu0
      %v801 = vadd.f32 %v712, %v800
      %v802 = vpop.f32.mrf.mxu0
      %v803 = vadd.f32 %v714, %v802
      %804 = vmatmul.bf16.gmra.mxu0 %v515
      %v805 = vpop.f32.mrf.mxu0
      %v806 = vadd.f32 %v717, %v805
      %v807 = vpop.f32.mrf.mxu0
      %v808 = vadd.f32 %v719, %v807
      %809 = vmatmul.bf16.gmra.mxu0 %v517
      %v810 = vpop.f32.mrf.mxu0
      %v811 = vadd.f32 %v722, %v810
      %v812 = vpop.f32.mrf.mxu0
      %v813 = vadd.f32 %v724, %v812
      %814 = vmatmul.bf16.gmra.mxu0 %v519
      %v815 = vpop.f32.mrf.mxu0
      %v816 = vadd.f32 %v727, %v815
      %v817 = vpop.f32.mrf.mxu0
      %v818 = vadd.f32 %v729, %v817
      %819 = vmatmul.bf16.gmra.mxu0 %v521
      %v820 = vpop.f32.mrf.mxu0
      %v821 = vadd.f32 %v732, %v820
      %v822 = vpop.f32.mrf.mxu0
      %v823 = vadd.f32 %v734, %v822
      %824 = vmatmul.bf16.gmra.mxu0 %v523
      %v825 = vpop.f32.mrf.mxu0
      %v826 = vadd.f32 %v737, %v825
      %v827 = vpop.f32.mrf.mxu0
      %v828 = vadd.f32 %v739, %v827
      %829 = vdwg.mxu0
      %v830 = vadd.f32 %v300, %v751
      %v831 = vadd.f32 %v301, %v753
      %v832 = vadd.f32 %v302, %v756
      %v833 = vadd.f32 %v303, %v758
      %v834 = vadd.f32 %v304, %v761
      %v835 = vadd.f32 %v305, %v763
      %v836 = vadd.f32 %v306, %v766
      %v837 = vadd.f32 %v307, %v768
      %v838 = vadd.f32 %v308, %v771
      %v839 = vadd.f32 %v309, %v773
      %v840 = vadd.f32 %v310, %v776
      %v841 = vadd.f32 %v311, %v778
      %v842 = vadd.f32 %v312, %v781
      %v843 = vadd.f32 %v313, %v783
      %v844 = vadd.f32 %v314, %v786
      %v845 = vadd.f32 %v315, %v788
      %v846 = vadd.f32 %v316, %v791
      %v847 = vadd.f32 %v317, %v793
      %v848 = vadd.f32 %v318, %v796
      %v849 = vadd.f32 %v319, %v798
      %v850 = vadd.f32 %v320, %v801
      %v851 = vadd.f32 %v321, %v803
      %v852 = vadd.f32 %v322, %v806
      %v853 = vadd.f32 %v323, %v808
      %v854 = vadd.f32 %v324, %v811
      %v855 = vadd.f32 %v325, %v813
      %v856 = vadd.f32 %v326, %v816
      %v857 = vadd.f32 %v327, %v818
      %v858 = vadd.f32 %v328, %v821
      %v859 = vadd.f32 %v329, %v823
      %v860 = vadd.f32 %v330, %v826
      %v861 = vadd.f32 %v331, %v828
      %862 = vst [vmem:[%s260] sm:$0xff] %v830
      %863 = vst [vmem:[%s260 + $0x8] sm:$0xff] %v831
      %864 = vst [vmem:[%s260 + $0x10] sm:$0xff] %v832
      %865 = vst [vmem:[%s260 + $0x18] sm:$0xff] %v833
      %866 = vst [vmem:[%s260 + $0x20] sm:$0xff] %v834
      %867 = vst [vmem:[%s260 + $0x28] sm:$0xff] %v835
      %868 = vst [vmem:[%s260 + $0x30] sm:$0xff] %v836
      %869 = vst [vmem:[%s260 + $0x38] sm:$0xff] %v837
      %870 = vst [vmem:[%s260 + $0x40] sm:$0xff] %v838
      %871 = vst [vmem:[%s260 + $0x48] sm:$0xff] %v839
      %872 = vst [vmem:[%s260 + $0x50] sm:$0xff] %v840
      %873 = vst [vmem:[%s260 + $0x58] sm:$0xff] %v841
      %874 = vst [vmem:[%s260 + $0x60] sm:$0xff] %v842
      %875 = vst [vmem:[%s260 + $0x68] sm:$0xff] %v843
      %876 = vst [vmem:[%s260 + $0x70] sm:$0xff] %v844
      %877 = vst [vmem:[%s260 + $0x78] sm:$0xff] %v845
      %878 = vst [vmem:[%s260 + $0x80] sm:$0xff] %v846
      %879 = vst [vmem:[%s260 + $0x88] sm:$0xff] %v847
      %880 = vst [vmem:[%s260 + $0x90] sm:$0xff] %v848
      %881 = vst [vmem:[%s260 + $0x98] sm:$0xff] %v849
      %882 = vst [vmem:[%s260 + $0xa0] sm:$0xff] %v850
      %883 = vst [vmem:[%s260 + $0xa8] sm:$0xff] %v851
      %884 = vst [vmem:[%s260 + $0xb0] sm:$0xff] %v852
      %885 = vst [vmem:[%s260 + $0xb8] sm:$0xff] %v853
      %886 = vst [vmem:[%s260 + $0xc0] sm:$0xff] %v854
      %887 = vst [vmem:[%s260 + $0xc8] sm:$0xff] %v855
      %888 = vst [vmem:[%s260 + $0xd0] sm:$0xff] %v856
      %889 = vst [vmem:[%s260 + $0xd8] sm:$0xff] %v857
      %890 = vst [vmem:[%s260 + $0xe0] sm:$0xff] %v858
      %891 = vst [vmem:[%s260 + $0xe8] sm:$0xff] %v859
      %892 = vst [vmem:[%s260 + $0xf0] sm:$0xff] %v860
      %893 = vst [vmem:[%s260 + $0xf8] sm:$0xff] %v861
      %p894 = scmp.eq.s32.totalorder %s20, 2
      %p895 = pnand %p894, %p263
      %p896 = pneg %p895
      // Predicated region
      $region37: #{fwd.5} parent=31 // pred_check
        _
      $region38: #{fwd.5} parent=31 // pred_check_branch
        %898 = sbr.rel (%p895) target = $region40
      $region39: #{fwd.5} parent=31 // pred_region
        %v899 = vld [vmem:[%s260] sm:$0xff]
        %v900 = vld [vmem:[%s260 + $0x8] sm:$0xff]
        %v901 = vld [vmem:[%s260 + $0x10] sm:$0xff]
        %v902 = vld [vmem:[%s260 + $0x18] sm:$0xff]
        %v903 = vld [vmem:[%s260 + $0x20] sm:$0xff]
        %v904 = vld [vmem:[%s260 + $0x28] sm:$0xff]
        %v905 = vld [vmem:[%s260 + $0x30] sm:$0xff]
        %v906 = vld [vmem:[%s260 + $0x38] sm:$0xff]
        %v907 = vld [vmem:[%s260 + $0x40] sm:$0xff]
        %v908 = vld [vmem:[%s260 + $0x48] sm:$0xff]
        %v909 = vld [vmem:[%s260 + $0x50] sm:$0xff]
        %v910 = vld [vmem:[%s260 + $0x58] sm:$0xff]
        %v911 = vld [vmem:[%s260 + $0x60] sm:$0xff]
        %v912 = vld [vmem:[%s260 + $0x68] sm:$0xff]
        %v913 = vld [vmem:[%s260 + $0x70] sm:$0xff]
        %v914 = vld [vmem:[%s260 + $0x78] sm:$0xff]
        %v915 = vld [vmem:[%s260 + $0x80] sm:$0xff]
        %v916 = vld [vmem:[%s260 + $0x88] sm:$0xff]
        %v917 = vld [vmem:[%s260 + $0x90] sm:$0xff]
        %v918 = vld [vmem:[%s260 + $0x98] sm:$0xff]
        %v919 = vld [vmem:[%s260 + $0xa0] sm:$0xff]
        %v920 = vld [vmem:[%s260 + $0xa8] sm:$0xff]
        %v921 = vld [vmem:[%s260 + $0xb0] sm:$0xff]
        %v922 = vld [vmem:[%s260 + $0xb8] sm:$0xff]
        %v923 = vld [vmem:[%s260 + $0xc0] sm:$0xff]
        %v924 = vld [vmem:[%s260 + $0xc8] sm:$0xff]
        %v925 = vld [vmem:[%s260 + $0xd0] sm:$0xff]
        %v926 = vld [vmem:[%s260 + $0xd8] sm:$0xff]
        %v927 = vld [vmem:[%s260 + $0xe0] sm:$0xff]
        %v928 = vld [vmem:[%s260 + $0xe8] sm:$0xff]
        %v929 = vld [vmem:[%s260 + $0xf0] sm:$0xff]
        %v930 = vld [vmem:[%s260 + $0xf8] sm:$0xff]
        %v931 = vld [vmem:[%s2] sm:$0x1]
        %v933 = vperm.slane %v931, 0
        %v935 = vadd.f32 %v899, %v933
        %v936 = vadd.f32 %v900, %v933
        %v937 = vadd.f32 %v901, %v933
        %v938 = vadd.f32 %v902, %v933
        %v939 = vadd.f32 %v903, %v933
        %v940 = vadd.f32 %v904, %v933
        %v941 = vadd.f32 %v905, %v933
        %v942 = vadd.f32 %v906, %v933
        %v943 = vadd.f32 %v907, %v933
        %v944 = vadd.f32 %v908, %v933
        %v945 = vadd.f32 %v909, %v933
        %v946 = vadd.f32 %v910, %v933
        %v947 = vadd.f32 %v911, %v933
        %v948 = vadd.f32 %v912, %v933
        %v949 = vadd.f32 %v913, %v933
        %v950 = vadd.f32 %v914, %v933
        %v951 = vadd.f32 %v915, %v933
        %v952 = vadd.f32 %v916, %v933
        %v953 = vadd.f32 %v917, %v933
        %v954 = vadd.f32 %v918, %v933
        %v955 = vadd.f32 %v919, %v933
        %v956 = vadd.f32 %v920, %v933
        %v957 = vadd.f32 %v921, %v933
        %v958 = vadd.f32 %v922, %v933
        %v959 = vadd.f32 %v923, %v933
        %v960 = vadd.f32 %v924, %v933
        %v961 = vadd.f32 %v925, %v933
        %v962 = vadd.f32 %v926, %v933
        %v963 = vadd.f32 %v927, %v933
        %v964 = vadd.f32 %v928, %v933
        %v965 = vadd.f32 %v929, %v933
        %v966 = vadd.f32 %v930, %v933
        %v967 = vmax.f32 %v935, 0.0
        %v968 = vmax.f32 %v936, 0.0
        %v969 = vmax.f32 %v937, 0.0
        %v970 = vmax.f32 %v938, 0.0
        %v971 = vmax.f32 %v939, 0.0
        %v972 = vmax.f32 %v940, 0.0
        %v973 = vmax.f32 %v941, 0.0
        %v974 = vmax.f32 %v942, 0.0
        %v975 = vmax.f32 %v943, 0.0
        %v976 = vmax.f32 %v944, 0.0
        %v977 = vmax.f32 %v945, 0.0
        %v978 = vmax.f32 %v946, 0.0
        %v979 = vmax.f32 %v947, 0.0
        %v980 = vmax.f32 %v948, 0.0
        %v981 = vmax.f32 %v949, 0.0
        %v982 = vmax.f32 %v950, 0.0
        %v983 = vmax.f32 %v951, 0.0
        %v984 = vmax.f32 %v952, 0.0
        %v985 = vmax.f32 %v953, 0.0
        %v986 = vmax.f32 %v954, 0.0
        %v987 = vmax.f32 %v955, 0.0
        %v988 = vmax.f32 %v956, 0.0
        %v989 = vmax.f32 %v957, 0.0
        %v990 = vmax.f32 %v958, 0.0
        %v991 = vmax.f32 %v959, 0.0
        %v992 = vmax.f32 %v960, 0.0
        %v993 = vmax.f32 %v961, 0.0
        %v994 = vmax.f32 %v962, 0.0
        %v995 = vmax.f32 %v963, 0.0
        %v996 = vmax.f32 %v964, 0.0
        %v997 = vmax.f32 %v965, 0.0
        %v998 = vmax.f32 %v966, 0.0
        %999 = vst [vmem:[%s260] sm:$0xff] %v967
        %1000 = vst [vmem:[%s260 + $0x8] sm:$0xff] %v968
        %1001 = vst [vmem:[%s260 + $0x10] sm:$0xff] %v969
        %1002 = vst [vmem:[%s260 + $0x18] sm:$0xff] %v970
        %1003 = vst [vmem:[%s260 + $0x20] sm:$0xff] %v971
        %1004 = vst [vmem:[%s260 + $0x28] sm:$0xff] %v972
        %1005 = vst [vmem:[%s260 + $0x30] sm:$0xff] %v973
        %1006 = vst [vmem:[%s260 + $0x38] sm:$0xff] %v974
        %1007 = vst [vmem:[%s260 + $0x40] sm:$0xff] %v975
        %1008 = vst [vmem:[%s260 + $0x48] sm:$0xff] %v976
        %1009 = vst [vmem:[%s260 + $0x50] sm:$0xff] %v977
        %1010 = vst [vmem:[%s260 + $0x58] sm:$0xff] %v978
        %1011 = vst [vmem:[%s260 + $0x60] sm:$0xff] %v979
        %1012 = vst [vmem:[%s260 + $0x68] sm:$0xff] %v980
        %1013 = vst [vmem:[%s260 + $0x70] sm:$0xff] %v981
        %1014 = vst [vmem:[%s260 + $0x78] sm:$0xff] %v982
        %1015 = vst [vmem:[%s260 + $0x80] sm:$0xff] %v983
        %1016 = vst [vmem:[%s260 + $0x88] sm:$0xff] %v984
        %1017 = vst [vmem:[%s260 + $0x90] sm:$0xff] %v985
        %1018 = vst [vmem:[%s260 + $0x98] sm:$0xff] %v986
        %1019 = vst [vmem:[%s260 + $0xa0] sm:$0xff] %v987
        %1020 = vst [vmem:[%s260 + $0xa8] sm:$0xff] %v988
        %1021 = vst [vmem:[%s260 + $0xb0] sm:$0xff] %v989
        %1022 = vst [vmem:[%s260 + $0xb8] sm:$0xff] %v990
        %1023 = vst [vmem:[%s260 + $0xc0] sm:$0xff] %v991
        %1024 = vst [vmem:[%s260 + $0xc8] sm:$0xff] %v992
        %1025 = vst [vmem:[%s260 + $0xd0] sm:$0xff] %v993
        %1026 = vst [vmem:[%s260 + $0xd8] sm:$0xff] %v994
        %1027 = vst [vmem:[%s260 + $0xe0] sm:$0xff] %v995
        %1028 = vst [vmem:[%s260 + $0xe8] sm:$0xff] %v996
        %1029 = vst [vmem:[%s260 + $0xf0] sm:$0xff] %v997
        %1030 = vst [vmem:[%s260 + $0xf8] sm:$0xff] %v998
      $region40: #{fwd.5} parent=31 // pred_fallthru
        _
      %s1031 = smul.u32 32, %s19
      %p1032 = scmp.lt.s32.totalorder %s1031, 31
      %s1033 = scalar_select %p1032, %s1031, 31
      %s1034 = smul.addr %s1033, 8
      %s1035 = scalar_lea.vmem %s3, %s1034
      // Predicated region
      $region41: #{fwd.5} parent=31 // pred_check
        %p1036 = pneg %p130
      $region42: #{fwd.5} parent=31 // pred_check_branch
        %1038 = sbr.rel (%p1036) target = $region44
      $region43: #{fwd.5} parent=31 // pred_region
        %s1039 = smul.u32 32, %s19
      $region44: #{fwd.5} parent=31 // pred_fallthru
        _
      // Predicated region
      $region45: #{fwd.5} parent=31 // pred_check
        %p1040 = pneg %p130
      $region46: #{fwd.5} parent=31 // pred_check_branch
        %1042 = sbr.rel (%p1040) target = $region48
      $region47: #{fwd.5} parent=31 // pred_region
        %s1043 = smul.u32 32, %s19
        %p1044 = scmp.lt.s32.totalorder %s1043, 31
        %s1045 = scalar_select %p1044, %s1043, 31
        %s1046 = smul.addr %s1045, 8
        %s1047 = scalar_lea.vmem %s3, %s1046
      $region48: #{fwd.5} parent=31 // pred_fallthru
        _
    $region32: #{fwd.5} parent=5 // pred_fallthru
      _
    %p1048 = scmp.le.s32.totalorder 2, %s9
    // Predicated region
    $region49: #{fwd.5} parent=5 // pred_check
      %p1049 = pneg %p1048
    $region50: #{fwd.5} parent=5 // pred_check_branch
      %1051 = sbr.rel (%p1049) target = $region52
    $region51: #{fwd.5} parent=5 // pred_region
      %s1052 = ssub.s32 %s9, 2
    $region52: #{fwd.5} parent=5 // pred_fallthru
      _
  $region6: #{fwd.5} parent=0 // loop_footer
    %s13 = sadd.s32 1, %s9
  $region7: #{fwd.5} parent=0 // loop_footer_branch
    %8 = sbr.rel target = $region3
  $region8: #{fwd.5} parent=0 // loop_exit
    _

// kernel: fwd.7
$region0: #{fwd.7}
  #allocation0 [shape = 'u32[]', space=smem, size = 0x4, offset = 0x4, fixed_abs, tag = 'smem constant byte address 0x4 - core index']
  #allocation1 [shape = 'u32[72,128]{1,0:T(1,128)}', space=vmem, size = 0x9000, scoped, tag = 'internal scratch']
  %s0 = inlined_call_operand.vmem [shape: bf16[3,256,256], index: 0, kind: input, shape index: {}]
  %s1 = inlined_call_operand.vmem [shape: bf16[3,256,128], index: 1, kind: input, shape index: {}]
  %s2 = inlined_call_operand.vmem [shape: f32[1,128], index: 2, kind: input, shape index: {}]
  %s3 = inlined_call_operand.vmem [shape: f32[256,128], index: 3, kind: output, shape index: {}]
  %s4 = sld [smem:[#allocation0]]
  $region53: #{fwd.7} parent=0
    _
  %s6 = ssub.s32 1, %s4
  %s7 = scalar_select 0, %s6, %s4
  loop: start=0, step=1, limit=5
  $region2: #{fwd.7} parent=0 // loop_pre_header
    _
  $region3: #{fwd.7} parent=0 // loop_header
    %s9 = sphi 0, %s13
    %p10 = scmp.ge.s32.totalorder %s9, 5
    %s16 = sphi 0, %s35
    %s17 = sphi 0, %s31
    %s18 = sphi 0, %s27
    %s19 = sphi 0, %s16
    %s20 = sphi 0, %s17
    %s21 = sphi 0, %s18
    %s22 = sphi 0, %s19
    %s23 = sphi 0, %s20
    %s24 = sphi 0, %s21
    %s42 = sphi 0, %s44
    %s45 = sphi 0, %s42
    %s46 = sphi 0, %s45
    %s62 = sphi 0, %s46
    %s70 = sphi 0, %s72
    %s73 = sphi 0, %s70
    %s74 = sphi 0, %s73
    %s90 = sphi 0, %s74
    %s94 = sphi 0, %s94
    %s96 = sphi 0, %s94
    %s97 = sphi 0, %s96
    %s111 = sphi 0, %s97
    %s117 = sphi 0, %s119
    %s120 = sphi 0, %s117
    %s121 = sphi 0, %s120
    %s137 = sphi 0, %s121
  $region4: #{fwd.7} parent=0 // loop_header_branch
    %12 = sbr.rel (%p10) target = $region8
  $region5: #{fwd.7} parent=0 // loop_body
    %s14 = ssub.s32 %s9, 1
    %s15 = ssub.s32 %s9, 2
    %s25 = sadd.s32 1, %s18
    %p26 = scmp.ge.s32.totalorder %s25, 1
    %s27 = scalar_select %p26, 0, %s25
    %s28 = sadd.s32 1, %s17
    %s29 = scalar_select %p26, %s28, %s17
    %p30 = scmp.ge.s32.totalorder %s29, 3
    %s31 = scalar_select %p30, 0, %s29
    %s32 = sadd.s32 1, %s16
    %s33 = scalar_select %p30, %s32, %s16
    %p34 = scmp.ge.s32.totalorder %s33, 1
    %s35 = scalar_select %p34, 0, %s33
    %s36 = ssub.s32 %s17, %s31
    %s37 = ssub.s32 %s16, %s35
    %s38 = sor.u32 %s36, %s37
    %s39 = ssub.s32 %s18, %s27
    %s40 = sor.u32 %s38, %s39
    %p41 = scmp.eq.s32.totalorder %s40, 0
    %s43 = sadd.s32 %s42, 1
    %s44 = scalar_select %p41, %s42, %s43
    %p47 = pneg %p41
    %p48 = scmp.eq.s32.totalorder %s9, 2
    %p49 = por %p47, %p48
    %p50 = scmp.ne.s32.totalorder %s42, %s45
    %p51 = scmp.eq.s32.totalorder %s9, 0
    %p52 = por %p50, %p51
    %p53 = scmp.ne.s32.totalorder %s42, %s45
    %p54 = scmp.eq.s32.totalorder %s14, 2
    %p55 = por %p53, %p54
    %p56 = scmp.ne.s32.totalorder %s45, %s46
    %p57 = scmp.eq.s32.totalorder %s14, 0
    %p58 = por %p56, %p57
    %p59 = scmp.ne.s32.totalorder %s45, %s46
    %p60 = scmp.eq.s32.totalorder %s15, 2
    %p61 = por %p59, %p60
    %p63 = scmp.ne.s32.totalorder %s46, %s62
    %p64 = scmp.eq.s32.totalorder %s15, 0
    %p65 = por %p63, %p64
    %s66 = ssub.s32 %s17, %s31
    %s67 = ssub.s32 %s18, %s27
    %s68 = sor.u32 %s66, %s67
    %p69 = scmp.eq.s32.totalorder %s68, 0
    %s71 = sadd.s32 %s70, 1
    %s72 = scalar_select %p69, %s70, %s71
    %p75 = pneg %p69
    %p76 = scmp.eq.s32.totalorder %s9, 2
    %p77 = por %p75, %p76
    %p78 = scmp.ne.s32.totalorder %s70, %s73
    %p79 = scmp.eq.s32.totalorder %s9, 0
    %p80 = por %p78, %p79
    %p81 = scmp.ne.s32.totalorder %s70, %s73
    %p82 = scmp.eq.s32.totalorder %s14, 2
    %p83 = por %p81, %p82
    %p84 = scmp.ne.s32.totalorder %s73, %s74
    %p85 = scmp.eq.s32.totalorder %s14, 0
    %p86 = por %p84, %p85
    %p87 = scmp.ne.s32.totalorder %s73, %s74
    %p88 = scmp.eq.s32.totalorder %s15, 2
    %p89 = por %p87, %p88
    %p91 = scmp.ne.s32.totalorder %s74, %s90
    %p92 = scmp.eq.s32.totalorder %s15, 0
    %p93 = por %p91, %p92
    %s95 = sadd.s32 %s94, 1
    %p98 = scmp.eq.s32.totalorder %s9, 2
    %p99 = scmp.ne.s32.totalorder %s94, %s96
    %p100 = scmp.eq.s32.totalorder %s9, 0
    %p101 = por %p99, %p100
    %p102 = scmp.ne.s32.totalorder %s94, %s96
    %p103 = scmp.eq.s32.totalorder %s14, 2
    %p104 = por %p102, %p103
    %p105 = scmp.ne.s32.totalorder %s96, %s97
    %p106 = scmp.eq.s32.totalorder %s14, 0
    %p107 = por %p105, %p106
    %p108 = scmp.ne.s32.totalorder %s96, %s97
    %p109 = scmp.eq.s32.totalorder %s15, 2
    %p110 = por %p108, %p109
    %p112 = scmp.ne.s32.totalorder %s97, %s111
    %p113 = scmp.eq.s32.totalorder %s15, 0
    %p114 = por %p112, %p113
    %s115 = ssub.s32 %s16, %s35
    %p116 = scmp.eq.s32.totalorder %s115, 0
    %s118 = sadd.s32 %s117, 1
    %s119 = scalar_select %p116, %s117, %s118
    %p122 = pneg %p116
    %p123 = scmp.eq.s32.totalorder %s9, 2
    %p124 = por %p122, %p123
    %p125 = scmp.ne.s32.totalorder %s117, %s120
    %p126 = scmp.eq.s32.totalorder %s9, 0
    %p127 = por %p125, %p126
    %p128 = scmp.ne.s32.totalorder %s117, %s120
    %p129 = scmp.eq.s32.totalorder %s14, 2
    %p130 = por %p128, %p129
    %p131 = scmp.ne.s32.totalorder %s120, %s121
    %p132 = scmp.eq.s32.totalorder %s14, 0
    %p133 = por %p131, %p132
    %p134 = scmp.ne.s32.totalorder %s120, %s121
    %p135 = scmp.eq.s32.totalorder %s15, 2
    %p136 = por %p134, %p135
    %p138 = scmp.ne.s32.totalorder %s121, %s137
    %p139 = scmp.eq.s32.totalorder %s15, 0
    %p140 = por %p138, %p139
    %p141 = scmp.le.s32.totalorder 1, %s9
    %p142 = scmp.lt.s32.totalorder %s9, 4
    %p143 = pnand %p141, %p142
    %p144 = pneg %p143
    // Predicated region
    $region9: #{fwd.7} parent=5 // pred_check
      _
    $region10: #{fwd.7} parent=5 // pred_check_branch
      %146 = sbr.rel (%p143) target = $region12
    $region11: #{fwd.7} parent=5 // pred_region
      %s147 = ssub.s32 %s9, 1
      // Predicated region
      $region13: #{fwd.7} parent=11 // pred_check
        %p148 = pneg %p107
      $region14: #{fwd.7} parent=11 // pred_check_branch
        %150 = sbr.rel (%p148) target = $region16
      $region15: #{fwd.7} parent=11 // pred_region
        _
      $region16: #{fwd.7} parent=11 // pred_fallthru
        _
    $region12: #{fwd.7} parent=5 // pred_fallthru
      _
    %p151 = scmp.lt.s32.totalorder %s9, 3
    // Predicated region
    $region17: #{fwd.7} parent=5 // pred_check
      %p152 = pneg %p151
    $region18: #{fwd.7} parent=5 // pred_check_branch
      %154 = sbr.rel (%p152) target = $region20
    $region19: #{fwd.7} parent=5 // pred_region
      // Predicated region
      $region21: #{fwd.7} parent=19 // pred_check
        %p155 = pneg %p52
      $region22: #{fwd.7} parent=19 // pred_check_branch
        %157 = sbr.rel (%p155) target = $region24
      $region23: #{fwd.7} parent=19 // pred_region
        %s158 = smul.u32 32, %s16
        %s159 = smul.u32 2, %s18
        %p160 = scmp.lt.s32.totalorder %s17, 2
        %s161 = scalar_select %p160, %s17, 2
        %p162 = scmp.lt.s32.totalorder %s158, 31
        %s163 = scalar_select %p162, %s158, 31
        %p164 = scmp.lt.s32.totalorder %s159, 1
        %s165 = scalar_select %p164, %s159, 1
        %s166 = smul.addr %s163, 2
        %s167 = sadd.s32 %s165, %s166
        %s168 = smul.addr %s161, 64
        %s169 = sadd.s32 %s167, %s168
        %s170 = smul.addr %s169, 4
        %s171 = scalar_lea.vmem %s0, %s170
        %s172 = smul.u32 32, %s16
        %s173 = smul.u32 2, %s18
      $region24: #{fwd.7} parent=19 // pred_fallthru
        _
      // Predicated region
      $region25: #{fwd.7} parent=19 // pred_check
        %p174 = pneg %p80
      $region26: #{fwd.7} parent=19 // pred_check_branch
        %176 = sbr.rel (%p174) target = $region28
      $region27: #{fwd.7} parent=19 // pred_region
        %s177 = smul.u32 32, %s18
        %p178 = scmp.lt.s32.totalorder %s17, 2
        %s179 = scalar_select %p178, %s17, 2
        %p180 = scmp.lt.s32.totalorder %s177, 31
        %s181 = scalar_select %p180, %s177, 31
        %s182 = smul.addr %s179, 32
        %s183 = sadd.s32 %s181, %s182
        %s184 = smul.addr %s183, 4
        %s185 = scalar_lea.vmem %s1, %s184
        %s186 = smul.u32 32, %s18
      $region28: #{fwd.7} parent=19 // pred_fallthru
        _
    $region20: #{fwd.7} parent=5 // pred_fallthru
      _
    %p187 = scmp.le.s32.totalorder 1, %s9
    %p188 = scmp.lt.s32.totalorder %s9, 4
    %p189 = pnand %p187, %p188
    %p190 = pneg %p189
    // Predicated region
    $region29: #{fwd.7} parent=5 // pred_check
      _
    $region30: #{fwd.7} parent=5 // pred_check_branch
      %192 = sbr.rel (%p189) target = $region32
    $region31: #{fwd.7} parent=5 // pred_region
      %s193 = ssub.s32 %s9, 1
      %s194 = smul.u32 32, %s19
      %s195 = smul.u32 2, %s21
      %p196 = scmp.lt.s32.totalorder %s20, 2
      %s197 = scalar_select %p196, %s20, 2
      %p198 = scmp.lt.s32.totalorder %s194, 31
      %s199 = scalar_select %p198, %s194, 31
      %p200 = scmp.lt.s32.totalorder %s195, 1
      %s201 = scalar_select %p200, %s195, 1
      %s202 = smul.addr %s199, 2
      %s203 = sadd.s32 %s201, %s202
      %s204 = smul.addr %s197, 64
      %s205 = sadd.s32 %s203, %s204
      %s206 = smul.addr %s205, 4
      %s207 = scalar_lea.vmem %s0, %s206
      %p208 = pneg %p58
      %p209 = pneg %p55
      %s210 = smul.u32 32, %s21
      %p211 = scmp.lt.s32.totalorder %s20, 2
      %s212 = scalar_select %p211, %s20, 2
      %p213 = scmp.lt.s32.totalorder %s210, 31
      %s214 = scalar_select %p213, %s210, 31
      %s215 = smul.addr %s212, 32
      %s216 = sadd.s32 %s214, %s215
      %s217 = smul.addr %s216, 4
      %s218 = scalar_lea.vmem %s1, %s217
      %p219 = pneg %p86
      %p220 = pneg %p83
      %p221 = pneg %p107
      %p222 = pneg %p104
      %p223 = pneg %p133
      %p224 = pneg %p130
      %s225 = smul.u32 32, %s19
      %p226 = scmp.lt.s32.totalorder %s225, 31
      %s227 = scalar_select %p226, %s225, 31
      %s228 = smul.addr %s227, 8
      %s229 = scalar_lea.vmem %s3, %s228
      %s230 = smul.u32 32, %s19
      %s231 = smul.u32 2, %s21
      %p232 = scmp.lt.s32.totalorder %s20, 2
      %s233 = scalar_select %p232, %s20, 2
      %p234 = scmp.lt.s32.totalorder %s230, 31
      %s235 = scalar_select %p234, %s230, 31
      %p236 = scmp.lt.s32.totalorder %s231, 1
      %s237 = scalar_select %p236, %s231, 1
      %s238 = smul.addr %s235, 2
      %s239 = sadd.s32 %s237, %s238
      %s240 = smul.addr %s233, 64
      %s241 = sadd.s32 %s239, %s240
      %s242 = smul.addr %s241, 4
      %s243 = scalar_lea.vmem %s0, %s242
      %s244 = smul.u32 32, %s19
      %s245 = smul.u32 2, %s21
      %s246 = smul.u32 32, %s21
      %p247 = scmp.lt.s32.totalorder %s20, 2
      %s248 = scalar_select %p247, %s20, 2
      %p249 = scmp.lt.s32.totalorder %s246, 31
      %s250 = scalar_select %p249, %s246, 31
      %s251 = smul.addr %s248, 32
      %s252 = sadd.s32 %s250, %s251
      %s253 = smul.addr %s252, 4
      %s254 = scalar_lea.vmem %s1, %s253
      %s255 = smul.u32 32, %s21
      %s256 = smul.u32 32, %s19
      %p257 = scmp.lt.s32.totalorder %s256, 31
      %s258 = scalar_select %p257, %s256, 31
      %s259 = smul.addr %s258, 8
      %s260 = scalar_lea.vmem %s3, %s259
      %s261 = smul.u32 32, %s19
      %p262 = scmp.eq.s32.totalorder %s20, 0
      %p263 = scmp.eq.s32.totalorder %s21, 0
      %p264 = pnand %p262, %p263
      %p265 = pneg %p264
      // Predicated region
      $region33: #{fwd.7} parent=31 // pred_check
        _
      $region34: #{fwd.7} parent=31 // pred_check_branch
        %267 = sbr.rel (%p264) target = $region36
      $region35: #{fwd.7} parent=31 // pred_region
        %268 = vst [vmem:[%s260] sm:$0xff] 0.0
        %269 = vst [vmem:[%s260 + $0x8] sm:$0xff] 0.0
        %270 = vst [vmem:[%s260 + $0x10] sm:$0xff] 0.0
        %271 = vst [vmem:[%s260 + $0x18] sm:$0xff] 0.0
        %272 = vst [vmem:[%s260 + $0x20] sm:$0xff] 0.0
        %273 = vst [vmem:[%s260 + $0x28] sm:$0xff] 0.0
        %274 = vst [vmem:[%s260 + $0x30] sm:$0xff] 0.0
        %275 = vst [vmem:[%s260 + $0x38] sm:$0xff] 0.0
        %276 = vst [vmem:[%s260 + $0x40] sm:$0xff] 0.0
        %277 = vst [vmem:[%s260 + $0x48] sm:$0xff] 0.0
        %278 = vst [vmem:[%s260 + $0x50] sm:$0xff] 0.0
        %279 = vst [vmem:[%s260 + $0x58] sm:$0xff] 0.0
        %280 = vst [vmem:[%s260 + $0x60] sm:$0xff] 0.0
        %281 = vst [vmem:[%s260 + $0x68] sm:$0xff] 0.0
        %282 = vst [vmem:[%s260 + $0x70] sm:$0xff] 0.0
        %283 = vst [vmem:[%s260 + $0x78] sm:$0xff] 0.0
        %284 = vst [vmem:[%s260 + $0x80] sm:$0xff] 0.0
        %285 = vst [vmem:[%s260 + $0x88] sm:$0xff] 0.0
        %286 = vst [vmem:[%s260 + $0x90] sm:$0xff] 0.0
        %287 = vst [vmem:[%s260 + $0x98] sm:$0xff] 0.0
        %288 = vst [vmem:[%s260 + $0xa0] sm:$0xff] 0.0
        %289 = vst [vmem:[%s260 + $0xa8] sm:$0xff] 0.0
        %290 = vst [vmem:[%s260 + $0xb0] sm:$0xff] 0.0
        %291 = vst [vmem:[%s260 + $0xb8] sm:$0xff] 0.0
        %292 = vst [vmem:[%s260 + $0xc0] sm:$0xff] 0.0
        %293 = vst [vmem:[%s260 + $0xc8] sm:$0xff] 0.0
        %294 = vst [vmem:[%s260 + $0xd0] sm:$0xff] 0.0
        %295 = vst [vmem:[%s260 + $0xd8] sm:$0xff] 0.0
        %296 = vst [vmem:[%s260 + $0xe0] sm:$0xff] 0.0
        %297 = vst [vmem:[%s260 + $0xe8] sm:$0xff] 0.0
        %298 = vst [vmem:[%s260 + $0xf0] sm:$0xff] 0.0
        %299 = vst [vmem:[%s260 + $0xf8] sm:$0xff] 0.0
      $region36: #{fwd.7} parent=31 // pred_fallthru
        _
      %v300 = vld [vmem:[%s260] sm:$0xff]
      %v301 = vld [vmem:[%s260 + $0x8] sm:$0xff]
      %v302 = vld [vmem:[%s260 + $0x10] sm:$0xff]
      %v303 = vld [vmem:[%s260 + $0x18] sm:$0xff]
      %v304 = vld [vmem:[%s260 + $0x20] sm:$0xff]
      %v305 = vld [vmem:[%s260 + $0x28] sm:$0xff]
      %v306 = vld [vmem:[%s260 + $0x30] sm:$0xff]
      %v307 = vld [vmem:[%s260 + $0x38] sm:$0xff]
      %v308 = vld [vmem:[%s260 + $0x40] sm:$0xff]
      %v309 = vld [vmem:[%s260 + $0x48] sm:$0xff]
      %v310 = vld [vmem:[%s260 + $0x50] sm:$0xff]
      %v311 = vld [vmem:[%s260 + $0x58] sm:$0xff]
      %v312 = vld [vmem:[%s260 + $0x60] sm:$0xff]
      %v313 = vld [vmem:[%s260 + $0x68] sm:$0xff]
      %v314 = vld [vmem:[%s260 + $0x70] sm:$0xff]
      %v315 = vld [vmem:[%s260 + $0x78] sm:$0xff]
      %v316 = vld [vmem:[%s260 + $0x80] sm:$0xff]
      %v317 = vld [vmem:[%s260 + $0x88] sm:$0xff]
      %v318 = vld [vmem:[%s260 + $0x90] sm:$0xff]
      %v319 = vld [vmem:[%s260 + $0x98] sm:$0xff]
      %v320 = vld [vmem:[%s260 + $0xa0] sm:$0xff]
      %v321 = vld [vmem:[%s260 + $0xa8] sm:$0xff]
      %v322 = vld [vmem:[%s260 + $0xb0] sm:$0xff]
      %v323 = vld [vmem:[%s260 + $0xb8] sm:$0xff]
      %v324 = vld [vmem:[%s260 + $0xc0] sm:$0xff]
      %v325 = vld [vmem:[%s260 + $0xc8] sm:$0xff]
      %v326 = vld [vmem:[%s260 + $0xd0] sm:$0xff]
      %v327 = vld [vmem:[%s260 + $0xd8] sm:$0xff]
      %v328 = vld [vmem:[%s260 + $0xe0] sm:$0xff]
      %v329 = vld [vmem:[%s260 + $0xe8] sm:$0xff]
      %v330 = vld [vmem:[%s260 + $0xf0] sm:$0xff]
      %v331 = vld [vmem:[%s260 + $0xf8] sm:$0xff]
      %v332 = vld [vmem:[%s243] sm:$0xff]
      %v333 = vld [vmem:[%s243 + $0x8] sm:$0xff]
      %v334 = vld [vmem:[%s243 + $0x10] sm:$0xff]
      %v335 = vld [vmem:[%s243 + $0x18] sm:$0xff]
      %v336 = vld [vmem:[%s243 + $0x20] sm:$0xff]
      %v337 = vld [vmem:[%s243 + $0x28] sm:$0xff]
      %v338 = vld [vmem:[%s243 + $0x30] sm:$0xff]
      %v339 = vld [vmem:[%s243 + $0x38] sm:$0xff]
      %v340 = vld [vmem:[%s243 + $0x40] sm:$0xff]
      %v341 = vld [vmem:[%s243 + $0x48] sm:$0xff]
      %v342 = vld [vmem:[%s243 + $0x50] sm:$0xff]
      %v343 = vld [vmem:[%s243 + $0x58] sm:$0xff]
      %v344 = vld [vmem:[%s243 + $0x60] sm:$0xff]
      %v345 = vld [vmem:[%s243 + $0x68] sm:$0xff]
      %v346 = vld [vmem:[%s243 + $0x70] sm:$0xff]
      %v347 = vld [vmem:[%s243 + $0x78] sm:$0xff]
      %v348 = vld [vmem:[%s243 + $0x80] sm:$0xff]
      %v349 = vld [vmem:[%s243 + $0x88] sm:$0xff]
      %v350 = vld [vmem:[%s243 + $0x90] sm:$0xff]
      %v351 = vld [vmem:[%s243 + $0x98] sm:$0xff]
      %v352 = vld [vmem:[%s243 + $0xa0] sm:$0xff]
      %v353 = vld [vmem:[%s243 + $0xa8] sm:$0xff]
      %v354 = vld [vmem:[%s243 + $0xb0] sm:$0xff]
      %v355 = vld [vmem:[%s243 + $0xb8] sm:$0xff]
      %v356 = vld [vmem:[%s243 + $0xc0] sm:$0xff]
      %v357 = vld [vmem:[%s243 + $0xc8] sm:$0xff]
      %v358 = vld [vmem:[%s243 + $0xd0] sm:$0xff]
      %v359 = vld [vmem:[%s243 + $0xd8] sm:$0xff]
      %v360 = vld [vmem:[%s243 + $0xe0] sm:$0xff]
      %v361 = vld [vmem:[%s243 + $0xe8] sm:$0xff]
      %v362 = vld [vmem:[%s243 + $0xf0] sm:$0xff]
      %v363 = vld [vmem:[%s243 + $0xf8] sm:$0xff]
      %v364 = vld [vmem:[%s254] sm:$0xf]
      %v365 = vld [vmem:[%s254 + $0x4] sm:$0xf]
      %v366 = vld [vmem:[%s254 + $0x8] sm:$0xf]
      %v367 = vld [vmem:[%s254 + $0xc] sm:$0xf]
      %v368 = vld [vmem:[%s254 + $0x10] sm:$0xf]
      %v369 = vld [vmem:[%s254 + $0x14] sm:$0xf]
      %v370 = vld [vmem:[%s254 + $0x18] sm:$0xf]
      %v371 = vld [vmem:[%s254 + $0x1c] sm:$0xf]
      %v372 = vld [vmem:[%s254 + $0x20] sm:$0xf]
      %v373 = vld [vmem:[%s254 + $0x24] sm:$0xf]
      %v374 = vld [vmem:[%s254 + $0x28] sm:$0xf]
      %v375 = vld [vmem:[%s254 + $0x2c] sm:$0xf]
      %v376 = vld [vmem:[%s254 + $0x30] sm:$0xf]
      %v377 = vld [vmem:[%s254 + $0x34] sm:$0xf]
      %v378 = vld [vmem:[%s254 + $0x38] sm:$0xf]
      %v379 = vld [vmem:[%s254 + $0x3c] sm:$0xf]
      %v380 = vld [vmem:[%s254 + $0x40] sm:$0xf]
      %v381 = vld [vmem:[%s254 + $0x44] sm:$0xf]
      %v382 = vld [vmem:[%s254 + $0x48] sm:$0xf]
      %v383 = vld [vmem:[%s254 + $0x4c] sm:$0xf]
      %v384 = vld [vmem:[%s254 + $0x50] sm:$0xf]
      %v385 = vld [vmem:[%s254 + $0x54] sm:$0xf]
      %v386 = vld [vmem:[%s254 + $0x58] sm:$0xf]
      %v387 = vld [vmem:[%s254 + $0x5c] sm:$0xf]
      %v388 = vld [vmem:[%s254 + $0x60] sm:$0xf]
      %v389 = vld [vmem:[%s254 + $0x64] sm:$0xf]
      %v390 = vld [vmem:[%s254 + $0x68] sm:$0xf]
      %v391 = vld [vmem:[%s254 + $0x6c] sm:$0xf]
      %v392 = vld [vmem:[%s254 + $0x70] sm:$0xf]
      %v393 = vld [vmem:[%s254 + $0x74] sm:$0xf]
      %v394 = vld [vmem:[%s254 + $0x78] sm:$0xf]
      %v395 = vld [vmem:[%s254 + $0x7c] sm:$0xf]
      %v428 = vunpack.c.l.b16 %v332
      %v429 = vunpack.c.h.b16 %v332
      %v430 = vunpack.c.l.b16 %v333
      %v431 = vunpack.c.h.b16 %v333
      %v432 = vunpack.c.l.b16 %v334
      %v433 = vunpack.c.h.b16 %v334
      %v434 = vunpack.c.l.b16 %v335
      %v435 = vunpack.c.h.b16 %v335
      %v436 = vunpack.c.l.b16 %v336
      %v437 = vunpack.c.h.b16 %v336
      %v438 = vunpack.c.l.b16 %v337
      %v439 = vunpack.c.h.b16 %v337
      %v440 = vunpack.c.l.b16 %v338
      %v441 = vunpack.c.h.b16 %v338
      %v442 = vunpack.c.l.b16 %v339
      %v443 = vunpack.c.h.b16 %v339
      %v444 = vunpack.c.l.b16 %v340
      %v445 = vunpack.c.h.b16 %v340
      %v446 = vunpack.c.l.b16 %v341
      %v447 = vunpack.c.h.b16 %v341
      %v448 = vunpack.c.l.b16 %v342
      %v449 = vunpack.c.h.b16 %v342
      %v450 = vunpack.c.l.b16 %v343
      %v451 = vunpack.c.h.b16 %v343
      %v452 = vunpack.c.l.b16 %v344
      %v453 = vunpack.c.h.b16 %v344
      %v454 = vunpack.c.l.b16 %v345
      %v455 = vunpack.c.h.b16 %v345
      %v456 = vunpack.c.l.b16 %v346
      %v457 = vunpack.c.h.b16 %v346
      %v458 = vunpack.c.l.b16 %v347
      %v459 = vunpack.c.h.b16 %v347
      %v460 = vunpack.c.l.b16 %v348
      %v461 = vunpack.c.h.b16 %v348
      %v462 = vunpack.c.l.b16 %v349
      %v463 = vunpack.c.h.b16 %v349
      %v464 = vunpack.c.l.b16 %v350
      %v465 = vunpack.c.h.b16 %v350
      %v466 = vunpack.c.l.b16 %v351
      %v467 = vunpack.c.h.b16 %v351
      %v468 = vunpack.c.l.b16 %v352
      %v469 = vunpack.c.h.b16 %v352
      %v470 = vunpack.c.l.b16 %v353
      %v471 = vunpack.c.h.b16 %v353
      %v472 = vunpack.c.l.b16 %v354
      %v473 = vunpack.c.h.b16 %v354
      %v474 = vunpack.c.l.b16 %v355
      %v475 = vunpack.c.h.b16 %v355
      %v476 = vunpack.c.l.b16 %v356
      %v477 = vunpack.c.h.b16 %v356
      %v478 = vunpack.c.l.b16 %v357
      %v479 = vunpack.c.h.b16 %v357
      %v480 = vunpack.c.l.b16 %v358
      %v481 = vunpack.c.h.b16 %v358
      %v482 = vunpack.c.l.b16 %v359
      %v483 = vunpack.c.h.b16 %v359
      %v484 = vunpack.c.l.b16 %v360
      %v485 = vunpack.c.h.b16 %v360
      %v486 = vunpack.c.l.b16 %v361
      %v487 = vunpack.c.h.b16 %v361
      %v488 = vunpack.c.l.b16 %v362
      %v489 = vunpack.c.h.b16 %v362
      %v490 = vunpack.c.l.b16 %v363
      %v491 = vunpack.c.h.b16 %v363
      %v492 = vpack.c.b16 %v430, %v428
      %v493 = vpack.c.b16 %v431, %v429
      %v494 = vpack.c.b16 %v434, %v432
      %v495 = vpack.c.b16 %v435, %v433
      %v496 = vpack.c.b16 %v438, %v436
      %v497 = vpack.c.b16 %v439, %v437
      %v498 = vpack.c.b16 %v442, %v440
      %v499 = vpack.c.b16 %v443, %v441
      %v500 = vpack.c.b16 %v446, %v444
      %v501 = vpack.c.b16 %v447, %v445
      %v502 = vpack.c.b16 %v450, %v448
      %v503 = vpack.c.b16 %v451, %v449
      %v504 = vpack.c.b16 %v454, %v452
      %v505 = vpack.c.b16 %v455, %v453
      %v506 = vpack.c.b16 %v458, %v456
      %v507 = vpack.c.b16 %v459, %v457
      %v508 = vpack.c.b16 %v462, %v460
      %v509 = vpack.c.b16 %v463, %v461
      %v510 = vpack.c.b16 %v466, %v464
      %v511 = vpack.c.b16 %v467, %v465
      %v512 = vpack.c.b16 %v470, %v468
      %v513 = vpack.c.b16 %v471, %v469
      %v514 = vpack.c.b16 %v474, %v472
      %v515 = vpack.c.b16 %v475, %v473
      %v516 = vpack.c.b16 %v478, %v476
      %v517 = vpack.c.b16 %v479, %v477
      %v518 = vpack.c.b16 %v482, %v480
      %v519 = vpack.c.b16 %v483, %v481
      %v520 = vpack.c.b16 %v486, %v484
      %v521 = vpack.c.b16 %v487, %v485
      %v522 = vpack.c.b16 %v490, %v488
      %v523 = vpack.c.b16 %v491, %v489
      %v588 = vunpack.c.l.b16 %v364
      %v589 = vunpack.c.l.b16 %v365
      %v590 = vunpack.c.l.b16 %v366
      %v591 = vunpack.c.l.b16 %v367
      %v592 = vunpack.c.l.b16 %v368
      %v593 = vunpack.c.l.b16 %v369
      %v594 = vunpack.c.l.b16 %v370
      %v595 = vunpack.c.l.b16 %v371
      %v596 = vunpack.c.l.b16 %v372
      %v597 = vunpack.c.l.b16 %v373
      %v598 = vunpack.c.l.b16 %v374
      %v599 = vunpack.c.l.b16 %v375
      %v600 = vunpack.c.l.b16 %v376
      %v601 = vunpack.c.l.b16 %v377
      %v602 = vunpack.c.l.b16 %v378
      %v603 = vunpack.c.l.b16 %v379
      %v604 = vunpack.c.l.b16 %v380
      %v605 = vunpack.c.l.b16 %v381
      %v606 = vunpack.c.l.b16 %v382
      %v607 = vunpack.c.l.b16 %v383
      %v608 = vunpack.c.l.b16 %v384
      %v609 = vunpack.c.l.b16 %v385
      %v610 = vunpack.c.l.b16 %v386
      %v611 = vunpack.c.l.b16 %v387
      %v612 = vunpack.c.l.b16 %v388
      %v613 = vunpack.c.l.b16 %v389
      %v614 = vunpack.c.l.b16 %v390
      %v615 = vunpack.c.l.b16 %v391
      %v616 = vunpack.c.l.b16 %v392
      %v617 = vunpack.c.l.b16 %v393
      %v618 = vunpack.c.l.b16 %v394
      %v619 = vunpack.c.l.b16 %v395
      %v620 = vpack.c.b16 %v589, %v588
      %v621 = vpack.c.b16 %v591, %v590
      %v622 = vpack.c.b16 %v593, %v592
      %v623 = vpack.c.b16 %v595, %v594
      %v624 = vpack.c.b16 %v597, %v596
      %v625 = vpack.c.b16 %v599, %v598
      %v626 = vpack.c.b16 %v601, %v600
      %v627 = vpack.c.b16 %v603, %v602
      %v628 = vpack.c.b16 %v605, %v604
      %v629 = vpack.c.b16 %v607, %v606
      %v630 = vpack.c.b16 %v609, %v608
      %v631 = vpack.c.b16 %v611, %v610
      %v632 = vpack.c.b16 %v613, %v612
      %v633 = vpack.c.b16 %v615, %v614
      %v634 = vpack.c.b16 %v617, %v616
      %v635 = vpack.c.b16 %v619, %v618
      %652 = vmatpush.bf16.msra.mxu0 %v627
      %653 = vmatpush.bf16.msra.mxu0 %v626
      %654 = vmatpush.bf16.msra.mxu0 %v625
      %655 = vmatpush.bf16.msra.mxu0 %v624
      %656 = vmatpush.bf16.msra.mxu0 %v623
      %657 = vmatpush.bf16.msra.mxu0 %v622
      %658 = vmatpush.bf16.msra.mxu0 %v621
      %659 = vmatpush.bf16.msra.mxu0 %v620
      %660 = vmatmul.bf16.gmra.mxu0 %v492
      %v661 = vpop.f32.mrf.mxu0
      %v662 = vadd.f32 0.0, %v661
      %v663 = vpop.f32.mrf.mxu0
      %v664 = vadd.f32 0.0, %v663
      %665 = vmatmul.bf16.gmra.mxu0 %v494
      %v666 = vpop.f32.mrf.mxu0
      %v667 = vadd.f32 0.0, %v666
      %v668 = vpop.f32.mrf.mxu0
      %v669 = vadd.f32 0.0, %v668
      %670 = vmatmul.bf16.gmra.mxu0 %v496
      %v671 = vpop.f32.mrf.mxu0
      %v672 = vadd.f32 0.0, %v671
      %v673 = vpop.f32.mrf.mxu0
      %v674 = vadd.f32 0.0, %v673
      %675 = vmatmul.bf16.gmra.mxu0 %v498
      %v676 = vpop.f32.mrf.mxu0
      %v677 = vadd.f32 0.0, %v676
      %v678 = vpop.f32.mrf.mxu0
      %v679 = vadd.f32 0.0, %v678
      %680 = vmatmul.bf16.gmra.mxu0 %v500
      %v681 = vpop.f32.mrf.mxu0
      %v682 = vadd.f32 0.0, %v681
      %v683 = vpop.f32.mrf.mxu0
      %v684 = vadd.f32 0.0, %v683
      %685 = vmatmul.bf16.gmra.mxu0 %v502
      %v686 = vpop.f32.mrf.mxu0
      %v687 = vadd.f32 0.0, %v686
      %v688 = vpop.f32.mrf.mxu0
      %v689 = vadd.f32 0.0, %v688
      %690 = vmatmul.bf16.gmra.mxu0 %v504
      %v691 = vpop.f32.mrf.mxu0
      %v692 = vadd.f32 0.0, %v691
      %v693 = vpop.f32.mrf.mxu0
      %v694 = vadd.f32 0.0, %v693
      %695 = vmatmul.bf16.gmra.mxu0 %v506
      %v696 = vpop.f32.mrf.mxu0
      %v697 = vadd.f32 0.0, %v696
      %v698 = vpop.f32.mrf.mxu0
      %v699 = vadd.f32 0.0, %v698
      %700 = vmatmul.bf16.gmra.mxu0 %v508
      %v701 = vpop.f32.mrf.mxu0
      %v702 = vadd.f32 0.0, %v701
      %v703 = vpop.f32.mrf.mxu0
      %v704 = vadd.f32 0.0, %v703
      %705 = vmatmul.bf16.gmra.mxu0 %v510
      %v706 = vpop.f32.mrf.mxu0
      %v707 = vadd.f32 0.0, %v706
      %v708 = vpop.f32.mrf.mxu0
      %v709 = vadd.f32 0.0, %v708
      %710 = vmatmul.bf16.gmra.mxu0 %v512
      %v711 = vpop.f32.mrf.mxu0
      %v712 = vadd.f32 0.0, %v711
      %v713 = vpop.f32.mrf.mxu0
      %v714 = vadd.f32 0.0, %v713
      %715 = vmatmul.bf16.gmra.mxu0 %v514
      %v716 = vpop.f32.mrf.mxu0
      %v717 = vadd.f32 0.0, %v716
      %v718 = vpop.f32.mrf.mxu0
      %v719 = vadd.f32 0.0, %v718
      %720 = vmatmul.bf16.gmra.mxu0 %v516
      %v721 = vpop.f32.mrf.mxu0
      %v722 = vadd.f32 0.0, %v721
      %v723 = vpop.f32.mrf.mxu0
      %v724 = vadd.f32 0.0, %v723
      %725 = vmatmul.bf16.gmra.mxu0 %v518
      %v726 = vpop.f32.mrf.mxu0
      %v727 = vadd.f32 0.0, %v726
      %v728 = vpop.f32.mrf.mxu0
      %v729 = vadd.f32 0.0, %v728
      %730 = vmatmul.bf16.gmra.mxu0 %v520
      %v731 = vpop.f32.mrf.mxu0
      %v732 = vadd.f32 0.0, %v731
      %v733 = vpop.f32.mrf.mxu0
      %v734 = vadd.f32 0.0, %v733
      %735 = vmatmul.bf16.gmra.mxu0 %v522
      %v736 = vpop.f32.mrf.mxu0
      %v737 = vadd.f32 0.0, %v736
      %v738 = vpop.f32.mrf.mxu0
      %v739 = vadd.f32 0.0, %v738
      %740 = vdwg.mxu0
      %741 = vmatpush.bf16.msra.mxu0 %v635
      %742 = vmatpush.bf16.msra.mxu0 %v634
      %743 = vmatpush.bf16.msra.mxu0 %v633
      %744 = vmatpush.bf16.msra.mxu0 %v632
      %745 = vmatpush.bf16.msra.mxu0 %v631
      %746 = vmatpush.bf16.msra.mxu0 %v630
      %747 = vmatpush.bf16.msra.mxu0 %v629
      %748 = vmatpush.bf16.msra.mxu0 %v628
      %749 = vmatmul.bf16.gmra.mxu0 %v493
      %v750 = vpop.f32.mrf.mxu0
      %v751 = vadd.f32 %v662, %v750
      %v752 = vpop.f32.mrf.mxu0
      %v753 = vadd.f32 %v664, %v752
      %754 = vmatmul.bf16.gmra.mxu0 %v495
      %v755 = vpop.f32.mrf.mxu0
      %v756 = vadd.f32 %v667, %v755
      %v757 = vpop.f32.mrf.mxu0
      %v758 = vadd.f32 %v669, %v757
      %759 = vmatmul.bf16.gmra.mxu0 %v497
      %v760 = vpop.f32.mrf.mxu0
      %v761 = vadd.f32 %v672, %v760
      %v762 = vpop.f32.mrf.mxu0
      %v763 = vadd.f32 %v674, %v762
      %764 = vmatmul.bf16.gmra.mxu0 %v499
      %v765 = vpop.f32.mrf.mxu0
      %v766 = vadd.f32 %v677, %v765
      %v767 = vpop.f32.mrf.mxu0
      %v768 = vadd.f32 %v679, %v767
      %769 = vmatmul.bf16.gmra.mxu0 %v501
      %v770 = vpop.f32.mrf.mxu0
      %v771 = vadd.f32 %v682, %v770
      %v772 = vpop.f32.mrf.mxu0
      %v773 = vadd.f32 %v684, %v772
      %774 = vmatmul.bf16.gmra.mxu0 %v503
      %v775 = vpop.f32.mrf.mxu0
      %v776 = vadd.f32 %v687, %v775
      %v777 = vpop.f32.mrf.mxu0
      %v778 = vadd.f32 %v689, %v777
      %779 = vmatmul.bf16.gmra.mxu0 %v505
      %v780 = vpop.f32.mrf.mxu0
      %v781 = vadd.f32 %v692, %v780
      %v782 = vpop.f32.mrf.mxu0
      %v783 = vadd.f32 %v694, %v782
      %784 = vmatmul.bf16.gmra.mxu0 %v507
      %v785 = vpop.f32.mrf.mxu0
      %v786 = vadd.f32 %v697, %v785
      %v787 = vpop.f32.mrf.mxu0
      %v788 = vadd.f32 %v699, %v787
      %789 = vmatmul.bf16.gmra.mxu0 %v509
      %v790 = vpop.f32.mrf.mxu0
      %v791 = vadd.f32 %v702, %v790
      %v792 = vpop.f32.mrf.mxu0
      %v793 = vadd.f32 %v704, %v792
      %794 = vmatmul.bf16.gmra.mxu0 %v511
      %v795 = vpop.f32.mrf.mxu0
      %v796 = vadd.f32 %v707, %v795
      %v797 = vpop.f32.mrf.mxu0
      %v798 = vadd.f32 %v709, %v797
      %799 = vmatmul.bf16.gmra.mxu0 %v513
      %v800 = vpop.f32.mrf.mxu0
      %v801 = vadd.f32 %v712, %v800
      %v802 = vpop.f32.mrf.mxu0
      %v803 = vadd.f32 %v714, %v802
      %804 = vmatmul.bf16.gmra.mxu0 %v515
      %v805 = vpop.f32.mrf.mxu0
      %v806 = vadd.f32 %v717, %v805
      %v807 = vpop.f32.mrf.mxu0
      %v808 = vadd.f32 %v719, %v807
      %809 = vmatmul.bf16.gmra.mxu0 %v517
      %v810 = vpop.f32.mrf.mxu0
      %v811 = vadd.f32 %v722, %v810
      %v812 = vpop.f32.mrf.mxu0
      %v813 = vadd.f32 %v724, %v812
      %814 = vmatmul.bf16.gmra.mxu0 %v519
      %v815 = vpop.f32.mrf.mxu0
      %v816 = vadd.f32 %v727, %v815
      %v817 = vpop.f32.mrf.mxu0
      %v818 = vadd.f32 %v729, %v817
      %819 = vmatmul.bf16.gmra.mxu0 %v521
      %v820 = vpop.f32.mrf.mxu0
      %v821 = vadd.f32 %v732, %v820
      %v822 = vpop.f32.mrf.mxu0
      %v823 = vadd.f32 %v734, %v822
      %824 = vmatmul.bf16.gmra.mxu0 %v523
      %v825 = vpop.f32.mrf.mxu0
      %v826 = vadd.f32 %v737, %v825
      %v827 = vpop.f32.mrf.mxu0
      %v828 = vadd.f32 %v739, %v827
      %829 = vdwg.mxu0
      %v830 = vadd.f32 %v300, %v751
      %v831 = vadd.f32 %v301, %v753
      %v832 = vadd.f32 %v302, %v756
      %v833 = vadd.f32 %v303, %v758
      %v834 = vadd.f32 %v304, %v761
      %v835 = vadd.f32 %v305, %v763
      %v836 = vadd.f32 %v306, %v766
      %v837 = vadd.f32 %v307, %v768
      %v838 = vadd.f32 %v308, %v771
      %v839 = vadd.f32 %v309, %v773
      %v840 = vadd.f32 %v310, %v776
      %v841 = vadd.f32 %v311, %v778
      %v842 = vadd.f32 %v312, %v781
      %v843 = vadd.f32 %v313, %v783
      %v844 = vadd.f32 %v314, %v786
      %v845 = vadd.f32 %v315, %v788
      %v846 = vadd.f32 %v316, %v791
      %v847 = vadd.f32 %v317, %v793
      %v848 = vadd.f32 %v318, %v796
      %v849 = vadd.f32 %v319, %v798
      %v850 = vadd.f32 %v320, %v801
      %v851 = vadd.f32 %v321, %v803
      %v852 = vadd.f32 %v322, %v806
      %v853 = vadd.f32 %v323, %v808
      %v854 = vadd.f32 %v324, %v811
      %v855 = vadd.f32 %v325, %v813
      %v856 = vadd.f32 %v326, %v816
      %v857 = vadd.f32 %v327, %v818
      %v858 = vadd.f32 %v328, %v821
      %v859 = vadd.f32 %v329, %v823
      %v860 = vadd.f32 %v330, %v826
      %v861 = vadd.f32 %v331, %v828
      %862 = vst [vmem:[%s260] sm:$0xff] %v830
      %863 = vst [vmem:[%s260 + $0x8] sm:$0xff] %v831
      %864 = vst [vmem:[%s260 + $0x10] sm:$0xff] %v832
      %865 = vst [vmem:[%s260 + $0x18] sm:$0xff] %v833
      %866 = vst [vmem:[%s260 + $0x20] sm:$0xff] %v834
      %867 = vst [vmem:[%s260 + $0x28] sm:$0xff] %v835
      %868 = vst [vmem:[%s260 + $0x30] sm:$0xff] %v836
      %869 = vst [vmem:[%s260 + $0x38] sm:$0xff] %v837
      %870 = vst [vmem:[%s260 + $0x40] sm:$0xff] %v838
      %871 = vst [vmem:[%s260 + $0x48] sm:$0xff] %v839
      %872 = vst [vmem:[%s260 + $0x50] sm:$0xff] %v840
      %873 = vst [vmem:[%s260 + $0x58] sm:$0xff] %v841
      %874 = vst [vmem:[%s260 + $0x60] sm:$0xff] %v842
      %875 = vst [vmem:[%s260 + $0x68] sm:$0xff] %v843
      %876 = vst [vmem:[%s260 + $0x70] sm:$0xff] %v844
      %877 = vst [vmem:[%s260 + $0x78] sm:$0xff] %v845
      %878 = vst [vmem:[%s260 + $0x80] sm:$0xff] %v846
      %879 = vst [vmem:[%s260 + $0x88] sm:$0xff] %v847
      %880 = vst [vmem:[%s260 + $0x90] sm:$0xff] %v848
      %881 = vst [vmem:[%s260 + $0x98] sm:$0xff] %v849
      %882 = vst [vmem:[%s260 + $0xa0] sm:$0xff] %v850
      %883 = vst [vmem:[%s260 + $0xa8] sm:$0xff] %v851
      %884 = vst [vmem:[%s260 + $0xb0] sm:$0xff] %v852
      %885 = vst [vmem:[%s260 + $0xb8] sm:$0xff] %v853
      %886 = vst [vmem:[%s260 + $0xc0] sm:$0xff] %v854
      %887 = vst [vmem:[%s260 + $0xc8] sm:$0xff] %v855
      %888 = vst [vmem:[%s260 + $0xd0] sm:$0xff] %v856
      %889 = vst [vmem:[%s260 + $0xd8] sm:$0xff] %v857
      %890 = vst [vmem:[%s260 + $0xe0] sm:$0xff] %v858
      %891 = vst [vmem:[%s260 + $0xe8] sm:$0xff] %v859
      %892 = vst [vmem:[%s260 + $0xf0] sm:$0xff] %v860
      %893 = vst [vmem:[%s260 + $0xf8] sm:$0xff] %v861
      %p894 = scmp.eq.s32.totalorder %s20, 2
      %p895 = pnand %p894, %p263
      %p896 = pneg %p895
      // Predicated region
      $region37: #{fwd.7} parent=31 // pred_check
        _
      $region38: #{fwd.7} parent=31 // pred_check_branch
        %898 = sbr.rel (%p895) target = $region40
      $region39: #{fwd.7} parent=31 // pred_region
        %v899 = vld [vmem:[%s260] sm:$0xff]
        %v900 = vld [vmem:[%s260 + $0x8] sm:$0xff]
        %v901 = vld [vmem:[%s260 + $0x10] sm:$0xff]
        %v902 = vld [vmem:[%s260 + $0x18] sm:$0xff]
        %v903 = vld [vmem:[%s260 + $0x20] sm:$0xff]
        %v904 = vld [vmem:[%s260 + $0x28] sm:$0xff]
        %v905 = vld [vmem:[%s260 + $0x30] sm:$0xff]
        %v906 = vld [vmem:[%s260 + $0x38] sm:$0xff]
        %v907 = vld [vmem:[%s260 + $0x40] sm:$0xff]
        %v908 = vld [vmem:[%s260 + $0x48] sm:$0xff]
        %v909 = vld [vmem:[%s260 + $0x50] sm:$0xff]
        %v910 = vld [vmem:[%s260 + $0x58] sm:$0xff]
        %v911 = vld [vmem:[%s260 + $0x60] sm:$0xff]
        %v912 = vld [vmem:[%s260 + $0x68] sm:$0xff]
        %v913 = vld [vmem:[%s260 + $0x70] sm:$0xff]
        %v914 = vld [vmem:[%s260 + $0x78] sm:$0xff]
        %v915 = vld [vmem:[%s260 + $0x80] sm:$0xff]
        %v916 = vld [vmem:[%s260 + $0x88] sm:$0xff]
        %v917 = vld [vmem:[%s260 + $0x90] sm:$0xff]
        %v918 = vld [vmem:[%s260 + $0x98] sm:$0xff]
        %v919 = vld [vmem:[%s260 + $0xa0] sm:$0xff]
        %v920 = vld [vmem:[%s260 + $0xa8] sm:$0xff]
        %v921 = vld [vmem:[%s260 + $0xb0] sm:$0xff]
        %v922 = vld [vmem:[%s260 + $0xb8] sm:$0xff]
        %v923 = vld [vmem:[%s260 + $0xc0] sm:$0xff]
        %v924 = vld [vmem:[%s260 + $0xc8] sm:$0xff]
        %v925 = vld [vmem:[%s260 + $0xd0] sm:$0xff]
        %v926 = vld [vmem:[%s260 + $0xd8] sm:$0xff]
        %v927 = vld [vmem:[%s260 + $0xe0] sm:$0xff]
        %v928 = vld [vmem:[%s260 + $0xe8] sm:$0xff]
        %v929 = vld [vmem:[%s260 + $0xf0] sm:$0xff]
        %v930 = vld [vmem:[%s260 + $0xf8] sm:$0xff]
        %v931 = vld [vmem:[%s2] sm:$0x1]
        %v933 = vperm.slane %v931, 0
        %v935 = vadd.f32 %v899, %v933
        %v936 = vadd.f32 %v900, %v933
        %v937 = vadd.f32 %v901, %v933
        %v938 = vadd.f32 %v902, %v933
        %v939 = vadd.f32 %v903, %v933
        %v940 = vadd.f32 %v904, %v933
        %v941 = vadd.f32 %v905, %v933
        %v942 = vadd.f32 %v906, %v933
        %v943 = vadd.f32 %v907, %v933
        %v944 = vadd.f32 %v908, %v933
        %v945 = vadd.f32 %v909, %v933
        %v946 = vadd.f32 %v910, %v933
        %v947 = vadd.f32 %v911, %v933
        %v948 = vadd.f32 %v912, %v933
        %v949 = vadd.f32 %v913, %v933
        %v950 = vadd.f32 %v914, %v933
        %v951 = vadd.f32 %v915, %v933
        %v952 = vadd.f32 %v916, %v933
        %v953 = vadd.f32 %v917, %v933
        %v954 = vadd.f32 %v918, %v933
        %v955 = vadd.f32 %v919, %v933
        %v956 = vadd.f32 %v920, %v933
        %v957 = vadd.f32 %v921, %v933
        %v958 = vadd.f32 %v922, %v933
        %v959 = vadd.f32 %v923, %v933
        %v960 = vadd.f32 %v924, %v933
        %v961 = vadd.f32 %v925, %v933
        %v962 = vadd.f32 %v926, %v933
        %v963 = vadd.f32 %v927, %v933
        %v964 = vadd.f32 %v928, %v933
        %v965 = vadd.f32 %v929, %v933
        %v966 = vadd.f32 %v930, %v933
        %967 = vst [vmem:[%s260] sm:$0xff] %v935
        %968 = vst [vmem:[%s260 + $0x8] sm:$0xff] %v936
        %969 = vst [vmem:[%s260 + $0x10] sm:$0xff] %v937
        %970 = vst [vmem:[%s260 + $0x18] sm:$0xff] %v938
        %971 = vst [vmem:[%s260 + $0x20] sm:$0xff] %v939
        %972 = vst [vmem:[%s260 + $0x28] sm:$0xff] %v940
        %973 = vst [vmem:[%s260 + $0x30] sm:$0xff] %v941
        %974 = vst [vmem:[%s260 + $0x38] sm:$0xff] %v942
        %975 = vst [vmem:[%s260 + $0x40] sm:$0xff] %v943
        %976 = vst [vmem:[%s260 + $0x48] sm:$0xff] %v944
        %977 = vst [vmem:[%s260 + $0x50] sm:$0xff] %v945
        %978 = vst [vmem:[%s260 + $0x58] sm:$0xff] %v946
        %979 = vst [vmem:[%s260 + $0x60] sm:$0xff] %v947
        %980 = vst [vmem:[%s260 + $0x68] sm:$0xff] %v948
        %981 = vst [vmem:[%s260 + $0x70] sm:$0xff] %v949
        %982 = vst [vmem:[%s260 + $0x78] sm:$0xff] %v950
        %983 = vst [vmem:[%s260 + $0x80] sm:$0xff] %v951
        %984 = vst [vmem:[%s260 + $0x88] sm:$0xff] %v952
        %985 = vst [vmem:[%s260 + $0x90] sm:$0xff] %v953
        %986 = vst [vmem:[%s260 + $0x98] sm:$0xff] %v954
        %987 = vst [vmem:[%s260 + $0xa0] sm:$0xff] %v955
        %988 = vst [vmem:[%s260 + $0xa8] sm:$0xff] %v956
        %989 = vst [vmem:[%s260 + $0xb0] sm:$0xff] %v957
        %990 = vst [vmem:[%s260 + $0xb8] sm:$0xff] %v958
        %991 = vst [vmem:[%s260 + $0xc0] sm:$0xff] %v959
        %992 = vst [vmem:[%s260 + $0xc8] sm:$0xff] %v960
        %993 = vst [vmem:[%s260 + $0xd0] sm:$0xff] %v961
        %994 = vst [vmem:[%s260 + $0xd8] sm:$0xff] %v962
        %995 = vst [vmem:[%s260 + $0xe0] sm:$0xff] %v963
        %996 = vst [vmem:[%s260 + $0xe8] sm:$0xff] %v964
        %997 = vst [vmem:[%s260 + $0xf0] sm:$0xff] %v965
        %998 = vst [vmem:[%s260 + $0xf8] sm:$0xff] %v966
      $region40: #{fwd.7} parent=31 // pred_fallthru
        _
      %s999 = smul.u32 32, %s19
      %p1000 = scmp.lt.s32.totalorder %s999, 31
      %s1001 = scalar_select %p1000, %s999, 31
      %s1002 = smul.addr %s1001, 8
      %s1003 = scalar_lea.vmem %s3, %s1002
      // Predicated region
      $region41: #{fwd.7} parent=31 // pred_check
        %p1004 = pneg %p130
      $region42: #{fwd.7} parent=31 // pred_check_branch
        %1006 = sbr.rel (%p1004) target = $region44
      $region43: #{fwd.7} parent=31 // pred_region
        %s1007 = smul.u32 32, %s19
      $region44: #{fwd.7} parent=31 // pred_fallthru
        _
      // Predicated region
      $region45: #{fwd.7} parent=31 // pred_check
        %p1008 = pneg %p130
      $region46: #{fwd.7} parent=31 // pred_check_branch
        %1010 = sbr.rel (%p1008) target = $region48
      $region47: #{fwd.7} parent=31 // pred_region
        %s1011 = smul.u32 32, %s19
        %p1012 = scmp.lt.s32.totalorder %s1011, 31
        %s1013 = scalar_select %p1012, %s1011, 31
        %s1014 = smul.addr %s1013, 8
        %s1015 = scalar_lea.vmem %s3, %s1014
      $region48: #{fwd.7} parent=31 // pred_fallthru
        _
    $region32: #{fwd.7} parent=5 // pred_fallthru
      _
    %p1016 = scmp.le.s32.totalorder 2, %s9
    // Predicated region
    $region49: #{fwd.7} parent=5 // pred_check
      %p1017 = pneg %p1016
    $region50: #{fwd.7} parent=5 // pred_check_branch
      %1019 = sbr.rel (%p1017) target = $region52
    $region51: #{fwd.7} parent=5 // pred_region
      %s1020 = ssub.s32 %s9, 2
    $region52: #{fwd.7} parent=5 // pred_fallthru
      _
  $region6: #{fwd.7} parent=0 // loop_footer
    %s13 = sadd.s32 1, %s9
  $region7: #{fwd.7} parent=0 // loop_footer_branch
    %8 = sbr.rel target = $region3
  $region8: #{fwd.7} parent=0 // loop_exit
    _

</llo_original>
